<compile_context>
chip_gen: v7x
topology: tpu7x:2x2x1
jax: 0.10.0
libtpu: 0.0.40
codegen_flags: <defaults>
</compile_context>

<pallas_src>
import functools
import math

import jax
import jax.numpy as jnp
from jax import lax
from jax.experimental import pallas as pl
from jax.experimental.pallas import tpu as pltpu

# ----------------------------- small model config -----------------------------
CFG = dict(
    src_vocab=48,
    tgt_vocab=56,
    d_model=32,
    num_heads=4,
    dff=64,
    num_layers=2,
    max_length=16,
    batch=2,
    src_seq=8,
    tgt_seq=8,
)

NEG_INF = -1.0e9


# ============================ in-kernel building blocks ========================
def _bf16(x):
    return x.astype(jnp.bfloat16)


def _ln(x, g, b):
    # LayerNorm over last dim, eps matches nn.LayerNorm default (1e-5).  f32 math.
    mean = jnp.mean(x, axis=-1, keepdims=True)
    var = jnp.mean(jnp.square(x - mean), axis=-1, keepdims=True)
    return (x - mean) * lax.rsqrt(var + 1e-5) * g + b


def _project_heads(x, w):
    # x: (S, D) f32;  w: (G, D, dk) bf16 (head-major)  ->  (G, S, dk) f32
    g = w.shape[0]
    xb = jnp.broadcast_to(_bf16(x)[None], (g,) + x.shape)
    return lax.dot_general(xb, w, (((2,), (1,)), ((0,), (0,))),
                           preferred_element_type=jnp.float32)


def _attend(q, k, v, bias, wo_h, scale):
    # Head-batched attention + fused output projection.
    #   q: (H, Sq, dk)  k, v: (H, Sk, dk)  (f32)
    #   bias: (Sq, Sk) additive mask       wo_h: (H, dk, D) bf16
    # returns (Sq, D) f32
    s = lax.dot_general(_bf16(q), _bf16(k), (((2,), (2,)), ((0,), (0,))),
                        preferred_element_type=jnp.float32)           # (H,Sq,Sk)
    s = s * scale + bias[None, :, :]
    m = jnp.max(s, axis=-1, keepdims=True)
    p = jnp.exp(s - m)
    p = p * pl.reciprocal(jnp.sum(p, axis=-1, keepdims=True), approx=True)
    o = lax.dot_general(_bf16(p), _bf16(v), (((2,), (1,)), ((0,), (0,))),
                        preferred_element_type=jnp.float32)           # (H,Sq,dk)
    proj = lax.dot_general(_bf16(o), wo_h, (((2,), (1,)), ((0,), (0,))),
                           preferred_element_type=jnp.float32)        # (H,Sq,D)
    return jnp.sum(proj, axis=0)                                       # (Sq,D)


def _ffn(x, wffn, b1, b2):
    # wffn: (2, D, dff) bf16 with [0] = W1 (D,dff), [1] = W2^T (D,dff)
    f = jnp.dot(_bf16(x), wffn[0], preferred_element_type=jnp.float32) + b1
    f = jnp.maximum(f, 0.0)
    out = lax.dot_general(_bf16(f), wffn[1], (((1,), (1,)), ((), ())),
                          preferred_element_type=jnp.float32) + b2
    return out


# =========================== fused encoder-stack kernel ========================
def _encoder_stack_kernel(x_ref, bias_ref, wqkv_ref, wo_ref, wffn_ref, sp_ref,
                          o_ref, acc_ref, *, num_heads, d_model, dff):
    l = pl.program_id(1)
    n_layers = pl.num_programs(1)
    D, H = d_model, num_heads
    dk = D // H
    scale = 1.0 / math.sqrt(dk)

    @pl.when(l == 0)
    def _():
        acc_ref[...] = x_ref[...]        # seed the layer-resident activation

    x = acc_ref[...]                     # (S, D) f32, carried across layers
    sp = sp_ref[...]                     # (6, PW) packed small params
    g1, b1 = sp[0:1, :D], sp[1:2, :D]
    g2, b2 = sp[2:3, :D], sp[3:4, :D]
    fb1 = sp[4:5, :dff]
    fb2 = sp[5:6, :D]

    # --- self attention (head-batched) + residual + LN1 ---
    qkv = _project_heads(x, wqkv_ref[...])                       # (3H, S, dk)
    attn = _attend(qkv[:H], qkv[H:2 * H], qkv[2 * H:],
                   bias_ref[...], wo_ref[...], scale)
    h1 = _ln(x + attn, g1, b1)

    # --- FFN + residual + LN2 ---
    out = _ln(h1 + _ffn(h1, wffn_ref[...], fb1, fb2), g2, b2)
    acc_ref[...] = out

    @pl.when(l == n_layers - 1)
    def _():
        o_ref[...] = out


def encoder_forward(x_emb, bias, p, num_heads):
    B, S, D = x_emb.shape
    L = p["wqkv"].shape[0]
    dff = p["wffn"].shape[-1]
    H = num_heads
    dk = D // H
    rows, pw = p["small"].shape[1], p["small"].shape[2]
    kern = functools.partial(_encoder_stack_kernel,
                             num_heads=H, d_model=D, dff=dff)

    def per_b(shape):
        return pl.BlockSpec(shape, lambda b, l: (b, 0, 0))

    def per_l3(shape):
        return pl.BlockSpec(shape, lambda b, l: (l, 0, 0))

    def per_l4(shape):
        return pl.BlockSpec(shape, lambda b, l: (l, 0, 0, 0))

    return pl.pallas_call(
        kern,
        out_shape=jax.ShapeDtypeStruct((B, S, D), jnp.float32),
        grid=(B, L),
        in_specs=[
            per_b((None, S, D)),                 # embedded input
            per_b((None, S, S)),                 # additive padding bias
            per_l4((None, 3 * H, D, dk)),        # head-major fused QKV weights
            per_l4((None, H, dk, D)),            # head-major WO
            per_l4((None, 2, D, dff)),           # packed [W1, W2^T]
            per_l3((None, rows, pw)),            # packed LN gammas/betas + FFN biases
        ],
        out_specs=per_b((None, S, D)),
        scratch_shapes=[pltpu.VMEM((S, D), jnp.float32)],
        compiler_params=pltpu.CompilerParams(
            dimension_semantics=("parallel", "arbitrary")),
    )(x_emb, bias, p["wqkv"], p["wo"], p["wffn"], p["small"])


# =========================== fused decoder-stack kernel ========================
# (final vocab projection fused in; padded logits are the only HBM output)
def _decoder_stack_kernel(y_ref, enc_ref, sbias_ref, cbias_ref,
                          wproj_ref, wo_ref, wffn_ref, sp_ref, fw_ref,
                          logits_ref, acc_ref,
                          *, num_heads, d_model, dff, vocab_pad):
    l = pl.program_id(1)
    n_layers = pl.num_programs(1)
    D, H = d_model, num_heads
    dk = D // H
    scale = 1.0 / math.sqrt(dk)

    @pl.when(l == 0)
    def _():
        acc_ref[...] = y_ref[...]

    y = acc_ref[...]                     # (St, D) running activation
    enc = enc_ref[...]                   # (Ss, D) encoder output
    sp = sp_ref[...]                     # (9, PW) packed small params
    g1, bb1 = sp[0:1, :D], sp[1:2, :D]
    g2, bb2 = sp[2:3, :D], sp[3:4, :D]
    g3, bb3 = sp[4:5, :D], sp[5:6, :D]
    fb1 = sp[6:7, :dff]
    fb2 = sp[7:8, :D]
    final_b = sp[8:9, :vocab_pad]

    wproj = wproj_ref[...]               # (6H, D, dk): [q1,k1,v1,q2,k2,v2] heads
    wo_all = wo_ref[...]                 # (2H, dk, D): [wo1, wo2] heads

    # --- masked self attention + residual + LN1 ---
    qkv = _project_heads(y, wproj[:3 * H])                       # (3H, St, dk)
    attn1 = _attend(qkv[:H], qkv[H:2 * H], qkv[2 * H:3 * H],
                    sbias_ref[...], wo_all[:H], scale)
    out1 = _ln(y + attn1, g1, bb1)

    # --- cross attention + residual + LN2 ---
    q2 = _project_heads(out1, wproj[3 * H:4 * H])                # (H, St, dk)
    kv2 = _project_heads(enc, wproj[4 * H:])                     # (2H, Ss, dk)
    attn2 = _attend(q2, kv2[:H], kv2[H:], cbias_ref[...], wo_all[H:], scale)
    out2 = _ln(out1 + attn2, g2, bb2)

    # --- FFN + residual + LN3 ---
    out3 = _ln(out2 + _ffn(out2, wffn_ref[...], fb1, fb2), g3, bb3)
    acc_ref[...] = out3

    # --- fused final vocab projection (lane-padded, written at last layer) ---
    @pl.when(l == n_layers - 1)
    def _():
        logits_ref[...] = (jnp.dot(_bf16(out3), fw_ref[...],
                                   preferred_element_type=jnp.float32) + final_b)


def decoder_forward(y_emb, enc_out, self_bias, cross_bias, p, num_heads):
    B, St, D = y_emb.shape
    Ss = enc_out.shape[1]
    L = p["wproj"].shape[0]
    dff = p["wffn"].shape[-1]
    H = num_heads
    dk = D // H
    rows, pw = p["small"].shape[1], p["small"].shape[2]
    vocab_pad = p["final_w"].shape[1]
    kern = functools.partial(_decoder_stack_kernel, num_heads=H, d_model=D,
                             dff=dff, vocab_pad=vocab_pad)

    def per_b(shape):
        return pl.BlockSpec(shape, lambda b, l: (b, 0, 0))

    def per_l3(shape):
        return pl.BlockSpec(shape, lambda b, l: (l, 0, 0))

    def per_l4(shape):
        return pl.BlockSpec(shape, lambda b, l: (l, 0, 0, 0))

    fixed2 = pl.BlockSpec((D, vocab_pad), lambda b, l: (0, 0))

    return pl.pallas_call(
        kern,
        out_shape=jax.ShapeDtypeStruct((B, St, vocab_pad), jnp.float32),
        grid=(B, L),
        in_specs=[
            per_b((None, St, D)),                # embedded target
            per_b((None, Ss, D)),                # encoder output
            per_b((None, St, St)),               # combined look-ahead + pad bias
            per_b((None, St, Ss)),               # cross padding bias
            per_l4((None, 6 * H, D, dk)),        # packed head-major projections
            per_l4((None, 2 * H, dk, D)),        # packed head-major WO1/WO2
            per_l4((None, 2, D, dff)),           # packed [W1, W2^T]
            per_l3((None, rows, pw)),            # packed LN/FFN biases + final bias
            fixed2,                              # padded final projection weight
        ],
        out_specs=per_b((None, St, vocab_pad)),
        scratch_shapes=[pltpu.VMEM((St, D), jnp.float32)],
        compiler_params=pltpu.CompilerParams(
            dimension_semantics=("parallel", "arbitrary")),
    )(y_emb, enc_out, self_bias, cross_bias,
      p["wproj"], p["wo"], p["wffn"], p["small"], p["final_w"])


# ============================== model forward (glue) ===========================
def embed(ids, emb_table, pe, d_model):
    x = jnp.take(emb_table, ids, axis=0) * math.sqrt(d_model)
    x = x + pe[None, : ids.shape[1], :]
    return x.astype(jnp.float32)


def padding_bias(seq_ids, q_len):
    # (B, q_len, Sk): 0 where key token != 0, -1e9 where padding
    keep = (seq_ids != 0)[:, None, :]
    bias = jnp.where(keep, 0.0, NEG_INF).astype(jnp.float32)
    return jnp.broadcast_to(bias, (seq_ids.shape[0], q_len, seq_ids.shape[1]))


def combined_bias(tgt_ids):
    # look-ahead AND target-padding mask -> additive bias (B, S, S)
    B, S = tgt_ids.shape
    la = jnp.tril(jnp.ones((S, S), dtype=bool))
    pad = (tgt_ids != 0)[:, None, :]
    keep = jnp.logical_and(la[None, :, :], pad)
    return jnp.where(keep, 0.0, NEG_INF).astype(jnp.float32)


def transformer_forward(params, src, tgt):
    D, H, V = CFG["d_model"], CFG["num_heads"], CFG["tgt_vocab"]
    pe = params["pe"]

    enc_self_bias = padding_bias(src, src.shape[1])
    cross_bias = padding_bias(src, tgt.shape[1])
    dec_self_bias = combined_bias(tgt)

    # ---- encoder stack: one pallas_call ----
    x = embed(src, params["enc_emb"], pe, D)
    enc_out = encoder_forward(x, enc_self_bias, params["enc"], H)

    # ---- decoder stack + fused final projection: one pallas_call ----
    y = embed(tgt, params["dec_emb"], pe, D)
    logits_pad = decoder_forward(y, enc_out, dec_self_bias, cross_bias,
                                 params["dec"], H)

    # single slice at the very end of the pipeline (padded lanes are exact zeros)
    return logits_pad[:, :, :V]


# ============================== deterministic init =============================
def _dense_w(key, din, dout):
    return jax.random.normal(key, (din, dout), jnp.float32) / math.sqrt(din)


def _head_cols(w, num_heads):
    # (D, H*dk) -> (H, D, dk): head h owns output columns [h*dk:(h+1)*dk]
    d, dout = w.shape
    dk = dout // num_heads
    return jnp.transpose(w.reshape(d, num_heads, dk), (1, 0, 2))


def _head_rows(w, num_heads):
    # (H*dk, D) -> (H, dk, D): head h owns input rows [h*dk:(h+1)*dk]
    din, d = w.shape
    dk = din // num_heads
    return w.reshape(num_heads, dk, d)


def _init_enc_layer(key, D, H, dff, pw):
    ks = jax.random.split(key, 8)
    wqkv = jnp.concatenate(
        [_head_cols(_dense_w(ks[i], D, D), H) for i in range(3)], axis=0)  # (3H,D,dk)
    wo = _head_rows(_dense_w(ks[3], D, D), H)                               # (H,dk,D)
    wffn = jnp.stack([_dense_w(ks[4], D, dff), _dense_w(ks[5], dff, D).T],
                     axis=0)                                                # (2,D,dff)
    small = jnp.zeros((6, pw), jnp.float32)
    small = small.at[0, :D].set(1.0)                                        # ln1 gamma
    small = small.at[2, :D].set(1.0)                                        # ln2 gamma
    small = small.at[4, :dff].set(jax.random.normal(ks[6], (dff,)) * 0.02)  # b1
    small = small.at[5, :D].set(jax.random.normal(ks[7], (D,)) * 0.02)      # b2
    return dict(wqkv=_bf16(wqkv), wo=_bf16(wo), wffn=_bf16(wffn), small=small)


def _init_dec_layer(key, D, H, dff, pw):
    ks = jax.random.split(key, 12)
    wproj = jnp.concatenate(
        [_head_cols(_dense_w(ks[i], D, D), H) for i in (0, 1, 2, 4, 5, 6)],
        axis=0)                                                             # (6H,D,dk)
    wo = jnp.concatenate([_head_rows(_dense_w(ks[3], D, D), H),
                          _head_rows(_dense_w(ks[7], D, D), H)], axis=0)    # (2H,dk,D)
    wffn = jnp.stack([_dense_w(ks[8], D, dff), _dense_w(ks[9], dff, D).T],
                     axis=0)                                                # (2,D,dff)
    small = jnp.zeros((9, pw), jnp.float32)
    small = small.at[0, :D].set(1.0).at[2, :D].set(1.0).at[4, :D].set(1.0)  # ln gammas
    small = small.at[6, :dff].set(jax.random.normal(ks[10], (dff,)) * 0.02)  # b1
    small = small.at[7, :D].set(jax.random.normal(ks[11], (D,)) * 0.02)      # b2
    # row 8 (final projection bias) is filled in init_params (shared across layers)
    return dict(wproj=_bf16(wproj), wo=_bf16(wo), wffn=_bf16(wffn), small=small)


def _stack_layers(layer_dicts):
    return {k: jnp.stack([d[k] for d in layer_dicts], axis=0)
            for k in layer_dicts[0]}


def positional_encoding(max_len, D):
    pos = jnp.arange(max_len, dtype=jnp.float32)[:, None]
    div = jnp.exp(jnp.arange(0, D, 2, dtype=jnp.float32) * (-math.log(10000.0) / D))
    pe = jnp.zeros((max_len, D), jnp.float32)
    pe = pe.at[:, 0::2].set(jnp.sin(pos * div))
    pe = pe.at[:, 1::2].set(jnp.cos(pos * div))
    return pe


def init_params(key):
    D, dff, L, H = CFG["d_model"], CFG["dff"], CFG["num_layers"], CFG["num_heads"]
    V = CFG["tgt_vocab"]
    Vp = ((V + 127) // 128) * 128                      # lane-dense padded vocab width
    pw = ((max(128, dff, D, Vp) + 127) // 128) * 128   # packed-param lane width
    ks = jax.random.split(key, 4 + 2 * L)

    enc = _stack_layers([_init_enc_layer(ks[4 + i], D, H, dff, pw) for i in range(L)])
    dec = _stack_layers([_init_dec_layer(ks[4 + L + i], D, H, dff, pw) for i in range(L)])

    final_w = _dense_w(ks[2], D, V)
    final_b = jax.random.normal(ks[3], (V,), jnp.float32) * 0.01
    dec["final_w"] = _bf16(jnp.zeros((D, Vp), jnp.float32).at[:, :V].set(final_w))
    dec["small"] = dec["small"].at[:, 8, :V].set(final_b)   # shared final bias

    return dict(
        enc_emb=jax.random.normal(ks[0], (CFG["src_vocab"], D), jnp.float32) * 0.02,
        dec_emb=jax.random.normal(ks[1], (CFG["tgt_vocab"], D), jnp.float32) * 0.02,
        pe=positional_encoding(CFG["max_length"], D),
        enc=enc,
        dec=dec,
    )


# ===================================== main =====================================
if __name__ == "__main__":
    key = jax.random.PRNGKey(0)
    kp, k_src, k_tgt = jax.random.split(key, 3)

    params = init_params(kp)

    B, Ss, St = CFG["batch"], CFG["src_seq"], CFG["tgt_seq"]
    src = jax.random.randint(k_src, (B, Ss), 1, CFG["src_vocab"], dtype=jnp.int32)
    tgt = jax.random.randint(k_tgt, (B, St), 1, CFG["tgt_vocab"], dtype=jnp.int32)
    # introduce some padding tokens (id 0) to exercise the padding masks
    src = src.at[0, -2:].set(0)
    tgt = tgt.at[1, -3:].set(0)

    fwd = jax.jit(transformer_forward)
    logits = fwd(params, src, tgt)
    jax.block_until_ready(logits)

    assert logits.shape == (B, St, CFG["tgt_vocab"]), logits.shape
    assert bool(jnp.all(jnp.isfinite(logits)))
    print("KERNEL_OK")
</pallas_src>

<mosaic_0001>
module attributes {stable_mosaic.version = 11 : i64} {
  func.func @_encoder_stack_kernel(%arg0: i32, %arg1: i32, %arg2: memref<1x8x32xf32, #tpu.memory_space<vmem>>, %arg3: memref<1x8x8xf32, #tpu.memory_space<vmem>>, %arg4: memref<1x12x32x8xbf16, #tpu.memory_space<vmem>>, %arg5: memref<1x4x8x32xbf16, #tpu.memory_space<vmem>>, %arg6: memref<1x2x32x64xbf16, #tpu.memory_space<vmem>>, %arg7: memref<1x6x128xf32, #tpu.memory_space<vmem>>, %arg8: memref<1x8x32xf32, #tpu.memory_space<vmem>>, %arg9: memref<8x32xf32, #tpu.memory_space<vmem>>) attributes {dimension_semantics = [#tpu.dimension_semantics<parallel>, #tpu.dimension_semantics<arbitrary>], iteration_bounds = array<i64: 2, 2>, scalar_prefetch = 0 : i64, scratch_operands = 1 : i64, tpu.core_type = #tpu.core_type<tc>, window_params = [{transform_indices = @transform_0, window_bounds = array<i64: 1, 8, 32>}, {transform_indices = @transform_1, window_bounds = array<i64: 1, 8, 8>}, {transform_indices = @transform_2, window_bounds = array<i64: 1, 12, 32, 8>}, {transform_indices = @transform_3, window_bounds = array<i64: 1, 4, 8, 32>}, {transform_indices = @transform_4, window_bounds = array<i64: 1, 2, 32, 64>}, {transform_indices = @transform_5, window_bounds = array<i64: 1, 6, 128>}, {transform_indices = @transform_6, window_bounds = array<i64: 1, 8, 32>}]} {
    %c0_i32 = arith.constant 0 : i32
    %0 = arith.cmpi eq, %arg1, %c0_i32 : i32
    %1 = arith.extui %0 : i1 to i32
    %c0_i32_0 = arith.constant 0 : i32
    %2 = arith.cmpi ne, %1, %c0_i32_0 : i32
    scf.if %2 {
      %c0_43 = arith.constant 0 : index
      %c0_44 = arith.constant 0 : index
      %c0_45 = arith.constant 0 : index
      %116 = vector.load %arg2[%c0_43, %c0_44, %c0_45] : memref<1x8x32xf32, #tpu.memory_space<vmem>>, vector<1x8x32xf32>
      %117 = vector.shape_cast %116 : vector<1x8x32xf32> to vector<8x32xf32>
      %c0_46 = arith.constant 0 : index
      %c0_47 = arith.constant 0 : index
      %118 = vector.load %arg9[%c0_46, %c0_47] : memref<8x32xf32, #tpu.memory_space<vmem>>, vector<8x32xf32>
      tpu.vector_store %arg9[%c0_46, %c0_47], %117 {strides = array<i32>} : memref<8x32xf32, #tpu.memory_space<vmem>>, vector<8x32xf32>,
    } else {
    }
    %c0 = arith.constant 0 : index
    %c0_1 = arith.constant 0 : index
    %3 = vector.load %arg9[%c0, %c0_1] : memref<8x32xf32, #tpu.memory_space<vmem>>, vector<8x32xf32>
    %c0_2 = arith.constant 0 : index
    %c0_3 = arith.constant 0 : index
    %c0_4 = arith.constant 0 : index
    %4 = vector.load %arg7[%c0_2, %c0_3, %c0_4] : memref<1x6x128xf32, #tpu.memory_space<vmem>>, vector<1x6x128xf32>
    %5 = vector.shape_cast %4 : vector<1x6x128xf32> to vector<6x128xf32>
    %6 = vector.extract_strided_slice %5 {offsets = [0, 0], sizes = [1, 32], strides = [1, 1]} : vector<6x128xf32> to vector<1x32xf32>
    %7 = vector.extract_strided_slice %5 {offsets = [1, 0], sizes = [1, 32], strides = [1, 1]} : vector<6x128xf32> to vector<1x32xf32>
    %8 = vector.extract_strided_slice %5 {offsets = [2, 0], sizes = [1, 32], strides = [1, 1]} : vector<6x128xf32> to vector<1x32xf32>
    %9 = vector.extract_strided_slice %5 {offsets = [3, 0], sizes = [1, 32], strides = [1, 1]} : vector<6x128xf32> to vector<1x32xf32>
    %10 = vector.extract_strided_slice %5 {offsets = [4, 0], sizes = [1, 64], strides = [1, 1]} : vector<6x128xf32> to vector<1x64xf32>
    %11 = vector.extract_strided_slice %5 {offsets = [5, 0], sizes = [1, 32], strides = [1, 1]} : vector<6x128xf32> to vector<1x32xf32>
    %c0_5 = arith.constant 0 : index
    %c0_6 = arith.constant 0 : index
    %c0_7 = arith.constant 0 : index
    %c0_8 = arith.constant 0 : index
    %12 = vector.load %arg4[%c0_5, %c0_6, %c0_7, %c0_8] : memref<1x12x32x8xbf16, #tpu.memory_space<vmem>>, vector<1x12x32x8xbf16>
    %13 = vector.shape_cast %12 : vector<1x12x32x8xbf16> to vector<12x32x8xbf16>
    %14 = arith.truncf %3 : vector<8x32xf32> to vector<8x32xbf16>
    %15 = vector.shape_cast %14 : vector<8x32xbf16> to vector<1x8x32xbf16>
    %16 = vector.shape_cast %15 : vector<1x8x32xbf16> to vector<1x8x32xbf16>
    %17 = vector.broadcast %16 : vector<1x8x32xbf16> to vector<12x8x32xbf16>
    %cst = arith.constant dense<0.000000e+00> : vector<12x8x8xf32>
    %18 = tpu.matmul %17, %13, %cst {dimension_numbers = #tpu.dot_dimension_numbers<[2], [1], [1], [2], [0, 0, 0, 1, 1, 2], [0], [0]>} : vector<12x8x32xbf16>, vector<12x32x8xbf16>, vector<12x8x8xf32> -> vector<12x8x8xf32>
    %19 = vector.extract_strided_slice %18 {offsets = [0, 0, 0], sizes = [4, 8, 8], strides = [1, 1, 1]} : vector<12x8x8xf32> to vector<4x8x8xf32>
    %20 = vector.extract_strided_slice %18 {offsets = [4, 0, 0], sizes = [4, 8, 8], strides = [1, 1, 1]} : vector<12x8x8xf32> to vector<4x8x8xf32>
    %21 = vector.extract_strided_slice %18 {offsets = [8, 0, 0], sizes = [4, 8, 8], strides = [1, 1, 1]} : vector<12x8x8xf32> to vector<4x8x8xf32>
    %c0_9 = arith.constant 0 : index
    %c0_10 = arith.constant 0 : index
    %c0_11 = arith.constant 0 : index
    %22 = vector.load %arg3[%c0_9, %c0_10, %c0_11] : memref<1x8x8xf32, #tpu.memory_space<vmem>>, vector<1x8x8xf32>
    %23 = vector.shape_cast %22 : vector<1x8x8xf32> to vector<8x8xf32>
    %c0_12 = arith.constant 0 : index
    %c0_13 = arith.constant 0 : index
    %c0_14 = arith.constant 0 : index
    %c0_15 = arith.constant 0 : index
    %24 = vector.load %arg5[%c0_12, %c0_13, %c0_14, %c0_15] : memref<1x4x8x32xbf16, #tpu.memory_space<vmem>>, vector<1x4x8x32xbf16>
    %25 = vector.shape_cast %24 : vector<1x4x8x32xbf16> to vector<4x8x32xbf16>
    %26 = arith.truncf %19 : vector<4x8x8xf32> to vector<4x8x8xbf16>
    %27 = arith.truncf %20 : vector<4x8x8xf32> to vector<4x8x8xbf16>
    %cst_16 = arith.constant dense<0.000000e+00> : vector<4x8x8xf32>
    %28 = tpu.matmul %26, %27, %cst_16 {dimension_numbers = #tpu.dot_dimension_numbers<[2], [2], [1], [1], [0, 0, 0, 1, 1, 1], [0], [0]>} : vector<4x8x8xbf16>, vector<4x8x8xbf16>, vector<4x8x8xf32> -> vector<4x8x8xf32>
    %cst_17 = arith.constant 0.353553385 : f32
    %29 = vector.broadcast %cst_17 : f32 to vector<4x8x8xf32>
    %30 = arith.mulf %28, %29 : vector<4x8x8xf32>
    %31 = vector.shape_cast %23 : vector<8x8xf32> to vector<1x8x8xf32>
    %32 = vector.broadcast %31 : vector<1x8x8xf32> to vector<4x8x8xf32>
    %33 = arith.addf %30, %32 : vector<4x8x8xf32>
    %cst_18 = arith.constant dense<0xFF800000> : vector<4x8xf32>
    %34 = vector.multi_reduction <maximumf>, %33, %cst_18 [2] : vector<4x8x8xf32> to vector<4x8xf32>
    %35 = vector.shape_cast %34 : vector<4x8xf32> to vector<4x8x1xf32>
    %36 = vector.broadcast %35 : vector<4x8x1xf32> to vector<4x8x8xf32>
    %37 = arith.subf %33, %36 : vector<4x8x8xf32>
    %38 = math.exp %37 : vector<4x8x8xf32>
    %cst_19 = arith.constant dense<0.000000e+00> : vector<4x8xf32>
    %39 = vector.multi_reduction <add>, %38, %cst_19 [2] : vector<4x8x8xf32> to vector<4x8xf32>
    %40 = vector.shape_cast %39 : vector<4x8xf32> to vector<4x8x1xf32>
    %41 = tpu.reciprocal %40 {approx = true} : vector<4x8x1xf32> -> vector<4x8x1xf32>
    %42 = vector.broadcast %41 : vector<4x8x1xf32> to vector<4x8x8xf32>
    %43 = arith.mulf %38, %42 : vector<4x8x8xf32>
    %44 = arith.truncf %43 : vector<4x8x8xf32> to vector<4x8x8xbf16>
    %45 = arith.truncf %21 : vector<4x8x8xf32> to vector<4x8x8xbf16>
    %cst_20 = arith.constant dense<0.000000e+00> : vector<4x8x8xf32>
    %46 = tpu.matmul %44, %45, %cst_20 {dimension_numbers = #tpu.dot_dimension_numbers<[2], [1], [1], [2], [0, 0, 0, 1, 1, 2], [0], [0]>} : vector<4x8x8xbf16>, vector<4x8x8xbf16>, vector<4x8x8xf32> -> vector<4x8x8xf32>
    %47 = arith.truncf %46 : vector<4x8x8xf32> to vector<4x8x8xbf16>
    %cst_21 = arith.constant dense<0.000000e+00> : vector<4x8x32xf32>
    %48 = tpu.matmul %47, %25, %cst_21 {dimension_numbers = #tpu.dot_dimension_numbers<[2], [1], [1], [2], [0, 0, 0, 1, 1, 2], [0], [0]>} : vector<4x8x8xbf16>, vector<4x8x32xbf16>, vector<4x8x32xf32> -> vector<4x8x32xf32>
    %cst_22 = arith.constant dense<0.000000e+00> : vector<8x32xf32>
    %49 = vector.multi_reduction <add>, %48, %cst_22 [0] : vector<4x8x32xf32> to vector<8x32xf32>
    %50 = arith.addf %3, %49 : vector<8x32xf32>
    %cst_23 = arith.constant dense<0.000000e+00> : vector<8xf32>
    %51 = vector.multi_reduction <add>, %50, %cst_23 [1] : vector<8x32xf32> to vector<8xf32>
    %52 = vector.shape_cast %51 : vector<8xf32> to vector<8x1xf32>
    %cst_24 = arith.constant 3.200000e+01 : f32
    %53 = vector.broadcast %cst_24 : f32 to vector<8x1xf32>
    %54 = arith.divf %52, %53 : vector<8x1xf32>
    %55 = vector.broadcast %54 : vector<8x1xf32> to vector<8x32xf32>
    %56 = arith.subf %50, %55 : vector<8x32xf32>
    %57 = arith.mulf %56, %56 : vector<8x32xf32>
    %cst_25 = arith.constant dense<0.000000e+00> : vector<8xf32>
    %58 = vector.multi_reduction <add>, %57, %cst_25 [1] : vector<8x32xf32> to vector<8xf32>
    %59 = vector.shape_cast %58 : vector<8xf32> to vector<8x1xf32>
    %cst_26 = arith.constant 3.200000e+01 : f32
    %60 = vector.broadcast %cst_26 : f32 to vector<8x1xf32>
    %61 = arith.divf %59, %60 : vector<8x1xf32>
    %62 = vector.broadcast %54 : vector<8x1xf32> to vector<8x32xf32>
    %63 = arith.subf %50, %62 : vector<8x32xf32>
    %cst_27 = arith.constant 9.99999974E-6 : f32
    %64 = vector.broadcast %cst_27 : f32 to vector<8x1xf32>
    %65 = arith.addf %61, %64 : vector<8x1xf32>
    %66 = math.rsqrt %65 : vector<8x1xf32>
    %67 = vector.broadcast %66 : vector<8x1xf32> to vector<8x32xf32>
    %68 = arith.mulf %63, %67 : vector<8x32xf32>
    %69 = vector.broadcast %6 : vector<1x32xf32> to vector<8x32xf32>
    %70 = arith.mulf %68, %69 : vector<8x32xf32>
    %71 = vector.broadcast %7 : vector<1x32xf32> to vector<8x32xf32>
    %72 = arith.addf %70, %71 : vector<8x32xf32>
    %c0_28 = arith.constant 0 : index
    %c0_29 = arith.constant 0 : index
    %c0_30 = arith.constant 0 : index
    %c0_31 = arith.constant 0 : index
    %73 = vector.load %arg6[%c0_28, %c0_29, %c0_30, %c0_31] : memref<1x2x32x64xbf16, #tpu.memory_space<vmem>>, vector<1x2x32x64xbf16>
    %74 = vector.shape_cast %73 : vector<1x2x32x64xbf16> to vector<2x32x64xbf16>
    %75 = arith.truncf %72 : vector<8x32xf32> to vector<8x32xbf16>
    %76 = vector.extract_strided_slice %74 {offsets = [0, 0, 0], sizes = [1, 32, 64], strides = [1, 1, 1]} : vector<2x32x64xbf16> to vector<1x32x64xbf16>
    %77 = vector.shape_cast %76 : vector<1x32x64xbf16> to vector<32x64xbf16>
    %cst_32 = arith.constant dense<0.000000e+00> : vector<8x64xf32>
    %78 = tpu.matmul %75, %77, %cst_32 {dimension_numbers = #tpu.dot_dimension_numbers<[1], [0], [0], [1], [0, 0, 1, 1], [], []>} : vector<8x32xbf16>, vector<32x64xbf16>, vector<8x64xf32> -> vector<8x64xf32>
    %79 = vector.broadcast %10 : vector<1x64xf32> to vector<8x64xf32>
    %80 = arith.addf %78, %79 : vector<8x64xf32>
    %cst_33 = arith.constant 0.000000e+00 : f32
    %81 = vector.broadcast %cst_33 : f32 to vector<8x64xf32>
    %82 = arith.maximumf %80, %81 : vector<8x64xf32>
    %83 = arith.truncf %82 : vector<8x64xf32> to vector<8x64xbf16>
    %84 = vector.extract_strided_slice %74 {offsets = [1, 0, 0], sizes = [1, 32, 64], strides = [1, 1, 1]} : vector<2x32x64xbf16> to vector<1x32x64xbf16>
    %85 = vector.shape_cast %84 : vector<1x32x64xbf16> to vector<32x64xbf16>
    %cst_34 = arith.constant dense<0.000000e+00> : vector<8x32xf32>
    %86 = tpu.matmul %83, %85, %cst_34 {dimension_numbers = #tpu.dot_dimension_numbers<[1], [1], [0], [0], [0, 0, 1, 0], [], []>} : vector<8x64xbf16>, vector<32x64xbf16>, vector<8x32xf32> -> vector<8x32xf32>
    %87 = vector.broadcast %11 : vector<1x32xf32> to vector<8x32xf32>
    %88 = arith.addf %86, %87 : vector<8x32xf32>
    %89 = arith.addf %72, %88 : vector<8x32xf32>
    %cst_35 = arith.constant dense<0.000000e+00> : vector<8xf32>
    %90 = vector.multi_reduction <add>, %89, %cst_35 [1] : vector<8x32xf32> to vector<8xf32>
    %91 = vector.shape_cast %90 : vector<8xf32> to vector<8x1xf32>
    %cst_36 = arith.constant 3.200000e+01 : f32
    %92 = vector.broadcast %cst_36 : f32 to vector<8x1xf32>
    %93 = arith.divf %91, %92 : vector<8x1xf32>
    %94 = vector.broadcast %93 : vector<8x1xf32> to vector<8x32xf32>
    %95 = arith.subf %89, %94 : vector<8x32xf32>
    %96 = arith.mulf %95, %95 : vector<8x32xf32>
    %cst_37 = arith.constant dense<0.000000e+00> : vector<8xf32>
    %97 = vector.multi_reduction <add>, %96, %cst_37 [1] : vector<8x32xf32> to vector<8xf32>
    %98 = vector.shape_cast %97 : vector<8xf32> to vector<8x1xf32>
    %cst_38 = arith.constant 3.200000e+01 : f32
    %99 = vector.broadcast %cst_38 : f32 to vector<8x1xf32>
    %100 = arith.divf %98, %99 : vector<8x1xf32>
    %101 = vector.broadcast %93 : vector<8x1xf32> to vector<8x32xf32>
    %102 = arith.subf %89, %101 : vector<8x32xf32>
    %cst_39 = arith.constant 9.99999974E-6 : f32
    %103 = vector.broadcast %cst_39 : f32 to vector<8x1xf32>
    %104 = arith.addf %100, %103 : vector<8x1xf32>
    %105 = math.rsqrt %104 : vector<8x1xf32>
    %106 = vector.broadcast %105 : vector<8x1xf32> to vector<8x32xf32>
    %107 = arith.mulf %102, %106 : vector<8x32xf32>
    %108 = vector.broadcast %8 : vector<1x32xf32> to vector<8x32xf32>
    %109 = arith.mulf %107, %108 : vector<8x32xf32>
    %110 = vector.broadcast %9 : vector<1x32xf32> to vector<8x32xf32>
    %111 = arith.addf %109, %110 : vector<8x32xf32>
    %c0_40 = arith.constant 0 : index
    %c0_41 = arith.constant 0 : index
    %112 = vector.load %arg9[%c0_40, %c0_41] : memref<8x32xf32, #tpu.memory_space<vmem>>, vector<8x32xf32>
    tpu.vector_store %arg9[%c0_40, %c0_41], %111 {strides = array<i32>} : memref<8x32xf32, #tpu.memory_space<vmem>>, vector<8x32xf32>,
    %c1_i32 = arith.constant 1 : i32
    %113 = arith.cmpi eq, %arg1, %c1_i32 : i32
    %114 = arith.extui %113 : i1 to i32
    %c0_i32_42 = arith.constant 0 : i32
    %115 = arith.cmpi ne, %114, %c0_i32_42 : i32
    scf.if %115 {
      %c0_43 = arith.constant 0 : index
      %c0_44 = arith.constant 0 : index
      %c0_45 = arith.constant 0 : index
      %116 = vector.load %arg8[%c0_43, %c0_44, %c0_45] : memref<1x8x32xf32, #tpu.memory_space<vmem>>, vector<1x8x32xf32>
      %117 = vector.shape_cast %116 : vector<1x8x32xf32> to vector<8x32xf32>
      %118 = vector.shape_cast %111 : vector<8x32xf32> to vector<1x8x32xf32>
      tpu.vector_store %arg8[%c0_43, %c0_44, %c0_45], %118 {strides = array<i32>} : memref<1x8x32xf32, #tpu.memory_space<vmem>>, vector<1x8x32xf32>,
    } else {
    }
    return
  }
  func.func @transform_0(%arg0: i32, %arg1: i32) -> (i32, i32, i32) {
    %c0_i32 = arith.constant 0 : i32
    %c0_i32_0 = arith.constant 0 : i32
    %c0_i32_1 = arith.constant 0 : i32
    return %arg0, %c0_i32, %c0_i32_0 : i32, i32, i32
  }
  func.func @transform_1(%arg0: i32, %arg1: i32) -> (i32, i32, i32) {
    %c0_i32 = arith.constant 0 : i32
    %c0_i32_0 = arith.constant 0 : i32
    %c0_i32_1 = arith.constant 0 : i32
    return %arg0, %c0_i32, %c0_i32_0 : i32, i32, i32
  }
  func.func @transform_2(%arg0: i32, %arg1: i32) -> (i32, i32, i32, i32) {
    %c0_i32 = arith.constant 0 : i32
    %c0_i32_0 = arith.constant 0 : i32
    %c0_i32_1 = arith.constant 0 : i32
    %c0_i32_2 = arith.constant 0 : i32
    return %arg1, %c0_i32, %c0_i32_0, %c0_i32_1 : i32, i32, i32, i32
  }
  func.func @transform_3(%arg0: i32, %arg1: i32) -> (i32, i32, i32, i32) {
    %c0_i32 = arith.constant 0 : i32
    %c0_i32_0 = arith.constant 0 : i32
    %c0_i32_1 = arith.constant 0 : i32
    %c0_i32_2 = arith.constant 0 : i32
    return %arg1, %c0_i32, %c0_i32_0, %c0_i32_1 : i32, i32, i32, i32
  }
  func.func @transform_4(%arg0: i32, %arg1: i32) -> (i32, i32, i32, i32) {
    %c0_i32 = arith.constant 0 : i32
    %c0_i32_0 = arith.constant 0 : i32
    %c0_i32_1 = arith.constant 0 : i32
    %c0_i32_2 = arith.constant 0 : i32
    return %arg1, %c0_i32, %c0_i32_0, %c0_i32_1 : i32, i32, i32, i32
  }
  func.func @transform_5(%arg0: i32, %arg1: i32) -> (i32, i32, i32) {
    %c0_i32 = arith.constant 0 : i32
    %c0_i32_0 = arith.constant 0 : i32
    %c0_i32_1 = arith.constant 0 : i32
    return %arg1, %c0_i32, %c0_i32_0 : i32, i32, i32
  }
  func.func @transform_6(%arg0: i32, %arg1: i32) -> (i32, i32, i32) {
    %c0_i32 = arith.constant 0 : i32
    %c0_i32_0 = arith.constant 0 : i32
    %c0_i32_1 = arith.constant 0 : i32
    return %arg0, %c0_i32, %c0_i32_0 : i32, i32, i32
  }
}

module attributes {stable_mosaic.version = 11 : i64} {
  func.func @_decoder_stack_kernel(%arg0: i32, %arg1: i32, %arg2: memref<1x8x32xf32, #tpu.memory_space<vmem>>, %arg3: memref<1x8x32xf32, #tpu.memory_space<vmem>>, %arg4: memref<1x8x8xf32, #tpu.memory_space<vmem>>, %arg5: memref<1x8x8xf32, #tpu.memory_space<vmem>>, %arg6: memref<1x24x32x8xbf16, #tpu.memory_space<vmem>>, %arg7: memref<1x8x8x32xbf16, #tpu.memory_space<vmem>>, %arg8: memref<1x2x32x64xbf16, #tpu.memory_space<vmem>>, %arg9: memref<1x9x128xf32, #tpu.memory_space<vmem>>, %arg10: memref<32x128xbf16, #tpu.memory_space<vmem>>, %arg11: memref<1x8x128xf32, #tpu.memory_space<vmem>>, %arg12: memref<8x32xf32, #tpu.memory_space<vmem>>) attributes {dimension_semantics = [#tpu.dimension_semantics<parallel>, #tpu.dimension_semantics<arbitrary>], iteration_bounds = array<i64: 2, 2>, scalar_prefetch = 0 : i64, scratch_operands = 1 : i64, tpu.core_type = #tpu.core_type<tc>, window_params = [{transform_indices = @transform_0, window_bounds = array<i64: 1, 8, 32>}, {transform_indices = @transform_1, window_bounds = array<i64: 1, 8, 32>}, {transform_indices = @transform_2, window_bounds = array<i64: 1, 8, 8>}, {transform_indices = @transform_3, window_bounds = array<i64: 1, 8, 8>}, {transform_indices = @transform_4, window_bounds = array<i64: 1, 24, 32, 8>}, {transform_indices = @transform_5, window_bounds = array<i64: 1, 8, 8, 32>}, {transform_indices = @transform_6, window_bounds = array<i64: 1, 2, 32, 64>}, {transform_indices = @transform_7, window_bounds = array<i64: 1, 9, 128>}, {pipeline_mode = #tpu.pipeline_mode<synchronous>, transform_indices = @transform_8, window_bounds = array<i64: 32, 128>}, {transform_indices = @transform_9, window_bounds = array<i64: 1, 8, 128>}]} {
    %c0_i32 = arith.constant 0 : i32
    %0 = arith.cmpi eq, %arg1, %c0_i32 : i32
    %1 = arith.extui %0 : i1 to i32
    %c0_i32_0 = arith.constant 0 : i32
    %2 = arith.cmpi ne, %1, %c0_i32_0 : i32
    scf.if %2 {
      %c0_63 = arith.constant 0 : index
      %c0_64 = arith.constant 0 : index
      %c0_65 = arith.constant 0 : index
      %187 = vector.load %arg2[%c0_63, %c0_64, %c0_65] : memref<1x8x32xf32, #tpu.memory_space<vmem>>, vector<1x8x32xf32>
      %188 = vector.shape_cast %187 : vector<1x8x32xf32> to vector<8x32xf32>
      %c0_66 = arith.constant 0 : index
      %c0_67 = arith.constant 0 : index
      %189 = vector.load %arg12[%c0_66, %c0_67] : memref<8x32xf32, #tpu.memory_space<vmem>>, vector<8x32xf32>
      tpu.vector_store %arg12[%c0_66, %c0_67], %188 {strides = array<i32>} : memref<8x32xf32, #tpu.memory_space<vmem>>, vector<8x32xf32>,
    } else {
    }
    %c0 = arith.constant 0 : index
    %c0_1 = arith.constant 0 : index
    %3 = vector.load %arg12[%c0, %c0_1] : memref<8x32xf32, #tpu.memory_space<vmem>>, vector<8x32xf32>
    %c0_2 = arith.constant 0 : index
    %c0_3 = arith.constant 0 : index
    %c0_4 = arith.constant 0 : index
    %4 = vector.load %arg3[%c0_2, %c0_3, %c0_4] : memref<1x8x32xf32, #tpu.memory_space<vmem>>, vector<1x8x32xf32>
    %5 = vector.shape_cast %4 : vector<1x8x32xf32> to vector<8x32xf32>
    %c0_5 = arith.constant 0 : index
    %c0_6 = arith.constant 0 : index
    %c0_7 = arith.constant 0 : index
    %6 = vector.load %arg9[%c0_5, %c0_6, %c0_7] : memref<1x9x128xf32, #tpu.memory_space<vmem>>, vector<1x9x128xf32>
    %7 = vector.shape_cast %6 : vector<1x9x128xf32> to vector<9x128xf32>
    %8 = vector.extract_strided_slice %7 {offsets = [0, 0], sizes = [1, 32], strides = [1, 1]} : vector<9x128xf32> to vector<1x32xf32>
    %9 = vector.extract_strided_slice %7 {offsets = [1, 0], sizes = [1, 32], strides = [1, 1]} : vector<9x128xf32> to vector<1x32xf32>
    %10 = vector.extract_strided_slice %7 {offsets = [2, 0], sizes = [1, 32], strides = [1, 1]} : vector<9x128xf32> to vector<1x32xf32>
    %11 = vector.extract_strided_slice %7 {offsets = [3, 0], sizes = [1, 32], strides = [1, 1]} : vector<9x128xf32> to vector<1x32xf32>
    %12 = vector.extract_strided_slice %7 {offsets = [4, 0], sizes = [1, 32], strides = [1, 1]} : vector<9x128xf32> to vector<1x32xf32>
    %13 = vector.extract_strided_slice %7 {offsets = [5, 0], sizes = [1, 32], strides = [1, 1]} : vector<9x128xf32> to vector<1x32xf32>
    %14 = vector.extract_strided_slice %7 {offsets = [6, 0], sizes = [1, 64], strides = [1, 1]} : vector<9x128xf32> to vector<1x64xf32>
    %15 = vector.extract_strided_slice %7 {offsets = [7, 0], sizes = [1, 32], strides = [1, 1]} : vector<9x128xf32> to vector<1x32xf32>
    %16 = vector.extract_strided_slice %7 {offsets = [8, 0], sizes = [1, 128], strides = [1, 1]} : vector<9x128xf32> to vector<1x128xf32>
    %c0_8 = arith.constant 0 : index
    %c0_9 = arith.constant 0 : index
    %c0_10 = arith.constant 0 : index
    %c0_11 = arith.constant 0 : index
    %17 = vector.load %arg6[%c0_8, %c0_9, %c0_10, %c0_11] : memref<1x24x32x8xbf16, #tpu.memory_space<vmem>>, vector<1x24x32x8xbf16>
    %18 = vector.shape_cast %17 : vector<1x24x32x8xbf16> to vector<24x32x8xbf16>
    %c0_12 = arith.constant 0 : index
    %c0_13 = arith.constant 0 : index
    %c0_14 = arith.constant 0 : index
    %c0_15 = arith.constant 0 : index
    %19 = vector.load %arg7[%c0_12, %c0_13, %c0_14, %c0_15] : memref<1x8x8x32xbf16, #tpu.memory_space<vmem>>, vector<1x8x8x32xbf16>
    %20 = vector.shape_cast %19 : vector<1x8x8x32xbf16> to vector<8x8x32xbf16>
    %21 = vector.extract_strided_slice %18 {offsets = [0, 0, 0], sizes = [12, 32, 8], strides = [1, 1, 1]} : vector<24x32x8xbf16> to vector<12x32x8xbf16>
    %22 = arith.truncf %3 : vector<8x32xf32> to vector<8x32xbf16>
    %23 = vector.shape_cast %22 : vector<8x32xbf16> to vector<1x8x32xbf16>
    %24 = vector.shape_cast %23 : vector<1x8x32xbf16> to vector<1x8x32xbf16>
    %25 = vector.broadcast %24 : vector<1x8x32xbf16> to vector<12x8x32xbf16>
    %cst = arith.constant dense<0.000000e+00> : vector<12x8x8xf32>
    %26 = tpu.matmul %25, %21, %cst {dimension_numbers = #tpu.dot_dimension_numbers<[2], [1], [1], [2], [0, 0, 0, 1, 1, 2], [0], [0]>} : vector<12x8x32xbf16>, vector<12x32x8xbf16>, vector<12x8x8xf32> -> vector<12x8x8xf32>
    %27 = vector.extract_strided_slice %26 {offsets = [0, 0, 0], sizes = [4, 8, 8], strides = [1, 1, 1]} : vector<12x8x8xf32> to vector<4x8x8xf32>
    %28 = vector.extract_strided_slice %26 {offsets = [4, 0, 0], sizes = [4, 8, 8], strides = [1, 1, 1]} : vector<12x8x8xf32> to vector<4x8x8xf32>
    %29 = vector.extract_strided_slice %26 {offsets = [8, 0, 0], sizes = [4, 8, 8], strides = [1, 1, 1]} : vector<12x8x8xf32> to vector<4x8x8xf32>
    %c0_16 = arith.constant 0 : index
    %c0_17 = arith.constant 0 : index
    %c0_18 = arith.constant 0 : index
    %30 = vector.load %arg4[%c0_16, %c0_17, %c0_18] : memref<1x8x8xf32, #tpu.memory_space<vmem>>, vector<1x8x8xf32>
    %31 = vector.shape_cast %30 : vector<1x8x8xf32> to vector<8x8xf32>
    %32 = vector.extract_strided_slice %20 {offsets = [0, 0, 0], sizes = [4, 8, 32], strides = [1, 1, 1]} : vector<8x8x32xbf16> to vector<4x8x32xbf16>
    %33 = arith.truncf %27 : vector<4x8x8xf32> to vector<4x8x8xbf16>
    %34 = arith.truncf %28 : vector<4x8x8xf32> to vector<4x8x8xbf16>
    %cst_19 = arith.constant dense<0.000000e+00> : vector<4x8x8xf32>
    %35 = tpu.matmul %33, %34, %cst_19 {dimension_numbers = #tpu.dot_dimension_numbers<[2], [2], [1], [1], [0, 0, 0, 1, 1, 1], [0], [0]>} : vector<4x8x8xbf16>, vector<4x8x8xbf16>, vector<4x8x8xf32> -> vector<4x8x8xf32>
    %cst_20 = arith.constant 0.353553385 : f32
    %36 = vector.broadcast %cst_20 : f32 to vector<4x8x8xf32>
    %37 = arith.mulf %35, %36 : vector<4x8x8xf32>
    %38 = vector.shape_cast %31 : vector<8x8xf32> to vector<1x8x8xf32>
    %39 = vector.broadcast %38 : vector<1x8x8xf32> to vector<4x8x8xf32>
    %40 = arith.addf %37, %39 : vector<4x8x8xf32>
    %cst_21 = arith.constant dense<0xFF800000> : vector<4x8xf32>
    %41 = vector.multi_reduction <maximumf>, %40, %cst_21 [2] : vector<4x8x8xf32> to vector<4x8xf32>
    %42 = vector.shape_cast %41 : vector<4x8xf32> to vector<4x8x1xf32>
    %43 = vector.broadcast %42 : vector<4x8x1xf32> to vector<4x8x8xf32>
    %44 = arith.subf %40, %43 : vector<4x8x8xf32>
    %45 = math.exp %44 : vector<4x8x8xf32>
    %cst_22 = arith.constant dense<0.000000e+00> : vector<4x8xf32>
    %46 = vector.multi_reduction <add>, %45, %cst_22 [2] : vector<4x8x8xf32> to vector<4x8xf32>
    %47 = vector.shape_cast %46 : vector<4x8xf32> to vector<4x8x1xf32>
    %48 = tpu.reciprocal %47 {approx = true} : vector<4x8x1xf32> -> vector<4x8x1xf32>
    %49 = vector.broadcast %48 : vector<4x8x1xf32> to vector<4x8x8xf32>
    %50 = arith.mulf %45, %49 : vector<4x8x8xf32>
    %51 = arith.truncf %50 : vector<4x8x8xf32> to vector<4x8x8xbf16>
    %52 = arith.truncf %29 : vector<4x8x8xf32> to vector<4x8x8xbf16>
    %cst_23 = arith.constant dense<0.000000e+00> : vector<4x8x8xf32>
    %53 = tpu.matmul %51, %52, %cst_23 {dimension_numbers = #tpu.dot_dimension_numbers<[2], [1], [1], [2], [0, 0, 0, 1, 1, 2], [0], [0]>} : vector<4x8x8xbf16>, vector<4x8x8xbf16>, vector<4x8x8xf32> -> vector<4x8x8xf32>
    %54 = arith.truncf %53 : vector<4x8x8xf32> to vector<4x8x8xbf16>
    %cst_24 = arith.constant dense<0.000000e+00> : vector<4x8x32xf32>
    %55 = tpu.matmul %54, %32, %cst_24 {dimension_numbers = #tpu.dot_dimension_numbers<[2], [1], [1], [2], [0, 0, 0, 1, 1, 2], [0], [0]>} : vector<4x8x8xbf16>, vector<4x8x32xbf16>, vector<4x8x32xf32> -> vector<4x8x32xf32>
    %cst_25 = arith.constant dense<0.000000e+00> : vector<8x32xf32>
    %56 = vector.multi_reduction <add>, %55, %cst_25 [0] : vector<4x8x32xf32> to vector<8x32xf32>
    %57 = arith.addf %3, %56 : vector<8x32xf32>
    %cst_26 = arith.constant dense<0.000000e+00> : vector<8xf32>
    %58 = vector.multi_reduction <add>, %57, %cst_26 [1] : vector<8x32xf32> to vector<8xf32>
    %59 = vector.shape_cast %58 : vector<8xf32> to vector<8x1xf32>
    %cst_27 = arith.constant 3.200000e+01 : f32
    %60 = vector.broadcast %cst_27 : f32 to vector<8x1xf32>
    %61 = arith.divf %59, %60 : vector<8x1xf32>
    %62 = vector.broadcast %61 : vector<8x1xf32> to vector<8x32xf32>
    %63 = arith.subf %57, %62 : vector<8x32xf32>
    %64 = arith.mulf %63, %63 : vector<8x32xf32>
    %cst_28 = arith.constant dense<0.000000e+00> : vector<8xf32>
    %65 = vector.multi_reduction <add>, %64, %cst_28 [1] : vector<8x32xf32> to vector<8xf32>
    %66 = vector.shape_cast %65 : vector<8xf32> to vector<8x1xf32>
    %cst_29 = arith.constant 3.200000e+01 : f32
    %67 = vector.broadcast %cst_29 : f32 to vector<8x1xf32>
    %68 = arith.divf %66, %67 : vector<8x1xf32>
    %69 = vector.broadcast %61 : vector<8x1xf32> to vector<8x32xf32>
    %70 = arith.subf %57, %69 : vector<8x32xf32>
    %cst_30 = arith.constant 9.99999974E-6 : f32
    %71 = vector.broadcast %cst_30 : f32 to vector<8x1xf32>
    %72 = arith.addf %68, %71 : vector<8x1xf32>
    %73 = math.rsqrt %72 : vector<8x1xf32>
    %74 = vector.broadcast %73 : vector<8x1xf32> to vector<8x32xf32>
    %75 = arith.mulf %70, %74 : vector<8x32xf32>
    %76 = vector.broadcast %8 : vector<1x32xf32> to vector<8x32xf32>
    %77 = arith.mulf %75, %76 : vector<8x32xf32>
    %78 = vector.broadcast %9 : vector<1x32xf32> to vector<8x32xf32>
    %79 = arith.addf %77, %78 : vector<8x32xf32>
    %80 = vector.extract_strided_slice %18 {offsets = [12, 0, 0], sizes = [4, 32, 8], strides = [1, 1, 1]} : vector<24x32x8xbf16> to vector<4x32x8xbf16>
    %81 = arith.truncf %79 : vector<8x32xf32> to vector<8x32xbf16>
    %82 = vector.shape_cast %81 : vector<8x32xbf16> to vector<1x8x32xbf16>
    %83 = vector.shape_cast %82 : vector<1x8x32xbf16> to vector<1x8x32xbf16>
    %84 = vector.broadcast %83 : vector<1x8x32xbf16> to vector<4x8x32xbf16>
    %cst_31 = arith.constant dense<0.000000e+00> : vector<4x8x8xf32>
    %85 = tpu.matmul %84, %80, %cst_31 {dimension_numbers = #tpu.dot_dimension_numbers<[2], [1], [1], [2], [0, 0, 0, 1, 1, 2], [0], [0]>} : vector<4x8x32xbf16>, vector<4x32x8xbf16>, vector<4x8x8xf32> -> vector<4x8x8xf32>
    %86 = vector.extract_strided_slice %18 {offsets = [16, 0, 0], sizes = [8, 32, 8], strides = [1, 1, 1]} : vector<24x32x8xbf16> to vector<8x32x8xbf16>
    %87 = arith.truncf %5 : vector<8x32xf32> to vector<8x32xbf16>
    %88 = vector.shape_cast %87 : vector<8x32xbf16> to vector<1x8x32xbf16>
    %89 = vector.shape_cast %88 : vector<1x8x32xbf16> to vector<1x8x32xbf16>
    %90 = vector.broadcast %89 : vector<1x8x32xbf16> to vector<8x8x32xbf16>
    %cst_32 = arith.constant dense<0.000000e+00> : vector<8x8x8xf32>
    %91 = tpu.matmul %90, %86, %cst_32 {dimension_numbers = #tpu.dot_dimension_numbers<[2], [1], [1], [2], [0, 0, 0, 1, 1, 2], [0], [0]>} : vector<8x8x32xbf16>, vector<8x32x8xbf16>, vector<8x8x8xf32> -> vector<8x8x8xf32>
    %92 = vector.extract_strided_slice %91 {offsets = [0, 0, 0], sizes = [4, 8, 8], strides = [1, 1, 1]} : vector<8x8x8xf32> to vector<4x8x8xf32>
    %93 = vector.extract_strided_slice %91 {offsets = [4, 0, 0], sizes = [4, 8, 8], strides = [1, 1, 1]} : vector<8x8x8xf32> to vector<4x8x8xf32>
    %c0_33 = arith.constant 0 : index
    %c0_34 = arith.constant 0 : index
    %c0_35 = arith.constant 0 : index
    %94 = vector.load %arg5[%c0_33, %c0_34, %c0_35] : memref<1x8x8xf32, #tpu.memory_space<vmem>>, vector<1x8x8xf32>
    %95 = vector.shape_cast %94 : vector<1x8x8xf32> to vector<8x8xf32>
    %96 = vector.extract_strided_slice %20 {offsets = [4, 0, 0], sizes = [4, 8, 32], strides = [1, 1, 1]} : vector<8x8x32xbf16> to vector<4x8x32xbf16>
    %97 = arith.truncf %85 : vector<4x8x8xf32> to vector<4x8x8xbf16>
    %98 = arith.truncf %92 : vector<4x8x8xf32> to vector<4x8x8xbf16>
    %cst_36 = arith.constant dense<0.000000e+00> : vector<4x8x8xf32>
    %99 = tpu.matmul %97, %98, %cst_36 {dimension_numbers = #tpu.dot_dimension_numbers<[2], [2], [1], [1], [0, 0, 0, 1, 1, 1], [0], [0]>} : vector<4x8x8xbf16>, vector<4x8x8xbf16>, vector<4x8x8xf32> -> vector<4x8x8xf32>
    %cst_37 = arith.constant 0.353553385 : f32
    %100 = vector.broadcast %cst_37 : f32 to vector<4x8x8xf32>
    %101 = arith.mulf %99, %100 : vector<4x8x8xf32>
    %102 = vector.shape_cast %95 : vector<8x8xf32> to vector<1x8x8xf32>
    %103 = vector.broadcast %102 : vector<1x8x8xf32> to vector<4x8x8xf32>
    %104 = arith.addf %101, %103 : vector<4x8x8xf32>
    %cst_38 = arith.constant dense<0xFF800000> : vector<4x8xf32>
    %105 = vector.multi_reduction <maximumf>, %104, %cst_38 [2] : vector<4x8x8xf32> to vector<4x8xf32>
    %106 = vector.shape_cast %105 : vector<4x8xf32> to vector<4x8x1xf32>
    %107 = vector.broadcast %106 : vector<4x8x1xf32> to vector<4x8x8xf32>
    %108 = arith.subf %104, %107 : vector<4x8x8xf32>
    %109 = math.exp %108 : vector<4x8x8xf32>
    %cst_39 = arith.constant dense<0.000000e+00> : vector<4x8xf32>
    %110 = vector.multi_reduction <add>, %109, %cst_39 [2] : vector<4x8x8xf32> to vector<4x8xf32>
    %111 = vector.shape_cast %110 : vector<4x8xf32> to vector<4x8x1xf32>
    %112 = tpu.reciprocal %111 {approx = true} : vector<4x8x1xf32> -> vector<4x8x1xf32>
    %113 = vector.broadcast %112 : vector<4x8x1xf32> to vector<4x8x8xf32>
    %114 = arith.mulf %109, %113 : vector<4x8x8xf32>
    %115 = arith.truncf %114 : vector<4x8x8xf32> to vector<4x8x8xbf16>
    %116 = arith.truncf %93 : vector<4x8x8xf32> to vector<4x8x8xbf16>
    %cst_40 = arith.constant dense<0.000000e+00> : vector<4x8x8xf32>
    %117 = tpu.matmul %115, %116, %cst_40 {dimension_numbers = #tpu.dot_dimension_numbers<[2], [1], [1], [2], [0, 0, 0, 1, 1, 2], [0], [0]>} : vector<4x8x8xbf16>, vector<4x8x8xbf16>, vector<4x8x8xf32> -> vector<4x8x8xf32>
    %118 = arith.truncf %117 : vector<4x8x8xf32> to vector<4x8x8xbf16>
    %cst_41 = arith.constant dense<0.000000e+00> : vector<4x8x32xf32>
    %119 = tpu.matmul %118, %96, %cst_41 {dimension_numbers = #tpu.dot_dimension_numbers<[2], [1], [1], [2], [0, 0, 0, 1, 1, 2], [0], [0]>} : vector<4x8x8xbf16>, vector<4x8x32xbf16>, vector<4x8x32xf32> -> vector<4x8x32xf32>
    %cst_42 = arith.constant dense<0.000000e+00> : vector<8x32xf32>
    %120 = vector.multi_reduction <add>, %119, %cst_42 [0] : vector<4x8x32xf32> to vector<8x32xf32>
    %121 = arith.addf %79, %120 : vector<8x32xf32>
    %cst_43 = arith.constant dense<0.000000e+00> : vector<8xf32>
    %122 = vector.multi_reduction <add>, %121, %cst_43 [1] : vector<8x32xf32> to vector<8xf32>
    %123 = vector.shape_cast %122 : vector<8xf32> to vector<8x1xf32>
    %cst_44 = arith.constant 3.200000e+01 : f32
    %124 = vector.broadcast %cst_44 : f32 to vector<8x1xf32>
    %125 = arith.divf %123, %124 : vector<8x1xf32>
    %126 = vector.broadcast %125 : vector<8x1xf32> to vector<8x32xf32>
    %127 = arith.subf %121, %126 : vector<8x32xf32>
    %128 = arith.mulf %127, %127 : vector<8x32xf32>
    %cst_45 = arith.constant dense<0.000000e+00> : vector<8xf32>
    %129 = vector.multi_reduction <add>, %128, %cst_45 [1] : vector<8x32xf32> to vector<8xf32>
    %130 = vector.shape_cast %129 : vector<8xf32> to vector<8x1xf32>
    %cst_46 = arith.constant 3.200000e+01 : f32
    %131 = vector.broadcast %cst_46 : f32 to vector<8x1xf32>
    %132 = arith.divf %130, %131 : vector<8x1xf32>
    %133 = vector.broadcast %125 : vector<8x1xf32> to vector<8x32xf32>
    %134 = arith.subf %121, %133 : vector<8x32xf32>
    %cst_47 = arith.constant 9.99999974E-6 : f32
    %135 = vector.broadcast %cst_47 : f32 to vector<8x1xf32>
    %136 = arith.addf %132, %135 : vector<8x1xf32>
    %137 = math.rsqrt %136 : vector<8x1xf32>
    %138 = vector.broadcast %137 : vector<8x1xf32> to vector<8x32xf32>
    %139 = arith.mulf %134, %138 : vector<8x32xf32>
    %140 = vector.broadcast %10 : vector<1x32xf32> to vector<8x32xf32>
    %141 = arith.mulf %139, %140 : vector<8x32xf32>
    %142 = vector.broadcast %11 : vector<1x32xf32> to vector<8x32xf32>
    %143 = arith.addf %141, %142 : vector<8x32xf32>
    %c0_48 = arith.constant 0 : index
    %c0_49 = arith.constant 0 : index
    %c0_50 = arith.constant 0 : index
    %c0_51 = arith.constant 0 : index
    %144 = vector.load %arg8[%c0_48, %c0_49, %c0_50, %c0_51] : memref<1x2x32x64xbf16, #tpu.memory_space<vmem>>, vector<1x2x32x64xbf16>
    %145 = vector.shape_cast %144 : vector<1x2x32x64xbf16> to vector<2x32x64xbf16>
    %146 = arith.truncf %143 : vector<8x32xf32> to vector<8x32xbf16>
    %147 = vector.extract_strided_slice %145 {offsets = [0, 0, 0], sizes = [1, 32, 64], strides = [1, 1, 1]} : vector<2x32x64xbf16> to vector<1x32x64xbf16>
    %148 = vector.shape_cast %147 : vector<1x32x64xbf16> to vector<32x64xbf16>
    %cst_52 = arith.constant dense<0.000000e+00> : vector<8x64xf32>
    %149 = tpu.matmul %146, %148, %cst_52 {dimension_numbers = #tpu.dot_dimension_numbers<[1], [0], [0], [1], [0, 0, 1, 1], [], []>} : vector<8x32xbf16>, vector<32x64xbf16>, vector<8x64xf32> -> vector<8x64xf32>
    %150 = vector.broadcast %14 : vector<1x64xf32> to vector<8x64xf32>
    %151 = arith.addf %149, %150 : vector<8x64xf32>
    %cst_53 = arith.constant 0.000000e+00 : f32
    %152 = vector.broadcast %cst_53 : f32 to vector<8x64xf32>
    %153 = arith.maximumf %151, %152 : vector<8x64xf32>
    %154 = arith.truncf %153 : vector<8x64xf32> to vector<8x64xbf16>
    %155 = vector.extract_strided_slice %145 {offsets = [1, 0, 0], sizes = [1, 32, 64], strides = [1, 1, 1]} : vector<2x32x64xbf16> to vector<1x32x64xbf16>
    %156 = vector.shape_cast %155 : vector<1x32x64xbf16> to vector<32x64xbf16>
    %cst_54 = arith.constant dense<0.000000e+00> : vector<8x32xf32>
    %157 = tpu.matmul %154, %156, %cst_54 {dimension_numbers = #tpu.dot_dimension_numbers<[1], [1], [0], [0], [0, 0, 1, 0], [], []>} : vector<8x64xbf16>, vector<32x64xbf16>, vector<8x32xf32> -> vector<8x32xf32>
    %158 = vector.broadcast %15 : vector<1x32xf32> to vector<8x32xf32>
    %159 = arith.addf %157, %158 : vector<8x32xf32>
    %160 = arith.addf %143, %159 : vector<8x32xf32>
    %cst_55 = arith.constant dense<0.000000e+00> : vector<8xf32>
    %161 = vector.multi_reduction <add>, %160, %cst_55 [1] : vector<8x32xf32> to vector<8xf32>
    %162 = vector.shape_cast %161 : vector<8xf32> to vector<8x1xf32>
    %cst_56 = arith.constant 3.200000e+01 : f32
    %163 = vector.broadcast %cst_56 : f32 to vector<8x1xf32>
    %164 = arith.divf %162, %163 : vector<8x1xf32>
    %165 = vector.broadcast %164 : vector<8x1xf32> to vector<8x32xf32>
    %166 = arith.subf %160, %165 : vector<8x32xf32>
    %167 = arith.mulf %166, %166 : vector<8x32xf32>
    %cst_57 = arith.constant dense<0.000000e+00> : vector<8xf32>
    %168 = vector.multi_reduction <add>, %167, %cst_57 [1] : vector<8x32xf32> to vector<8xf32>
    %169 = vector.shape_cast %168 : vector<8xf32> to vector<8x1xf32>
    %cst_58 = arith.constant 3.200000e+01 : f32
    %170 = vector.broadcast %cst_58 : f32 to vector<8x1xf32>
    %171 = arith.divf %169, %170 : vector<8x1xf32>
    %172 = vector.broadcast %164 : vector<8x1xf32> to vector<8x32xf32>
    %173 = arith.subf %160, %172 : vector<8x32xf32>
    %cst_59 = arith.constant 9.99999974E-6 : f32
    %174 = vector.broadcast %cst_59 : f32 to vector<8x1xf32>
    %175 = arith.addf %171, %174 : vector<8x1xf32>
    %176 = math.rsqrt %175 : vector<8x1xf32>
    %177 = vector.broadcast %176 : vector<8x1xf32> to vector<8x32xf32>
    %178 = arith.mulf %173, %177 : vector<8x32xf32>
    %179 = vector.broadcast %12 : vector<1x32xf32> to vector<8x32xf32>
    %180 = arith.mulf %178, %179 : vector<8x32xf32>
    %181 = vector.broadcast %13 : vector<1x32xf32> to vector<8x32xf32>
    %182 = arith.addf %180, %181 : vector<8x32xf32>
    %c0_60 = arith.constant 0 : index
    %c0_61 = arith.constant 0 : index
    %183 = vector.load %arg12[%c0_60, %c0_61] : memref<8x32xf32, #tpu.memory_space<vmem>>, vector<8x32xf32>
    tpu.vector_store %arg12[%c0_60, %c0_61], %182 {strides = array<i32>} : memref<8x32xf32, #tpu.memory_space<vmem>>, vector<8x32xf32>,
    %c1_i32 = arith.constant 1 : i32
    %184 = arith.cmpi eq, %arg1, %c1_i32 : i32
    %185 = arith.extui %184 : i1 to i32
    %c0_i32_62 = arith.constant 0 : i32
    %186 = arith.cmpi ne, %185, %c0_i32_62 : i32
    scf.if %186 {
      %187 = arith.truncf %182 : vector<8x32xf32> to vector<8x32xbf16>
      %c0_63 = arith.constant 0 : index
      %c0_64 = arith.constant 0 : index
      %188 = vector.load %arg10[%c0_63, %c0_64] : memref<32x128xbf16, #tpu.memory_space<vmem>>, vector<32x128xbf16>
      %cst_65 = arith.constant dense<0.000000e+00> : vector<8x128xf32>
      %189 = tpu.matmul %187, %188, %cst_65 {dimension_numbers = #tpu.dot_dimension_numbers<[1], [0], [0], [1], [0, 0, 1, 1], [], []>} : vector<8x32xbf16>, vector<32x128xbf16>, vector<8x128xf32> -> vector<8x128xf32>
      %190 = vector.broadcast %16 : vector<1x128xf32> to vector<8x128xf32>
      %191 = arith.addf %189, %190 : vector<8x128xf32>
      %c0_66 = arith.constant 0 : index
      %c0_67 = arith.constant 0 : index
      %c0_68 = arith.constant 0 : index
      %192 = vector.load %arg11[%c0_66, %c0_67, %c0_68] : memref<1x8x128xf32, #tpu.memory_space<vmem>>, vector<1x8x128xf32>
      %193 = vector.shape_cast %192 : vector<1x8x128xf32> to vector<8x128xf32>
      %194 = vector.shape_cast %191 : vector<8x128xf32> to vector<1x8x128xf32>
      tpu.vector_store %arg11[%c0_66, %c0_67, %c0_68], %194 {strides = array<i32>} : memref<1x8x128xf32, #tpu.memory_space<vmem>>, vector<1x8x128xf32>,
    } else {
    }
    return
  }
  func.func @transform_0(%arg0: i32, %arg1: i32) -> (i32, i32, i32) {
    %c0_i32 = arith.constant 0 : i32
    %c0_i32_0 = arith.constant 0 : i32
    %c0_i32_1 = arith.constant 0 : i32
    return %arg0, %c0_i32, %c0_i32_0 : i32, i32, i32
  }
  func.func @transform_1(%arg0: i32, %arg1: i32) -> (i32, i32, i32) {
    %c0_i32 = arith.constant 0 : i32
    %c0_i32_0 = arith.constant 0 : i32
    %c0_i32_1 = arith.constant 0 : i32
    return %arg0, %c0_i32, %c0_i32_0 : i32, i32, i32
  }
  func.func @transform_2(%arg0: i32, %arg1: i32) -> (i32, i32, i32) {
    %c0_i32 = arith.constant 0 : i32
    %c0_i32_0 = arith.constant 0 : i32
    %c0_i32_1 = arith.constant 0 : i32
    return %arg0, %c0_i32, %c0_i32_0 : i32, i32, i32
  }
  func.func @transform_3(%arg0: i32, %arg1: i32) -> (i32, i32, i32) {
    %c0_i32 = arith.constant 0 : i32
    %c0_i32_0 = arith.constant 0 : i32
    %c0_i32_1 = arith.constant 0 : i32
    return %arg0, %c0_i32, %c0_i32_0 : i32, i32, i32
  }
  func.func @transform_4(%arg0: i32, %arg1: i32) -> (i32, i32, i32, i32) {
    %c0_i32 = arith.constant 0 : i32
    %c0_i32_0 = arith.constant 0 : i32
    %c0_i32_1 = arith.constant 0 : i32
    %c0_i32_2 = arith.constant 0 : i32
    return %arg1, %c0_i32, %c0_i32_0, %c0_i32_1 : i32, i32, i32, i32
  }
  func.func @transform_5(%arg0: i32, %arg1: i32) -> (i32, i32, i32, i32) {
    %c0_i32 = arith.constant 0 : i32
    %c0_i32_0 = arith.constant 0 : i32
    %c0_i32_1 = arith.constant 0 : i32
    %c0_i32_2 = arith.constant 0 : i32
    return %arg1, %c0_i32, %c0_i32_0, %c0_i32_1 : i32, i32, i32, i32
  }
  func.func @transform_6(%arg0: i32, %arg1: i32) -> (i32, i32, i32, i32) {
    %c0_i32 = arith.constant 0 : i32
    %c0_i32_0 = arith.constant 0 : i32
    %c0_i32_1 = arith.constant 0 : i32
    %c0_i32_2 = arith.constant 0 : i32
    return %arg1, %c0_i32, %c0_i32_0, %c0_i32_1 : i32, i32, i32, i32
  }
  func.func @transform_7(%arg0: i32, %arg1: i32) -> (i32, i32, i32) {
    %c0_i32 = arith.constant 0 : i32
    %c0_i32_0 = arith.constant 0 : i32
    %c0_i32_1 = arith.constant 0 : i32
    return %arg1, %c0_i32, %c0_i32_0 : i32, i32, i32
  }
  func.func @transform_8(%arg0: i32, %arg1: i32) -> (i32, i32) {
    %c0_i32 = arith.constant 0 : i32
    %c0_i32_0 = arith.constant 0 : i32
    %c0_i32_1 = arith.constant 0 : i32
    return %c0_i32, %c0_i32_0 : i32, i32
  }
  func.func @transform_9(%arg0: i32, %arg1: i32) -> (i32, i32, i32) {
    %c0_i32 = arith.constant 0 : i32
    %c0_i32_0 = arith.constant 0 : i32
    %c0_i32_1 = arith.constant 0 : i32
    return %arg0, %c0_i32, %c0_i32_0 : i32, i32, i32
  }
}

</mosaic_0001>

<llo_original>
// kernel: transformer_forward.2
$region0: #{transformer_forward.2}
  #allocation0 [shape = 'u32[]', space=smem, size = 0x4, offset = 0x4, fixed_abs, tag = 'smem constant byte address 0x4 - core index']
  #allocation1 [shape = 'u32[144,128]{1,0:T(1,128)}', space=vmem, size = 0x12000, scoped, tag = 'internal scratch']
  #allocation2 [shape = 'f32[8,32]{1,0:T(8,128)}', space=vmem, size = 0x1000, scoped, tag = 'scratch operand']
  %s0 = inlined_call_operand.vmem [shape: f32[2,8,32], index: 0, kind: input, shape index: {}]
  %s1 = inlined_call_operand.vmem [shape: f32[2,8,8], index: 1, kind: input, shape index: {}]
  %s2 = inlined_call_operand.vmem [shape: bf16[2,12,32,8], index: 2, kind: input, shape index: {}]
  %s3 = inlined_call_operand.vmem [shape: bf16[2,4,8,32], index: 3, kind: input, shape index: {}]
  %s4 = inlined_call_operand.vmem [shape: bf16[2,2,32,64], index: 4, kind: input, shape index: {}]
  %s5 = inlined_call_operand.vmem [shape: f32[2,6,128], index: 5, kind: input, shape index: {}]
  %s6 = inlined_call_operand.vmem [shape: f32[2,8,32], index: 6, kind: output, shape index: {}]
  %s7 = sld [smem:[#allocation0]]
  $region65: #{transformer_forward.2} parent=0
    _
  %s9 = ssub.s32 1, %s7
  %s10 = scalar_select 0, %s9, %s7
  loop: start=0, step=1, limit=6
  $region2: #{transformer_forward.2} parent=0 // loop_pre_header
    _
  $region3: #{transformer_forward.2} parent=0 // loop_header
    %s12 = sphi 0, %s16
    %p13 = scmp.ge.s32.totalorder %s12, 6
    %s19 = sphi 0, %s31
    %s20 = sphi 0, %s27
    %s21 = sphi 0, %s19
    %s22 = sphi 0, %s20
    %s23 = sphi 0, %s21
    %s24 = sphi 0, %s22
    %s34 = sphi 0, %s36
    %s37 = sphi 0, %s34
    %s38 = sphi 0, %s37
    %s54 = sphi 0, %s38
    %s60 = sphi 0, %s62
    %s63 = sphi 0, %s60
    %s64 = sphi 0, %s63
    %s80 = sphi 0, %s64
    %s86 = sphi 0, %s88
    %s89 = sphi 0, %s86
    %s90 = sphi 0, %s89
    %s106 = sphi 0, %s90
    %s112 = sphi 0, %s114
    %s115 = sphi 0, %s112
    %s116 = sphi 0, %s115
    %s132 = sphi 0, %s116
    %s138 = sphi 0, %s140
    %s141 = sphi 0, %s138
    %s142 = sphi 0, %s141
    %s158 = sphi 0, %s142
    %s164 = sphi 0, %s166
    %s167 = sphi 0, %s164
    %s168 = sphi 0, %s167
    %s184 = sphi 0, %s168
    %s190 = sphi 0, %s192
    %s193 = sphi 0, %s190
    %s194 = sphi 0, %s193
    %s210 = sphi 0, %s194
  $region4: #{transformer_forward.2} parent=0 // loop_header_branch
    %15 = sbr.rel (%p13) target = $region8
  $region5: #{transformer_forward.2} parent=0 // loop_body
    %s17 = ssub.s32 %s12, 1
    %s18 = ssub.s32 %s12, 2
    %s25 = sadd.s32 1, %s20
    %p26 = scmp.ge.s32.totalorder %s25, 2
    %s27 = scalar_select %p26, 0, %s25
    %s28 = sadd.s32 1, %s19
    %s29 = scalar_select %p26, %s28, %s19
    %p30 = scmp.ge.s32.totalorder %s29, 2
    %s31 = scalar_select %p30, 0, %s29
    %s32 = ssub.s32 %s19, %s31
    %p33 = scmp.eq.s32.totalorder %s32, 0
    %s35 = sadd.s32 %s34, 1
    %s36 = scalar_select %p33, %s34, %s35
    %p39 = pneg %p33
    %p40 = scmp.eq.s32.totalorder %s12, 3
    %p41 = por %p39, %p40
    %p42 = scmp.ne.s32.totalorder %s34, %s37
    %p43 = scmp.eq.s32.totalorder %s12, 0
    %p44 = por %p42, %p43
    %p45 = scmp.ne.s32.totalorder %s34, %s37
    %p46 = scmp.eq.s32.totalorder %s17, 3
    %p47 = por %p45, %p46
    %p48 = scmp.ne.s32.totalorder %s37, %s38
    %p49 = scmp.eq.s32.totalorder %s17, 0
    %p50 = por %p48, %p49
    %p51 = scmp.ne.s32.totalorder %s37, %s38
    %p52 = scmp.eq.s32.totalorder %s18, 3
    %p53 = por %p51, %p52
    %p55 = scmp.ne.s32.totalorder %s38, %s54
    %p56 = scmp.eq.s32.totalorder %s18, 0
    %p57 = por %p55, %p56
    %s58 = ssub.s32 %s19, %s31
    %p59 = scmp.eq.s32.totalorder %s58, 0
    %s61 = sadd.s32 %s60, 1
    %s62 = scalar_select %p59, %s60, %s61
    %p65 = pneg %p59
    %p66 = scmp.eq.s32.totalorder %s12, 3
    %p67 = por %p65, %p66
    %p68 = scmp.ne.s32.totalorder %s60, %s63
    %p69 = scmp.eq.s32.totalorder %s12, 0
    %p70 = por %p68, %p69
    %p71 = scmp.ne.s32.totalorder %s60, %s63
    %p72 = scmp.eq.s32.totalorder %s17, 3
    %p73 = por %p71, %p72
    %p74 = scmp.ne.s32.totalorder %s63, %s64
    %p75 = scmp.eq.s32.totalorder %s17, 0
    %p76 = por %p74, %p75
    %p77 = scmp.ne.s32.totalorder %s63, %s64
    %p78 = scmp.eq.s32.totalorder %s18, 3
    %p79 = por %p77, %p78
    %p81 = scmp.ne.s32.totalorder %s64, %s80
    %p82 = scmp.eq.s32.totalorder %s18, 0
    %p83 = por %p81, %p82
    %s84 = ssub.s32 %s20, %s27
    %p85 = scmp.eq.s32.totalorder %s84, 0
    %s87 = sadd.s32 %s86, 1
    %s88 = scalar_select %p85, %s86, %s87
    %p91 = pneg %p85
    %p92 = scmp.eq.s32.totalorder %s12, 3
    %p93 = por %p91, %p92
    %p94 = scmp.ne.s32.totalorder %s86, %s89
    %p95 = scmp.eq.s32.totalorder %s12, 0
    %p96 = por %p94, %p95
    %p97 = scmp.ne.s32.totalorder %s86, %s89
    %p98 = scmp.eq.s32.totalorder %s17, 3
    %p99 = por %p97, %p98
    %p100 = scmp.ne.s32.totalorder %s89, %s90
    %p101 = scmp.eq.s32.totalorder %s17, 0
    %p102 = por %p100, %p101
    %p103 = scmp.ne.s32.totalorder %s89, %s90
    %p104 = scmp.eq.s32.totalorder %s18, 3
    %p105 = por %p103, %p104
    %p107 = scmp.ne.s32.totalorder %s90, %s106
    %p108 = scmp.eq.s32.totalorder %s18, 0
    %p109 = por %p107, %p108
    %s110 = ssub.s32 %s20, %s27
    %p111 = scmp.eq.s32.totalorder %s110, 0
    %s113 = sadd.s32 %s112, 1
    %s114 = scalar_select %p111, %s112, %s113
    %p117 = pneg %p111
    %p118 = scmp.eq.s32.totalorder %s12, 3
    %p119 = por %p117, %p118
    %p120 = scmp.ne.s32.totalorder %s112, %s115
    %p121 = scmp.eq.s32.totalorder %s12, 0
    %p122 = por %p120, %p121
    %p123 = scmp.ne.s32.totalorder %s112, %s115
    %p124 = scmp.eq.s32.totalorder %s17, 3
    %p125 = por %p123, %p124
    %p126 = scmp.ne.s32.totalorder %s115, %s116
    %p127 = scmp.eq.s32.totalorder %s17, 0
    %p128 = por %p126, %p127
    %p129 = scmp.ne.s32.totalorder %s115, %s116
    %p130 = scmp.eq.s32.totalorder %s18, 3
    %p131 = por %p129, %p130
    %p133 = scmp.ne.s32.totalorder %s116, %s132
    %p134 = scmp.eq.s32.totalorder %s18, 0
    %p135 = por %p133, %p134
    %s136 = ssub.s32 %s20, %s27
    %p137 = scmp.eq.s32.totalorder %s136, 0
    %s139 = sadd.s32 %s138, 1
    %s140 = scalar_select %p137, %s138, %s139
    %p143 = pneg %p137
    %p144 = scmp.eq.s32.totalorder %s12, 3
    %p145 = por %p143, %p144
    %p146 = scmp.ne.s32.totalorder %s138, %s141
    %p147 = scmp.eq.s32.totalorder %s12, 0
    %p148 = por %p146, %p147
    %p149 = scmp.ne.s32.totalorder %s138, %s141
    %p150 = scmp.eq.s32.totalorder %s17, 3
    %p151 = por %p149, %p150
    %p152 = scmp.ne.s32.totalorder %s141, %s142
    %p153 = scmp.eq.s32.totalorder %s17, 0
    %p154 = por %p152, %p153
    %p155 = scmp.ne.s32.totalorder %s141, %s142
    %p156 = scmp.eq.s32.totalorder %s18, 3
    %p157 = por %p155, %p156
    %p159 = scmp.ne.s32.totalorder %s142, %s158
    %p160 = scmp.eq.s32.totalorder %s18, 0
    %p161 = por %p159, %p160
    %s162 = ssub.s32 %s20, %s27
    %p163 = scmp.eq.s32.totalorder %s162, 0
    %s165 = sadd.s32 %s164, 1
    %s166 = scalar_select %p163, %s164, %s165
    %p169 = pneg %p163
    %p170 = scmp.eq.s32.totalorder %s12, 3
    %p171 = por %p169, %p170
    %p172 = scmp.ne.s32.totalorder %s164, %s167
    %p173 = scmp.eq.s32.totalorder %s12, 0
    %p174 = por %p172, %p173
    %p175 = scmp.ne.s32.totalorder %s164, %s167
    %p176 = scmp.eq.s32.totalorder %s17, 3
    %p177 = por %p175, %p176
    %p178 = scmp.ne.s32.totalorder %s167, %s168
    %p179 = scmp.eq.s32.totalorder %s17, 0
    %p180 = por %p178, %p179
    %p181 = scmp.ne.s32.totalorder %s167, %s168
    %p182 = scmp.eq.s32.totalorder %s18, 3
    %p183 = por %p181, %p182
    %p185 = scmp.ne.s32.totalorder %s168, %s184
    %p186 = scmp.eq.s32.totalorder %s18, 0
    %p187 = por %p185, %p186
    %s188 = ssub.s32 %s19, %s31
    %p189 = scmp.eq.s32.totalorder %s188, 0
    %s191 = sadd.s32 %s190, 1
    %s192 = scalar_select %p189, %s190, %s191
    %p195 = pneg %p189
    %p196 = scmp.eq.s32.totalorder %s12, 3
    %p197 = por %p195, %p196
    %p198 = scmp.ne.s32.totalorder %s190, %s193
    %p199 = scmp.eq.s32.totalorder %s12, 0
    %p200 = por %p198, %p199
    %p201 = scmp.ne.s32.totalorder %s190, %s193
    %p202 = scmp.eq.s32.totalorder %s17, 3
    %p203 = por %p201, %p202
    %p204 = scmp.ne.s32.totalorder %s193, %s194
    %p205 = scmp.eq.s32.totalorder %s17, 0
    %p206 = por %p204, %p205
    %p207 = scmp.ne.s32.totalorder %s193, %s194
    %p208 = scmp.eq.s32.totalorder %s18, 3
    %p209 = por %p207, %p208
    %p211 = scmp.ne.s32.totalorder %s194, %s210
    %p212 = scmp.eq.s32.totalorder %s18, 0
    %p213 = por %p211, %p212
    %p214 = scmp.le.s32.totalorder 1, %s12
    %p215 = scmp.lt.s32.totalorder %s12, 5
    %p216 = pnand %p214, %p215
    %p217 = pneg %p216
    // Predicated region
    $region9: #{transformer_forward.2} parent=5 // pred_check
      _
    $region10: #{transformer_forward.2} parent=5 // pred_check_branch
      %219 = sbr.rel (%p216) target = $region12
    $region11: #{transformer_forward.2} parent=5 // pred_region
      %s220 = ssub.s32 %s12, 1
    $region12: #{transformer_forward.2} parent=5 // pred_fallthru
      _
    %p221 = scmp.lt.s32.totalorder %s12, 4
    // Predicated region
    $region13: #{transformer_forward.2} parent=5 // pred_check
      %p222 = pneg %p221
    $region14: #{transformer_forward.2} parent=5 // pred_check_branch
      %224 = sbr.rel (%p222) target = $region16
    $region15: #{transformer_forward.2} parent=5 // pred_region
      // Predicated region
      $region17: #{transformer_forward.2} parent=15 // pred_check
        %p225 = pneg %p44
      $region18: #{transformer_forward.2} parent=15 // pred_check_branch
        %227 = sbr.rel (%p225) target = $region20
      $region19: #{transformer_forward.2} parent=15 // pred_region
        %p228 = scmp.lt.s32.totalorder %s19, 1
        %s229 = scalar_select %p228, %s19, 1
        %s230 = smul.addr %s229, 8
        %s231 = scalar_lea.vmem %s0, %s230
      $region20: #{transformer_forward.2} parent=15 // pred_fallthru
        _
      // Predicated region
      $region21: #{transformer_forward.2} parent=15 // pred_check
        %p232 = pneg %p70
      $region22: #{transformer_forward.2} parent=15 // pred_check_branch
        %234 = sbr.rel (%p232) target = $region24
      $region23: #{transformer_forward.2} parent=15 // pred_region
        %p235 = scmp.lt.s32.totalorder %s19, 1
        %s236 = scalar_select %p235, %s19, 1
        %s237 = smul.addr %s236, 8
        %s238 = scalar_lea.vmem %s1, %s237
      $region24: #{transformer_forward.2} parent=15 // pred_fallthru
        _
      // Predicated region
      $region25: #{transformer_forward.2} parent=15 // pred_check
        %p239 = pneg %p96
      $region26: #{transformer_forward.2} parent=15 // pred_check_branch
        %241 = sbr.rel (%p239) target = $region28
      $region27: #{transformer_forward.2} parent=15 // pred_region
        %p242 = scmp.lt.s32.totalorder %s20, 1
        %s243 = scalar_select %p242, %s20, 1
        %s244 = smul.addr %s243, 48
        %s245 = smul.addr %s244, 4
        %s246 = scalar_lea.vmem %s2, %s245
      $region28: #{transformer_forward.2} parent=15 // pred_fallthru
        _
      // Predicated region
      $region29: #{transformer_forward.2} parent=15 // pred_check
        %p247 = pneg %p122
      $region30: #{transformer_forward.2} parent=15 // pred_check_branch
        %249 = sbr.rel (%p247) target = $region32
      $region31: #{transformer_forward.2} parent=15 // pred_region
        %p250 = scmp.lt.s32.totalorder %s20, 1
        %s251 = scalar_select %p250, %s20, 1
        %s252 = smul.addr %s251, 4
        %s253 = smul.addr %s252, 4
        %s254 = scalar_lea.vmem %s3, %s253
      $region32: #{transformer_forward.2} parent=15 // pred_fallthru
        _
      // Predicated region
      $region33: #{transformer_forward.2} parent=15 // pred_check
        %p255 = pneg %p148
      $region34: #{transformer_forward.2} parent=15 // pred_check_branch
        %257 = sbr.rel (%p255) target = $region36
      $region35: #{transformer_forward.2} parent=15 // pred_region
        %p258 = scmp.lt.s32.totalorder %s20, 1
        %s259 = scalar_select %p258, %s20, 1
        %s260 = smul.addr %s259, 8
        %s261 = smul.addr %s260, 4
        %s262 = scalar_lea.vmem %s4, %s261
      $region36: #{transformer_forward.2} parent=15 // pred_fallthru
        _
      // Predicated region
      $region37: #{transformer_forward.2} parent=15 // pred_check
        %p263 = pneg %p174
      $region38: #{transformer_forward.2} parent=15 // pred_check_branch
        %265 = sbr.rel (%p263) target = $region40
      $region39: #{transformer_forward.2} parent=15 // pred_region
        %p266 = scmp.lt.s32.totalorder %s20, 1
        %s267 = scalar_select %p266, %s20, 1
        %s268 = smul.addr %s267, 8
        %s269 = scalar_lea.vmem %s5, %s268
      $region40: #{transformer_forward.2} parent=15 // pred_fallthru
        _
    $region16: #{transformer_forward.2} parent=5 // pred_fallthru
      _
    %p270 = scmp.le.s32.totalorder 1, %s12
    %p271 = scmp.lt.s32.totalorder %s12, 5
    %p272 = pnand %p270, %p271
    %p273 = pneg %p272
    // Predicated region
    $region41: #{transformer_forward.2} parent=5 // pred_check
      _
    $region42: #{transformer_forward.2} parent=5 // pred_check_branch
      %275 = sbr.rel (%p272) target = $region44
    $region43: #{transformer_forward.2} parent=5 // pred_region
      %s276 = ssub.s32 %s12, 1
      %p277 = scmp.lt.s32.totalorder %s21, 1
      %s278 = scalar_select %p277, %s21, 1
      %s279 = smul.addr %s278, 8
      %s280 = scalar_lea.vmem %s0, %s279
      %p281 = pneg %p50
      %p282 = pneg %p47
      %p283 = scmp.lt.s32.totalorder %s21, 1
      %s284 = scalar_select %p283, %s21, 1
      %s285 = smul.addr %s284, 8
      %s286 = scalar_lea.vmem %s1, %s285
      %p287 = pneg %p76
      %p288 = pneg %p73
      %p289 = scmp.lt.s32.totalorder %s22, 1
      %s290 = scalar_select %p289, %s22, 1
      %s291 = smul.addr %s290, 48
      %s292 = smul.addr %s291, 4
      %s293 = scalar_lea.vmem %s2, %s292
      %p294 = pneg %p102
      %p295 = pneg %p99
      %p296 = scmp.lt.s32.totalorder %s22, 1
      %s297 = scalar_select %p296, %s22, 1
      %s298 = smul.addr %s297, 4
      %s299 = smul.addr %s298, 4
      %s300 = scalar_lea.vmem %s3, %s299
      %p301 = pneg %p128
      %p302 = pneg %p125
      %p303 = scmp.lt.s32.totalorder %s22, 1
      %s304 = scalar_select %p303, %s22, 1
      %s305 = smul.addr %s304, 8
      %s306 = smul.addr %s305, 4
      %s307 = scalar_lea.vmem %s4, %s306
      %p308 = pneg %p154
      %p309 = pneg %p151
      %p310 = scmp.lt.s32.totalorder %s22, 1
      %s311 = scalar_select %p310, %s22, 1
      %s312 = smul.addr %s311, 8
      %s313 = scalar_lea.vmem %s5, %s312
      %p314 = pneg %p180
      %p315 = pneg %p177
      %p316 = pneg %p206
      %p317 = pneg %p203
      %p318 = scmp.lt.s32.totalorder %s21, 1
      %s319 = scalar_select %p318, %s21, 1
      %s320 = smul.addr %s319, 8
      %s321 = scalar_lea.vmem %s6, %s320
      %p322 = scmp.lt.s32.totalorder %s21, 1
      %s323 = scalar_select %p322, %s21, 1
      %s324 = smul.addr %s323, 8
      %s325 = scalar_lea.vmem %s0, %s324
      %p326 = scmp.lt.s32.totalorder %s21, 1
      %s327 = scalar_select %p326, %s21, 1
      %s328 = smul.addr %s327, 8
      %s329 = scalar_lea.vmem %s1, %s328
      %p330 = scmp.lt.s32.totalorder %s22, 1
      %s331 = scalar_select %p330, %s22, 1
      %s332 = smul.addr %s331, 48
      %s333 = smul.addr %s332, 4
      %s334 = scalar_lea.vmem %s2, %s333
      %p335 = scmp.lt.s32.totalorder %s22, 1
      %s336 = scalar_select %p335, %s22, 1
      %s337 = smul.addr %s336, 4
      %s338 = smul.addr %s337, 4
      %s339 = scalar_lea.vmem %s3, %s338
      %p340 = scmp.lt.s32.totalorder %s22, 1
      %s341 = scalar_select %p340, %s22, 1
      %s342 = smul.addr %s341, 8
      %s343 = smul.addr %s342, 4
      %s344 = scalar_lea.vmem %s4, %s343
      %p345 = scmp.lt.s32.totalorder %s22, 1
      %s346 = scalar_select %p345, %s22, 1
      %s347 = smul.addr %s346, 8
      %s348 = scalar_lea.vmem %s5, %s347
      %p349 = scmp.lt.s32.totalorder %s21, 1
      %s350 = scalar_select %p349, %s21, 1
      %s351 = smul.addr %s350, 8
      %s352 = scalar_lea.vmem %s6, %s351
      %p354 = scmp.eq.s32.totalorder %s22, 0
      // Predicated region
      $region45: #{transformer_forward.2} parent=43 // pred_check
        %p355 = pneg %p354
      $region46: #{transformer_forward.2} parent=43 // pred_check_branch
        %357 = sbr.rel (%p355) target = $region48
      $region47: #{transformer_forward.2} parent=43 // pred_region
        %v358 = vld [vmem:[%s325] sm:$0xff]
        %vm359 = vcmask 261120
        %360 = vst.msk [vmem:[#allocation2] sm:$0xff] %vm359, %v358
      $region48: #{transformer_forward.2} parent=43 // pred_fallthru
        _
      %v361 = vld [vmem:[#allocation2] sm:$0xff]
      %v362 = vld [vmem:[%s348] sm:$0x3f]
      %v363 = vld [vmem:[%s334] sm:$0xf]
      %v364 = vld [vmem:[%s334 + $0x4] sm:$0xf]
      %v365 = vld [vmem:[%s334 + $0x8] sm:$0xf]
      %v366 = vld [vmem:[%s334 + $0xc] sm:$0xf]
      %v367 = vld [vmem:[%s334 + $0x10] sm:$0xf]
      %v368 = vld [vmem:[%s334 + $0x14] sm:$0xf]
      %v369 = vld [vmem:[%s334 + $0x18] sm:$0xf]
      %v370 = vld [vmem:[%s334 + $0x1c] sm:$0xf]
      %v371 = vld [vmem:[%s334 + $0x20] sm:$0xf]
      %v372 = vld [vmem:[%s334 + $0x24] sm:$0xf]
      %v373 = vld [vmem:[%s334 + $0x28] sm:$0xf]
      %v374 = vld [vmem:[%s334 + $0x2c] sm:$0xf]
      %v375 = vld [vmem:[%s334 + $0x30] sm:$0xf]
      %v376 = vld [vmem:[%s334 + $0x34] sm:$0xf]
      %v377 = vld [vmem:[%s334 + $0x38] sm:$0xf]
      %v378 = vld [vmem:[%s334 + $0x3c] sm:$0xf]
      %v379 = vld [vmem:[%s334 + $0x40] sm:$0xf]
      %v380 = vld [vmem:[%s334 + $0x44] sm:$0xf]
      %v381 = vld [vmem:[%s334 + $0x48] sm:$0xf]
      %v382 = vld [vmem:[%s334 + $0x4c] sm:$0xf]
      %v383 = vld [vmem:[%s334 + $0x50] sm:$0xf]
      %v384 = vld [vmem:[%s334 + $0x54] sm:$0xf]
      %v385 = vld [vmem:[%s334 + $0x58] sm:$0xf]
      %v386 = vld [vmem:[%s334 + $0x5c] sm:$0xf]
      %v387 = vld [vmem:[%s334 + $0x60] sm:$0xf]
      %v388 = vld [vmem:[%s334 + $0x64] sm:$0xf]
      %v389 = vld [vmem:[%s334 + $0x68] sm:$0xf]
      %v390 = vld [vmem:[%s334 + $0x6c] sm:$0xf]
      %v391 = vld [vmem:[%s334 + $0x70] sm:$0xf]
      %v392 = vld [vmem:[%s334 + $0x74] sm:$0xf]
      %v393 = vld [vmem:[%s334 + $0x78] sm:$0xf]
      %v394 = vld [vmem:[%s334 + $0x7c] sm:$0xf]
      %v395 = vld [vmem:[%s334 + $0x80] sm:$0xf]
      %v396 = vld [vmem:[%s334 + $0x84] sm:$0xf]
      %v397 = vld [vmem:[%s334 + $0x88] sm:$0xf]
      %v398 = vld [vmem:[%s334 + $0x8c] sm:$0xf]
      %v399 = vld [vmem:[%s334 + $0x90] sm:$0xf]
      %v400 = vld [vmem:[%s334 + $0x94] sm:$0xf]
      %v401 = vld [vmem:[%s334 + $0x98] sm:$0xf]
      %v402 = vld [vmem:[%s334 + $0x9c] sm:$0xf]
      %v403 = vld [vmem:[%s334 + $0xa0] sm:$0xf]
      %v404 = vld [vmem:[%s334 + $0xa4] sm:$0xf]
      %v405 = vld [vmem:[%s334 + $0xa8] sm:$0xf]
      %v406 = vld [vmem:[%s334 + $0xac] sm:$0xf]
      %v407 = vld [vmem:[%s334 + $0xb0] sm:$0xf]
      %v408 = vld [vmem:[%s334 + $0xb4] sm:$0xf]
      %v409 = vld [vmem:[%s334 + $0xb8] sm:$0xf]
      %v410 = vld [vmem:[%s334 + $0xbc] sm:$0xf]
      %v411 = vpack.c.bf16 %v361, %v361
      %v416 = vunpack.c.l.b16 %v363
      %v417 = vunpack.c.l.b16 %v364
      %v418 = vunpack.c.l.b16 %v365
      %v419 = vunpack.c.l.b16 %v366
      %v420 = vpack.c.b16 %v417, %v416
      %v421 = vpack.c.b16 %v419, %v418
      %vm424 = vcmask 261120
      %v426 = vsel %vm424, %v411, 0
      %428 = vmatprep.subr.bf16.mxu0 0
      %429 = vmatpush1.bf16.msra.mxu0 %v420
      %430 = vmatprep.subr.bf16.mxu0 0
      %431 = vmatpush1.bf16.msra.mxu0 %v421
      %432 = vmatprep.subr.bf16.mxu0 0
      %433 = vmatpush1.bf16.msra.mxu0 0
      %434 = vmatprep.subr.bf16.mxu0 0
      %435 = vmatpush1.bf16.msra.mxu0 0
      %436 = vmatprep.subr.bf16.mxu0 0
      %437 = vmatpush1.bf16.msra.mxu0 0
      %438 = vmatprep.subr.bf16.mxu0 0
      %439 = vmatpush1.bf16.msra.mxu0 0
      %440 = vmatprep.subr.bf16.mxu0 0
      %441 = vmatpush1.bf16.msra.mxu0 0
      %442 = vmatprep.subr.bf16.mxu0 0
      %443 = vmatpush1.bf16.msra.mxu0 0
      %444 = vmatprep.subr.bf16.mxu0 0
      %445 = vmatpush1.bf16.msra.mxu0 0
      %446 = vmatprep.subr.bf16.mxu0 0
      %447 = vmatpush1.bf16.msra.mxu0 0
      %448 = vmatprep.subr.bf16.mxu0 0
      %449 = vmatpush1.bf16.msra.mxu0 0
      %450 = vmatprep.subr.bf16.mxu0 0
      %451 = vmatpush1.bf16.msra.mxu0 0
      %452 = vmatprep.subr.bf16.mxu0 0
      %453 = vmatpush1.bf16.msra.mxu0 0
      %454 = vmatprep.subr.bf16.mxu0 0
      %455 = vmatpush1.bf16.msra.mxu0 0
      %456 = vmatprep.subr.bf16.mxu0 0
      %457 = vmatpush1.bf16.msra.mxu0 0
      %458 = vmatprep.subr.bf16.mxu0 0
      %459 = vmatpush1.bf16.msra.mxu0 0
      %460 = vmatprep.mubr.bf16.mxu0 0
      %461 = vmatmul.mubr.bf16.gmra.mrb[0].mxu0 %v426
      %v462 = vpop.f32.mrb[0].mxu0
      %v463 = vadd.f32 0.0, %v462
      %v464 = vpop.f32.mrb[0].mxu0
      %v465 = vpop.f32.mrb[0].mxu0
      %v466 = vpop.f32.mrb[0].mxu0
      %467 = vdwg.mxu0
      %v472 = vunpack.c.l.b16 %v367
      %v473 = vunpack.c.l.b16 %v368
      %v474 = vunpack.c.l.b16 %v369
      %v475 = vunpack.c.l.b16 %v370
      %v476 = vpack.c.b16 %v473, %v472
      %v477 = vpack.c.b16 %v475, %v474
      %480 = vmatprep.subr.bf16.mxu0 0
      %481 = vmatpush1.bf16.msra.mxu0 %v476
      %482 = vmatprep.subr.bf16.mxu0 0
      %483 = vmatpush1.bf16.msra.mxu0 %v477
      %484 = vmatprep.subr.bf16.mxu0 0
      %485 = vmatpush1.bf16.msra.mxu0 0
      %486 = vmatprep.subr.bf16.mxu0 0
      %487 = vmatpush1.bf16.msra.mxu0 0
      %488 = vmatprep.subr.bf16.mxu0 0
      %489 = vmatpush1.bf16.msra.mxu0 0
      %490 = vmatprep.subr.bf16.mxu0 0
      %491 = vmatpush1.bf16.msra.mxu0 0
      %492 = vmatprep.subr.bf16.mxu0 0
      %493 = vmatpush1.bf16.msra.mxu0 0
      %494 = vmatprep.subr.bf16.mxu0 0
      %495 = vmatpush1.bf16.msra.mxu0 0
      %496 = vmatprep.subr.bf16.mxu0 0
      %497 = vmatpush1.bf16.msra.mxu0 0
      %498 = vmatprep.subr.bf16.mxu0 0
      %499 = vmatpush1.bf16.msra.mxu0 0
      %500 = vmatprep.subr.bf16.mxu0 0
      %501 = vmatpush1.bf16.msra.mxu0 0
      %502 = vmatprep.subr.bf16.mxu0 0
      %503 = vmatpush1.bf16.msra.mxu0 0
      %504 = vmatprep.subr.bf16.mxu0 0
      %505 = vmatpush1.bf16.msra.mxu0 0
      %506 = vmatprep.subr.bf16.mxu0 0
      %507 = vmatpush1.bf16.msra.mxu0 0
      %508 = vmatprep.subr.bf16.mxu0 0
      %509 = vmatpush1.bf16.msra.mxu0 0
      %510 = vmatprep.subr.bf16.mxu0 0
      %511 = vmatpush1.bf16.msra.mxu0 0
      %512 = vmatprep.mubr.bf16.mxu0 0
      %513 = vmatmul.mubr.bf16.gmra.mrb[0].mxu0 %v426
      %v514 = vpop.f32.mrb[0].mxu0
      %v515 = vadd.f32 0.0, %v514
      %v516 = vpop.f32.mrb[0].mxu0
      %v517 = vpop.f32.mrb[0].mxu0
      %v518 = vpop.f32.mrb[0].mxu0
      %519 = vdwg.mxu0
      %v524 = vunpack.c.l.b16 %v371
      %v525 = vunpack.c.l.b16 %v372
      %v526 = vunpack.c.l.b16 %v373
      %v527 = vunpack.c.l.b16 %v374
      %v528 = vpack.c.b16 %v525, %v524
      %v529 = vpack.c.b16 %v527, %v526
      %532 = vmatprep.subr.bf16.mxu0 0
      %533 = vmatpush1.bf16.msra.mxu0 %v528
      %534 = vmatprep.subr.bf16.mxu0 0
      %535 = vmatpush1.bf16.msra.mxu0 %v529
      %536 = vmatprep.subr.bf16.mxu0 0
      %537 = vmatpush1.bf16.msra.mxu0 0
      %538 = vmatprep.subr.bf16.mxu0 0
      %539 = vmatpush1.bf16.msra.mxu0 0
      %540 = vmatprep.subr.bf16.mxu0 0
      %541 = vmatpush1.bf16.msra.mxu0 0
      %542 = vmatprep.subr.bf16.mxu0 0
      %543 = vmatpush1.bf16.msra.mxu0 0
      %544 = vmatprep.subr.bf16.mxu0 0
      %545 = vmatpush1.bf16.msra.mxu0 0
      %546 = vmatprep.subr.bf16.mxu0 0
      %547 = vmatpush1.bf16.msra.mxu0 0
      %548 = vmatprep.subr.bf16.mxu0 0
      %549 = vmatpush1.bf16.msra.mxu0 0
      %550 = vmatprep.subr.bf16.mxu0 0
      %551 = vmatpush1.bf16.msra.mxu0 0
      %552 = vmatprep.subr.bf16.mxu0 0
      %553 = vmatpush1.bf16.msra.mxu0 0
      %554 = vmatprep.subr.bf16.mxu0 0
      %555 = vmatpush1.bf16.msra.mxu0 0
      %556 = vmatprep.subr.bf16.mxu0 0
      %557 = vmatpush1.bf16.msra.mxu0 0
      %558 = vmatprep.subr.bf16.mxu0 0
      %559 = vmatpush1.bf16.msra.mxu0 0
      %560 = vmatprep.subr.bf16.mxu0 0
      %561 = vmatpush1.bf16.msra.mxu0 0
      %562 = vmatprep.subr.bf16.mxu0 0
      %563 = vmatpush1.bf16.msra.mxu0 0
      %564 = vmatprep.mubr.bf16.mxu0 0
      %565 = vmatmul.mubr.bf16.gmra.mrb[0].mxu0 %v426
      %v566 = vpop.f32.mrb[0].mxu0
      %v567 = vadd.f32 0.0, %v566
      %v568 = vpop.f32.mrb[0].mxu0
      %v569 = vpop.f32.mrb[0].mxu0
      %v570 = vpop.f32.mrb[0].mxu0
      %571 = vdwg.mxu0
      %v576 = vunpack.c.l.b16 %v375
      %v577 = vunpack.c.l.b16 %v376
      %v578 = vunpack.c.l.b16 %v377
      %v579 = vunpack.c.l.b16 %v378
      %v580 = vpack.c.b16 %v577, %v576
      %v581 = vpack.c.b16 %v579, %v578
      %584 = vmatprep.subr.bf16.mxu0 0
      %585 = vmatpush1.bf16.msra.mxu0 %v580
      %586 = vmatprep.subr.bf16.mxu0 0
      %587 = vmatpush1.bf16.msra.mxu0 %v581
      %588 = vmatprep.subr.bf16.mxu0 0
      %589 = vmatpush1.bf16.msra.mxu0 0
      %590 = vmatprep.subr.bf16.mxu0 0
      %591 = vmatpush1.bf16.msra.mxu0 0
      %592 = vmatprep.subr.bf16.mxu0 0
      %593 = vmatpush1.bf16.msra.mxu0 0
      %594 = vmatprep.subr.bf16.mxu0 0
      %595 = vmatpush1.bf16.msra.mxu0 0
      %596 = vmatprep.subr.bf16.mxu0 0
      %597 = vmatpush1.bf16.msra.mxu0 0
      %598 = vmatprep.subr.bf16.mxu0 0
      %599 = vmatpush1.bf16.msra.mxu0 0
      %600 = vmatprep.subr.bf16.mxu0 0
      %601 = vmatpush1.bf16.msra.mxu0 0
      %602 = vmatprep.subr.bf16.mxu0 0
      %603 = vmatpush1.bf16.msra.mxu0 0
      %604 = vmatprep.subr.bf16.mxu0 0
      %605 = vmatpush1.bf16.msra.mxu0 0
      %606 = vmatprep.subr.bf16.mxu0 0
      %607 = vmatpush1.bf16.msra.mxu0 0
      %608 = vmatprep.subr.bf16.mxu0 0
      %609 = vmatpush1.bf16.msra.mxu0 0
      %610 = vmatprep.subr.bf16.mxu0 0
      %611 = vmatpush1.bf16.msra.mxu0 0
      %612 = vmatprep.subr.bf16.mxu0 0
      %613 = vmatpush1.bf16.msra.mxu0 0
      %614 = vmatprep.subr.bf16.mxu0 0
      %615 = vmatpush1.bf16.msra.mxu0 0
      %616 = vmatprep.mubr.bf16.mxu0 0
      %617 = vmatmul.mubr.bf16.gmra.mrb[0].mxu0 %v426
      %v618 = vpop.f32.mrb[0].mxu0
      %v619 = vadd.f32 0.0, %v618
      %v620 = vpop.f32.mrb[0].mxu0
      %v621 = vpop.f32.mrb[0].mxu0
      %v622 = vpop.f32.mrb[0].mxu0
      %623 = vdwg.mxu0
      %v628 = vunpack.c.l.b16 %v379
      %v629 = vunpack.c.l.b16 %v380
      %v630 = vunpack.c.l.b16 %v381
      %v631 = vunpack.c.l.b16 %v382
      %v632 = vpack.c.b16 %v629, %v628
      %v633 = vpack.c.b16 %v631, %v630
      %636 = vmatprep.subr.bf16.mxu0 0
      %637 = vmatpush1.bf16.msra.mxu0 %v632
      %638 = vmatprep.subr.bf16.mxu0 0
      %639 = vmatpush1.bf16.msra.mxu0 %v633
      %640 = vmatprep.subr.bf16.mxu0 0
      %641 = vmatpush1.bf16.msra.mxu0 0
      %642 = vmatprep.subr.bf16.mxu0 0
      %643 = vmatpush1.bf16.msra.mxu0 0
      %644 = vmatprep.subr.bf16.mxu0 0
      %645 = vmatpush1.bf16.msra.mxu0 0
      %646 = vmatprep.subr.bf16.mxu0 0
      %647 = vmatpush1.bf16.msra.mxu0 0
      %648 = vmatprep.subr.bf16.mxu0 0
      %649 = vmatpush1.bf16.msra.mxu0 0
      %650 = vmatprep.subr.bf16.mxu0 0
      %651 = vmatpush1.bf16.msra.mxu0 0
      %652 = vmatprep.subr.bf16.mxu0 0
      %653 = vmatpush1.bf16.msra.mxu0 0
      %654 = vmatprep.subr.bf16.mxu0 0
      %655 = vmatpush1.bf16.msra.mxu0 0
      %656 = vmatprep.subr.bf16.mxu0 0
      %657 = vmatpush1.bf16.msra.mxu0 0
      %658 = vmatprep.subr.bf16.mxu0 0
      %659 = vmatpush1.bf16.msra.mxu0 0
      %660 = vmatprep.subr.bf16.mxu0 0
      %661 = vmatpush1.bf16.msra.mxu0 0
      %662 = vmatprep.subr.bf16.mxu0 0
      %663 = vmatpush1.bf16.msra.mxu0 0
      %664 = vmatprep.subr.bf16.mxu0 0
      %665 = vmatpush1.bf16.msra.mxu0 0
      %666 = vmatprep.subr.bf16.mxu0 0
      %667 = vmatpush1.bf16.msra.mxu0 0
      %668 = vmatprep.mubr.bf16.mxu0 0
      %669 = vmatmul.mubr.bf16.gmra.mrb[0].mxu0 %v426
      %v670 = vpop.f32.mrb[0].mxu0
      %v671 = vadd.f32 0.0, %v670
      %v672 = vpop.f32.mrb[0].mxu0
      %v673 = vpop.f32.mrb[0].mxu0
      %v674 = vpop.f32.mrb[0].mxu0
      %675 = vdwg.mxu0
      %v680 = vunpack.c.l.b16 %v383
      %v681 = vunpack.c.l.b16 %v384
      %v682 = vunpack.c.l.b16 %v385
      %v683 = vunpack.c.l.b16 %v386
      %v684 = vpack.c.b16 %v681, %v680
      %v685 = vpack.c.b16 %v683, %v682
      %688 = vmatprep.subr.bf16.mxu0 0
      %689 = vmatpush1.bf16.msra.mxu0 %v684
      %690 = vmatprep.subr.bf16.mxu0 0
      %691 = vmatpush1.bf16.msra.mxu0 %v685
      %692 = vmatprep.subr.bf16.mxu0 0
      %693 = vmatpush1.bf16.msra.mxu0 0
      %694 = vmatprep.subr.bf16.mxu0 0
      %695 = vmatpush1.bf16.msra.mxu0 0
      %696 = vmatprep.subr.bf16.mxu0 0
      %697 = vmatpush1.bf16.msra.mxu0 0
      %698 = vmatprep.subr.bf16.mxu0 0
      %699 = vmatpush1.bf16.msra.mxu0 0
      %700 = vmatprep.subr.bf16.mxu0 0
      %701 = vmatpush1.bf16.msra.mxu0 0
      %702 = vmatprep.subr.bf16.mxu0 0
      %703 = vmatpush1.bf16.msra.mxu0 0
      %704 = vmatprep.subr.bf16.mxu0 0
      %705 = vmatpush1.bf16.msra.mxu0 0
      %706 = vmatprep.subr.bf16.mxu0 0
      %707 = vmatpush1.bf16.msra.mxu0 0
      %708 = vmatprep.subr.bf16.mxu0 0
      %709 = vmatpush1.bf16.msra.mxu0 0
      %710 = vmatprep.subr.bf16.mxu0 0
      %711 = vmatpush1.bf16.msra.mxu0 0
      %712 = vmatprep.subr.bf16.mxu0 0
      %713 = vmatpush1.bf16.msra.mxu0 0
      %714 = vmatprep.subr.bf16.mxu0 0
      %715 = vmatpush1.bf16.msra.mxu0 0
      %716 = vmatprep.subr.bf16.mxu0 0
      %717 = vmatpush1.bf16.msra.mxu0 0
      %718 = vmatprep.subr.bf16.mxu0 0
      %719 = vmatpush1.bf16.msra.mxu0 0
      %720 = vmatprep.mubr.bf16.mxu0 0
      %721 = vmatmul.mubr.bf16.gmra.mrb[0].mxu0 %v426
      %v722 = vpop.f32.mrb[0].mxu0
      %v723 = vadd.f32 0.0, %v722
      %v724 = vpop.f32.mrb[0].mxu0
      %v725 = vpop.f32.mrb[0].mxu0
      %v726 = vpop.f32.mrb[0].mxu0
      %727 = vdwg.mxu0
      %v732 = vunpack.c.l.b16 %v387
      %v733 = vunpack.c.l.b16 %v388
      %v734 = vunpack.c.l.b16 %v389
      %v735 = vunpack.c.l.b16 %v390
      %v736 = vpack.c.b16 %v733, %v732
      %v737 = vpack.c.b16 %v735, %v734
      %740 = vmatprep.subr.bf16.mxu0 0
      %741 = vmatpush1.bf16.msra.mxu0 %v736
      %742 = vmatprep.subr.bf16.mxu0 0
      %743 = vmatpush1.bf16.msra.mxu0 %v737
      %744 = vmatprep.subr.bf16.mxu0 0
      %745 = vmatpush1.bf16.msra.mxu0 0
      %746 = vmatprep.subr.bf16.mxu0 0
      %747 = vmatpush1.bf16.msra.mxu0 0
      %748 = vmatprep.subr.bf16.mxu0 0
      %749 = vmatpush1.bf16.msra.mxu0 0
      %750 = vmatprep.subr.bf16.mxu0 0
      %751 = vmatpush1.bf16.msra.mxu0 0
      %752 = vmatprep.subr.bf16.mxu0 0
      %753 = vmatpush1.bf16.msra.mxu0 0
      %754 = vmatprep.subr.bf16.mxu0 0
      %755 = vmatpush1.bf16.msra.mxu0 0
      %756 = vmatprep.subr.bf16.mxu0 0
      %757 = vmatpush1.bf16.msra.mxu0 0
      %758 = vmatprep.subr.bf16.mxu0 0
      %759 = vmatpush1.bf16.msra.mxu0 0
      %760 = vmatprep.subr.bf16.mxu0 0
      %761 = vmatpush1.bf16.msra.mxu0 0
      %762 = vmatprep.subr.bf16.mxu0 0
      %763 = vmatpush1.bf16.msra.mxu0 0
      %764 = vmatprep.subr.bf16.mxu0 0
      %765 = vmatpush1.bf16.msra.mxu0 0
      %766 = vmatprep.subr.bf16.mxu0 0
      %767 = vmatpush1.bf16.msra.mxu0 0
      %768 = vmatprep.subr.bf16.mxu0 0
      %769 = vmatpush1.bf16.msra.mxu0 0
      %770 = vmatprep.subr.bf16.mxu0 0
      %771 = vmatpush1.bf16.msra.mxu0 0
      %772 = vmatprep.mubr.bf16.mxu0 0
      %773 = vmatmul.mubr.bf16.gmra.mrb[0].mxu0 %v426
      %v774 = vpop.f32.mrb[0].mxu0
      %v775 = vadd.f32 0.0, %v774
      %v776 = vpop.f32.mrb[0].mxu0
      %v777 = vpop.f32.mrb[0].mxu0
      %v778 = vpop.f32.mrb[0].mxu0
      %779 = vdwg.mxu0
      %v784 = vunpack.c.l.b16 %v391
      %v785 = vunpack.c.l.b16 %v392
      %v786 = vunpack.c.l.b16 %v393
      %v787 = vunpack.c.l.b16 %v394
      %v788 = vpack.c.b16 %v785, %v784
      %v789 = vpack.c.b16 %v787, %v786
      %792 = vmatprep.subr.bf16.mxu0 0
      %793 = vmatpush1.bf16.msra.mxu0 %v788
      %794 = vmatprep.subr.bf16.mxu0 0
      %795 = vmatpush1.bf16.msra.mxu0 %v789
      %796 = vmatprep.subr.bf16.mxu0 0
      %797 = vmatpush1.bf16.msra.mxu0 0
      %798 = vmatprep.subr.bf16.mxu0 0
      %799 = vmatpush1.bf16.msra.mxu0 0
      %800 = vmatprep.subr.bf16.mxu0 0
      %801 = vmatpush1.bf16.msra.mxu0 0
      %802 = vmatprep.subr.bf16.mxu0 0
      %803 = vmatpush1.bf16.msra.mxu0 0
      %804 = vmatprep.subr.bf16.mxu0 0
      %805 = vmatpush1.bf16.msra.mxu0 0
      %806 = vmatprep.subr.bf16.mxu0 0
      %807 = vmatpush1.bf16.msra.mxu0 0
      %808 = vmatprep.subr.bf16.mxu0 0
      %809 = vmatpush1.bf16.msra.mxu0 0
      %810 = vmatprep.subr.bf16.mxu0 0
      %811 = vmatpush1.bf16.msra.mxu0 0
      %812 = vmatprep.subr.bf16.mxu0 0
      %813 = vmatpush1.bf16.msra.mxu0 0
      %814 = vmatprep.subr.bf16.mxu0 0
      %815 = vmatpush1.bf16.msra.mxu0 0
      %816 = vmatprep.subr.bf16.mxu0 0
      %817 = vmatpush1.bf16.msra.mxu0 0
      %818 = vmatprep.subr.bf16.mxu0 0
      %819 = vmatpush1.bf16.msra.mxu0 0
      %820 = vmatprep.subr.bf16.mxu0 0
      %821 = vmatpush1.bf16.msra.mxu0 0
      %822 = vmatprep.subr.bf16.mxu0 0
      %823 = vmatpush1.bf16.msra.mxu0 0
      %824 = vmatprep.mubr.bf16.mxu0 0
      %825 = vmatmul.mubr.bf16.gmra.mrb[0].mxu0 %v426
      %v826 = vpop.f32.mrb[0].mxu0
      %v827 = vadd.f32 0.0, %v826
      %v828 = vpop.f32.mrb[0].mxu0
      %v829 = vpop.f32.mrb[0].mxu0
      %v830 = vpop.f32.mrb[0].mxu0
      %831 = vdwg.mxu0
      %v836 = vunpack.c.l.b16 %v395
      %v837 = vunpack.c.l.b16 %v396
      %v838 = vunpack.c.l.b16 %v397
      %v839 = vunpack.c.l.b16 %v398
      %v840 = vpack.c.b16 %v837, %v836
      %v841 = vpack.c.b16 %v839, %v838
      %844 = vmatprep.subr.bf16.mxu0 0
      %845 = vmatpush1.bf16.msra.mxu0 %v840
      %846 = vmatprep.subr.bf16.mxu0 0
      %847 = vmatpush1.bf16.msra.mxu0 %v841
      %848 = vmatprep.subr.bf16.mxu0 0
      %849 = vmatpush1.bf16.msra.mxu0 0
      %850 = vmatprep.subr.bf16.mxu0 0
      %851 = vmatpush1.bf16.msra.mxu0 0
      %852 = vmatprep.subr.bf16.mxu0 0
      %853 = vmatpush1.bf16.msra.mxu0 0
      %854 = vmatprep.subr.bf16.mxu0 0
      %855 = vmatpush1.bf16.msra.mxu0 0
      %856 = vmatprep.subr.bf16.mxu0 0
      %857 = vmatpush1.bf16.msra.mxu0 0
      %858 = vmatprep.subr.bf16.mxu0 0
      %859 = vmatpush1.bf16.msra.mxu0 0
      %860 = vmatprep.subr.bf16.mxu0 0
      %861 = vmatpush1.bf16.msra.mxu0 0
      %862 = vmatprep.subr.bf16.mxu0 0
      %863 = vmatpush1.bf16.msra.mxu0 0
      %864 = vmatprep.subr.bf16.mxu0 0
      %865 = vmatpush1.bf16.msra.mxu0 0
      %866 = vmatprep.subr.bf16.mxu0 0
      %867 = vmatpush1.bf16.msra.mxu0 0
      %868 = vmatprep.subr.bf16.mxu0 0
      %869 = vmatpush1.bf16.msra.mxu0 0
      %870 = vmatprep.subr.bf16.mxu0 0
      %871 = vmatpush1.bf16.msra.mxu0 0
      %872 = vmatprep.subr.bf16.mxu0 0
      %873 = vmatpush1.bf16.msra.mxu0 0
      %874 = vmatprep.subr.bf16.mxu0 0
      %875 = vmatpush1.bf16.msra.mxu0 0
      %876 = vmatprep.mubr.bf16.mxu0 0
      %877 = vmatmul.mubr.bf16.gmra.mrb[0].mxu0 %v426
      %v878 = vpop.f32.mrb[0].mxu0
      %v879 = vadd.f32 0.0, %v878
      %v880 = vpop.f32.mrb[0].mxu0
      %v881 = vpop.f32.mrb[0].mxu0
      %v882 = vpop.f32.mrb[0].mxu0
      %883 = vdwg.mxu0
      %v888 = vunpack.c.l.b16 %v399
      %v889 = vunpack.c.l.b16 %v400
      %v890 = vunpack.c.l.b16 %v401
      %v891 = vunpack.c.l.b16 %v402
      %v892 = vpack.c.b16 %v889, %v888
      %v893 = vpack.c.b16 %v891, %v890
      %896 = vmatprep.subr.bf16.mxu0 0
      %897 = vmatpush1.bf16.msra.mxu0 %v892
      %898 = vmatprep.subr.bf16.mxu0 0
      %899 = vmatpush1.bf16.msra.mxu0 %v893
      %900 = vmatprep.subr.bf16.mxu0 0
      %901 = vmatpush1.bf16.msra.mxu0 0
      %902 = vmatprep.subr.bf16.mxu0 0
      %903 = vmatpush1.bf16.msra.mxu0 0
      %904 = vmatprep.subr.bf16.mxu0 0
      %905 = vmatpush1.bf16.msra.mxu0 0
      %906 = vmatprep.subr.bf16.mxu0 0
      %907 = vmatpush1.bf16.msra.mxu0 0
      %908 = vmatprep.subr.bf16.mxu0 0
      %909 = vmatpush1.bf16.msra.mxu0 0
      %910 = vmatprep.subr.bf16.mxu0 0
      %911 = vmatpush1.bf16.msra.mxu0 0
      %912 = vmatprep.subr.bf16.mxu0 0
      %913 = vmatpush1.bf16.msra.mxu0 0
      %914 = vmatprep.subr.bf16.mxu0 0
      %915 = vmatpush1.bf16.msra.mxu0 0
      %916 = vmatprep.subr.bf16.mxu0 0
      %917 = vmatpush1.bf16.msra.mxu0 0
      %918 = vmatprep.subr.bf16.mxu0 0
      %919 = vmatpush1.bf16.msra.mxu0 0
      %920 = vmatprep.subr.bf16.mxu0 0
      %921 = vmatpush1.bf16.msra.mxu0 0
      %922 = vmatprep.subr.bf16.mxu0 0
      %923 = vmatpush1.bf16.msra.mxu0 0
      %924 = vmatprep.subr.bf16.mxu0 0
      %925 = vmatpush1.bf16.msra.mxu0 0
      %926 = vmatprep.subr.bf16.mxu0 0
      %927 = vmatpush1.bf16.msra.mxu0 0
      %928 = vmatprep.mubr.bf16.mxu0 0
      %929 = vmatmul.mubr.bf16.gmra.mrb[0].mxu0 %v426
      %v930 = vpop.f32.mrb[0].mxu0
      %v931 = vadd.f32 0.0, %v930
      %v932 = vpop.f32.mrb[0].mxu0
      %v933 = vpop.f32.mrb[0].mxu0
      %v934 = vpop.f32.mrb[0].mxu0
      %935 = vdwg.mxu0
      %v940 = vunpack.c.l.b16 %v403
      %v941 = vunpack.c.l.b16 %v404
      %v942 = vunpack.c.l.b16 %v405
      %v943 = vunpack.c.l.b16 %v406
      %v944 = vpack.c.b16 %v941, %v940
      %v945 = vpack.c.b16 %v943, %v942
      %948 = vmatprep.subr.bf16.mxu0 0
      %949 = vmatpush1.bf16.msra.mxu0 %v944
      %950 = vmatprep.subr.bf16.mxu0 0
      %951 = vmatpush1.bf16.msra.mxu0 %v945
      %952 = vmatprep.subr.bf16.mxu0 0
      %953 = vmatpush1.bf16.msra.mxu0 0
      %954 = vmatprep.subr.bf16.mxu0 0
      %955 = vmatpush1.bf16.msra.mxu0 0
      %956 = vmatprep.subr.bf16.mxu0 0
      %957 = vmatpush1.bf16.msra.mxu0 0
      %958 = vmatprep.subr.bf16.mxu0 0
      %959 = vmatpush1.bf16.msra.mxu0 0
      %960 = vmatprep.subr.bf16.mxu0 0
      %961 = vmatpush1.bf16.msra.mxu0 0
      %962 = vmatprep.subr.bf16.mxu0 0
      %963 = vmatpush1.bf16.msra.mxu0 0
      %964 = vmatprep.subr.bf16.mxu0 0
      %965 = vmatpush1.bf16.msra.mxu0 0
      %966 = vmatprep.subr.bf16.mxu0 0
      %967 = vmatpush1.bf16.msra.mxu0 0
      %968 = vmatprep.subr.bf16.mxu0 0
      %969 = vmatpush1.bf16.msra.mxu0 0
      %970 = vmatprep.subr.bf16.mxu0 0
      %971 = vmatpush1.bf16.msra.mxu0 0
      %972 = vmatprep.subr.bf16.mxu0 0
      %973 = vmatpush1.bf16.msra.mxu0 0
      %974 = vmatprep.subr.bf16.mxu0 0
      %975 = vmatpush1.bf16.msra.mxu0 0
      %976 = vmatprep.subr.bf16.mxu0 0
      %977 = vmatpush1.bf16.msra.mxu0 0
      %978 = vmatprep.subr.bf16.mxu0 0
      %979 = vmatpush1.bf16.msra.mxu0 0
      %980 = vmatprep.mubr.bf16.mxu0 0
      %981 = vmatmul.mubr.bf16.gmra.mrb[0].mxu0 %v426
      %v982 = vpop.f32.mrb[0].mxu0
      %v983 = vadd.f32 0.0, %v982
      %v984 = vpop.f32.mrb[0].mxu0
      %v985 = vpop.f32.mrb[0].mxu0
      %v986 = vpop.f32.mrb[0].mxu0
      %987 = vdwg.mxu0
      %v992 = vunpack.c.l.b16 %v407
      %v993 = vunpack.c.l.b16 %v408
      %v994 = vunpack.c.l.b16 %v409
      %v995 = vunpack.c.l.b16 %v410
      %v996 = vpack.c.b16 %v993, %v992
      %v997 = vpack.c.b16 %v995, %v994
      %1000 = vmatprep.subr.bf16.mxu0 0
      %1001 = vmatpush1.bf16.msra.mxu0 %v996
      %1002 = vmatprep.subr.bf16.mxu0 0
      %1003 = vmatpush1.bf16.msra.mxu0 %v997
      %1004 = vmatprep.subr.bf16.mxu0 0
      %1005 = vmatpush1.bf16.msra.mxu0 0
      %1006 = vmatprep.subr.bf16.mxu0 0
      %1007 = vmatpush1.bf16.msra.mxu0 0
      %1008 = vmatprep.subr.bf16.mxu0 0
      %1009 = vmatpush1.bf16.msra.mxu0 0
      %1010 = vmatprep.subr.bf16.mxu0 0
      %1011 = vmatpush1.bf16.msra.mxu0 0
      %1012 = vmatprep.subr.bf16.mxu0 0
      %1013 = vmatpush1.bf16.msra.mxu0 0
      %1014 = vmatprep.subr.bf16.mxu0 0
      %1015 = vmatpush1.bf16.msra.mxu0 0
      %1016 = vmatprep.subr.bf16.mxu0 0
      %1017 = vmatpush1.bf16.msra.mxu0 0
      %1018 = vmatprep.subr.bf16.mxu0 0
      %1019 = vmatpush1.bf16.msra.mxu0 0
      %1020 = vmatprep.subr.bf16.mxu0 0
      %1021 = vmatpush1.bf16.msra.mxu0 0
      %1022 = vmatprep.subr.bf16.mxu0 0
      %1023 = vmatpush1.bf16.msra.mxu0 0
      %1024 = vmatprep.subr.bf16.mxu0 0
      %1025 = vmatpush1.bf16.msra.mxu0 0
      %1026 = vmatprep.subr.bf16.mxu0 0
      %1027 = vmatpush1.bf16.msra.mxu0 0
      %1028 = vmatprep.subr.bf16.mxu0 0
      %1029 = vmatpush1.bf16.msra.mxu0 0
      %1030 = vmatprep.subr.bf16.mxu0 0
      %1031 = vmatpush1.bf16.msra.mxu0 0
      %1032 = vmatprep.mubr.bf16.mxu0 0
      %1033 = vmatmul.mubr.bf16.gmra.mrb[0].mxu0 %v426
      %v1034 = vpop.f32.mrb[0].mxu0
      %v1035 = vadd.f32 0.0, %v1034
      %v1036 = vpop.f32.mrb[0].mxu0
      %v1037 = vpop.f32.mrb[0].mxu0
      %v1038 = vpop.f32.mrb[0].mxu0
      %1039 = vdwg.mxu0
      %v1040 = vld [vmem:[%s329] sm:$0xff]
      %v1041 = vld [vmem:[%s339] sm:$0xf]
      %v1042 = vld [vmem:[%s339 + $0x4] sm:$0xf]
      %v1043 = vld [vmem:[%s339 + $0x8] sm:$0xf]
      %v1044 = vld [vmem:[%s339 + $0xc] sm:$0xf]
      %v1045 = vpack.c.bf16 %v463, %v463
      %v1046 = vpack.c.bf16 %v515, %v515
      %v1047 = vpack.c.bf16 %v567, %v567
      %v1048 = vpack.c.bf16 %v619, %v619
      %v1049 = vpack.c.bf16 %v671, %v671
      %v1050 = vpack.c.bf16 %v723, %v723
      %v1051 = vpack.c.bf16 %v775, %v775
      %v1052 = vpack.c.bf16 %v827, %v827
      %vm1053 = vcmask 64512
      %v1055 = vsel %vm1053, %v1045, 0
      %v1058 = vsel %vm1053, %v1049, 0
      %1060 = vmatprep.subr.bf16.mxu0 0
      %1061 = vmatpush1.bf16.xpose.msra.mxu0 %v1058
      %1062 = vmatprep.subr.bf16.mxu0 0
      %1063 = vmatpush1.bf16.xpose.msra.mxu0 0
      %1064 = vmatprep.subr.bf16.mxu0 0
      %1065 = vmatpush1.bf16.xpose.msra.mxu0 0
      %1066 = vmatprep.subr.bf16.mxu0 0
      %1067 = vmatpush1.bf16.xpose.msra.mxu0 0
      %1068 = vmatprep.subr.bf16.mxu0 0
      %1069 = vmatpush1.bf16.xpose.msra.mxu0 0
      %1070 = vmatprep.subr.bf16.mxu0 0
      %1071 = vmatpush1.bf16.xpose.msra.mxu0 0
      %1072 = vmatprep.subr.bf16.mxu0 0
      %1073 = vmatpush1.bf16.xpose.msra.mxu0 0
      %1074 = vmatprep.subr.bf16.mxu0 0
      %1075 = vmatpush1.bf16.xpose.msra.mxu0 0
      %1076 = vmatprep.subr.bf16.mxu0 0
      %1077 = vmatpush1.bf16.xpose.msra.mxu0 0
      %1078 = vmatprep.subr.bf16.mxu0 0
      %1079 = vmatpush1.bf16.xpose.msra.mxu0 0
      %1080 = vmatprep.subr.bf16.mxu0 0
      %1081 = vmatpush1.bf16.xpose.msra.mxu0 0
      %1082 = vmatprep.subr.bf16.mxu0 0
      %1083 = vmatpush1.bf16.xpose.msra.mxu0 0
      %1084 = vmatprep.subr.bf16.mxu0 0
      %1085 = vmatpush1.bf16.xpose.msra.mxu0 0
      %1086 = vmatprep.subr.bf16.mxu0 0
      %1087 = vmatpush1.bf16.xpose.msra.mxu0 0
      %1088 = vmatprep.subr.bf16.mxu0 0
      %1089 = vmatpush1.bf16.xpose.msra.mxu0 0
      %1090 = vmatprep.subr.bf16.mxu0 0
      %1091 = vmatpush1.bf16.xpose.msra.mxu0 0
      %1092 = vmatprep.mubr.bf16.mxu0 0
      %1093 = vmatmul.mubr.bf16.gmra.mrb[0].mxu0 %v1055
      %v1094 = vpop.f32.mrb[0].mxu0
      %v1095 = vadd.f32 0.0, %v1094
      %v1096 = vpop.f32.mrb[0].mxu0
      %v1097 = vpop.f32.mrb[0].mxu0
      %v1098 = vpop.f32.mrb[0].mxu0
      %1099 = vdwg.mxu0
      %v1101 = vsel %vm1053, %v1046, 0
      %v1104 = vsel %vm1053, %v1050, 0
      %1106 = vmatprep.subr.bf16.mxu0 0
      %1107 = vmatpush1.bf16.xpose.msra.mxu0 %v1104
      %1108 = vmatprep.subr.bf16.mxu0 0
      %1109 = vmatpush1.bf16.xpose.msra.mxu0 0
      %1110 = vmatprep.subr.bf16.mxu0 0
      %1111 = vmatpush1.bf16.xpose.msra.mxu0 0
      %1112 = vmatprep.subr.bf16.mxu0 0
      %1113 = vmatpush1.bf16.xpose.msra.mxu0 0
      %1114 = vmatprep.subr.bf16.mxu0 0
      %1115 = vmatpush1.bf16.xpose.msra.mxu0 0
      %1116 = vmatprep.subr.bf16.mxu0 0
      %1117 = vmatpush1.bf16.xpose.msra.mxu0 0
      %1118 = vmatprep.subr.bf16.mxu0 0
      %1119 = vmatpush1.bf16.xpose.msra.mxu0 0
      %1120 = vmatprep.subr.bf16.mxu0 0
      %1121 = vmatpush1.bf16.xpose.msra.mxu0 0
      %1122 = vmatprep.subr.bf16.mxu0 0
      %1123 = vmatpush1.bf16.xpose.msra.mxu0 0
      %1124 = vmatprep.subr.bf16.mxu0 0
      %1125 = vmatpush1.bf16.xpose.msra.mxu0 0
      %1126 = vmatprep.subr.bf16.mxu0 0
      %1127 = vmatpush1.bf16.xpose.msra.mxu0 0
      %1128 = vmatprep.subr.bf16.mxu0 0
      %1129 = vmatpush1.bf16.xpose.msra.mxu0 0
      %1130 = vmatprep.subr.bf16.mxu0 0
      %1131 = vmatpush1.bf16.xpose.msra.mxu0 0
      %1132 = vmatprep.subr.bf16.mxu0 0
      %1133 = vmatpush1.bf16.xpose.msra.mxu0 0
      %1134 = vmatprep.subr.bf16.mxu0 0
      %1135 = vmatpush1.bf16.xpose.msra.mxu0 0
      %1136 = vmatprep.subr.bf16.mxu0 0
      %1137 = vmatpush1.bf16.xpose.msra.mxu0 0
      %1138 = vmatprep.mubr.bf16.mxu0 0
      %1139 = vmatmul.mubr.bf16.gmra.mrb[0].mxu0 %v1101
      %v1140 = vpop.f32.mrb[0].mxu0
      %v1141 = vadd.f32 0.0, %v1140
      %v1142 = vpop.f32.mrb[0].mxu0
      %v1143 = vpop.f32.mrb[0].mxu0
      %v1144 = vpop.f32.mrb[0].mxu0
      %1145 = vdwg.mxu0
      %v1147 = vsel %vm1053, %v1047, 0
      %v1150 = vsel %vm1053, %v1051, 0
      %1152 = vmatprep.subr.bf16.mxu0 0
      %1153 = vmatpush1.bf16.xpose.msra.mxu0 %v1150
      %1154 = vmatprep.subr.bf16.mxu0 0
      %1155 = vmatpush1.bf16.xpose.msra.mxu0 0
      %1156 = vmatprep.subr.bf16.mxu0 0
      %1157 = vmatpush1.bf16.xpose.msra.mxu0 0
      %1158 = vmatprep.subr.bf16.mxu0 0
      %1159 = vmatpush1.bf16.xpose.msra.mxu0 0
      %1160 = vmatprep.subr.bf16.mxu0 0
      %1161 = vmatpush1.bf16.xpose.msra.mxu0 0
      %1162 = vmatprep.subr.bf16.mxu0 0
      %1163 = vmatpush1.bf16.xpose.msra.mxu0 0
      %1164 = vmatprep.subr.bf16.mxu0 0
      %1165 = vmatpush1.bf16.xpose.msra.mxu0 0
      %1166 = vmatprep.subr.bf16.mxu0 0
      %1167 = vmatpush1.bf16.xpose.msra.mxu0 0
      %1168 = vmatprep.subr.bf16.mxu0 0
      %1169 = vmatpush1.bf16.xpose.msra.mxu0 0
      %1170 = vmatprep.subr.bf16.mxu0 0
      %1171 = vmatpush1.bf16.xpose.msra.mxu0 0
      %1172 = vmatprep.subr.bf16.mxu0 0
      %1173 = vmatpush1.bf16.xpose.msra.mxu0 0
      %1174 = vmatprep.subr.bf16.mxu0 0
      %1175 = vmatpush1.bf16.xpose.msra.mxu0 0
      %1176 = vmatprep.subr.bf16.mxu0 0
      %1177 = vmatpush1.bf16.xpose.msra.mxu0 0
      %1178 = vmatprep.subr.bf16.mxu0 0
      %1179 = vmatpush1.bf16.xpose.msra.mxu0 0
      %1180 = vmatprep.subr.bf16.mxu0 0
      %1181 = vmatpush1.bf16.xpose.msra.mxu0 0
      %1182 = vmatprep.subr.bf16.mxu0 0
      %1183 = vmatpush1.bf16.xpose.msra.mxu0 0
      %1184 = vmatprep.mubr.bf16.mxu0 0
      %1185 = vmatmul.mubr.bf16.gmra.mrb[0].mxu0 %v1147
      %v1186 = vpop.f32.mrb[0].mxu0
      %v1187 = vadd.f32 0.0, %v1186
      %v1188 = vpop.f32.mrb[0].mxu0
      %v1189 = vpop.f32.mrb[0].mxu0
      %v1190 = vpop.f32.mrb[0].mxu0
      %1191 = vdwg.mxu0
      %v1193 = vsel %vm1053, %v1048, 0
      %v1196 = vsel %vm1053, %v1052, 0
      %1198 = vmatprep.subr.bf16.mxu0 0
      %1199 = vmatpush1.bf16.xpose.msra.mxu0 %v1196
      %1200 = vmatprep.subr.bf16.mxu0 0
      %1201 = vmatpush1.bf16.xpose.msra.mxu0 0
      %1202 = vmatprep.subr.bf16.mxu0 0
      %1203 = vmatpush1.bf16.xpose.msra.mxu0 0
      %1204 = vmatprep.subr.bf16.mxu0 0
      %1205 = vmatpush1.bf16.xpose.msra.mxu0 0
      %1206 = vmatprep.subr.bf16.mxu0 0
      %1207 = vmatpush1.bf16.xpose.msra.mxu0 0
      %1208 = vmatprep.subr.bf16.mxu0 0
      %1209 = vmatpush1.bf16.xpose.msra.mxu0 0
      %1210 = vmatprep.subr.bf16.mxu0 0
      %1211 = vmatpush1.bf16.xpose.msra.mxu0 0
      %1212 = vmatprep.subr.bf16.mxu0 0
      %1213 = vmatpush1.bf16.xpose.msra.mxu0 0
      %1214 = vmatprep.subr.bf16.mxu0 0
      %1215 = vmatpush1.bf16.xpose.msra.mxu0 0
      %1216 = vmatprep.subr.bf16.mxu0 0
      %1217 = vmatpush1.bf16.xpose.msra.mxu0 0
      %1218 = vmatprep.subr.bf16.mxu0 0
      %1219 = vmatpush1.bf16.xpose.msra.mxu0 0
      %1220 = vmatprep.subr.bf16.mxu0 0
      %1221 = vmatpush1.bf16.xpose.msra.mxu0 0
      %1222 = vmatprep.subr.bf16.mxu0 0
      %1223 = vmatpush1.bf16.xpose.msra.mxu0 0
      %1224 = vmatprep.subr.bf16.mxu0 0
      %1225 = vmatpush1.bf16.xpose.msra.mxu0 0
      %1226 = vmatprep.subr.bf16.mxu0 0
      %1227 = vmatpush1.bf16.xpose.msra.mxu0 0
      %1228 = vmatprep.subr.bf16.mxu0 0
      %1229 = vmatpush1.bf16.xpose.msra.mxu0 0
      %1230 = vmatprep.mubr.bf16.mxu0 0
      %1231 = vmatmul.mubr.bf16.gmra.mrb[0].mxu0 %v1193
      %v1232 = vpop.f32.mrb[0].mxu0
      %v1233 = vadd.f32 0.0, %v1232
      %v1234 = vpop.f32.mrb[0].mxu0
      %v1235 = vpop.f32.mrb[0].mxu0
      %v1236 = vpop.f32.mrb[0].mxu0
      %1237 = vdwg.mxu0
      %v1238 = vmul.f32 %v1095, 0.35355338
      %v1239 = vmul.f32 %v1141, 0.35355338
      %v1240 = vmul.f32 %v1187, 0.35355338
      %v1241 = vmul.f32 %v1233, 0.35355338
      %v1242 = vadd.f32 %v1238, %v1040
      %v1243 = vadd.f32 %v1239, %v1040
      %v1244 = vadd.f32 %v1240, %v1040
      %v1245 = vadd.f32 %v1241, %v1040
      %v1246 = vsel %vm1053, %v1242, -inf
      %1247 = vmax.xlane.f32.xlu0 %v1246
      %v1248 = vpop.xlane.xlu0 %1247
      %v1249 = vsel %vm1053, %v1243, -inf
      %1250 = vmax.xlane.f32.xlu0 %v1249
      %v1251 = vpop.xlane.xlu0 %1250
      %v1252 = vsel %vm1053, %v1244, -inf
      %1253 = vmax.xlane.f32.xlu0 %v1252
      %v1254 = vpop.xlane.xlu0 %1253
      %v1255 = vsel %vm1053, %v1245, -inf
      %1256 = vmax.xlane.f32.xlu0 %v1255
      %v1257 = vpop.xlane.xlu0 %1256
      %v1258 = vsub.f32 %v1242, %v1248
      %v1259 = vsub.f32 %v1243, %v1251
      %v1260 = vsub.f32 %v1244, %v1254
      %v1261 = vsub.f32 %v1245, %v1257
      %v1262 = vmul.f32 %v1258, 1.442695
      %v1263 = vpow.pop %v1262
      %v1264 = vmul.f32 %v1259, 1.442695
      %v1265 = vpow.pop %v1264
      %v1266 = vmul.f32 %v1260, 1.442695
      %v1267 = vpow.pop %v1266
      %v1268 = vmul.f32 %v1261, 1.442695
      %v1269 = vpow.pop %v1268
      %v1270 = vsel %vm1053, %v1263, 0.0
      %1271 = vadd.xlane.f32.xlu0 %v1270
      %v1272 = vpop.xlane.xlu0 %1271
      %v1273 = vsel %vm1053, %v1265, 0.0
      %1274 = vadd.xlane.f32.xlu0 %v1273
      %v1275 = vpop.xlane.xlu0 %1274
      %v1276 = vsel %vm1053, %v1267, 0.0
      %1277 = vadd.xlane.f32.xlu0 %v1276
      %v1278 = vpop.xlane.xlu0 %1277
      %v1279 = vsel %vm1053, %v1269, 0.0
      %1280 = vadd.xlane.f32.xlu0 %v1279
      %v1281 = vpop.xlane.xlu0 %1280
      %v1282 = vrcp.pop %v1272
      %v1283 = vrcp.pop %v1275
      %v1284 = vrcp.pop %v1278
      %v1285 = vrcp.pop %v1281
      %v1286 = vmul.f32 %v1263, %v1282
      %v1287 = vmul.f32 %v1265, %v1283
      %v1288 = vmul.f32 %v1267, %v1284
      %v1289 = vmul.f32 %v1269, %v1285
      %v1290 = vpack.c.bf16 %v1286, %v1286
      %v1291 = vpack.c.bf16 %v1287, %v1287
      %v1292 = vpack.c.bf16 %v1288, %v1288
      %v1293 = vpack.c.bf16 %v1289, %v1289
      %v1294 = vpack.c.bf16 %v879, %v879
      %v1295 = vpack.c.bf16 %v931, %v931
      %v1296 = vpack.c.bf16 %v983, %v983
      %v1297 = vpack.c.bf16 %v1035, %v1035
      %v1299 = vsel %vm1053, %v1290, 0
      %vm1301 = vcmask 1043456
      %v1303 = vsel %vm1301, %v1294, 0
      %1305 = vmatprep.subr.bf16.mxu0 0
      %1306 = vmatpush1.bf16.msra.mxu0 %v1303
      %1307 = vmatprep.subr.bf16.mxu0 0
      %1308 = vmatpush1.bf16.msra.mxu0 0
      %1309 = vmatprep.subr.bf16.mxu0 0
      %1310 = vmatpush1.bf16.msra.mxu0 0
      %1311 = vmatprep.subr.bf16.mxu0 0
      %1312 = vmatpush1.bf16.msra.mxu0 0
      %1313 = vmatprep.subr.bf16.mxu0 0
      %1314 = vmatpush1.bf16.msra.mxu0 0
      %1315 = vmatprep.subr.bf16.mxu0 0
      %1316 = vmatpush1.bf16.msra.mxu0 0
      %1317 = vmatprep.subr.bf16.mxu0 0
      %1318 = vmatpush1.bf16.msra.mxu0 0
      %1319 = vmatprep.subr.bf16.mxu0 0
      %1320 = vmatpush1.bf16.msra.mxu0 0
      %1321 = vmatprep.subr.bf16.mxu0 0
      %1322 = vmatpush1.bf16.msra.mxu0 0
      %1323 = vmatprep.subr.bf16.mxu0 0
      %1324 = vmatpush1.bf16.msra.mxu0 0
      %1325 = vmatprep.subr.bf16.mxu0 0
      %1326 = vmatpush1.bf16.msra.mxu0 0
      %1327 = vmatprep.subr.bf16.mxu0 0
      %1328 = vmatpush1.bf16.msra.mxu0 0
      %1329 = vmatprep.subr.bf16.mxu0 0
      %1330 = vmatpush1.bf16.msra.mxu0 0
      %1331 = vmatprep.subr.bf16.mxu0 0
      %1332 = vmatpush1.bf16.msra.mxu0 0
      %1333 = vmatprep.subr.bf16.mxu0 0
      %1334 = vmatpush1.bf16.msra.mxu0 0
      %1335 = vmatprep.subr.bf16.mxu0 0
      %1336 = vmatpush1.bf16.msra.mxu0 0
      %1337 = vmatprep.mubr.bf16.mxu0 0
      %1338 = vmatmul.mubr.bf16.gmra.mrb[0].mxu0 %v1299
      %v1339 = vpop.f32.mrb[0].mxu0
      %v1340 = vadd.f32 0.0, %v1339
      %v1341 = vpop.f32.mrb[0].mxu0
      %v1342 = vpop.f32.mrb[0].mxu0
      %v1343 = vpop.f32.mrb[0].mxu0
      %1344 = vdwg.mxu0
      %v1346 = vsel %vm1053, %v1291, 0
      %v1349 = vsel %vm1301, %v1295, 0
      %1351 = vmatprep.subr.bf16.mxu0 0
      %1352 = vmatpush1.bf16.msra.mxu0 %v1349
      %1353 = vmatprep.subr.bf16.mxu0 0
      %1354 = vmatpush1.bf16.msra.mxu0 0
      %1355 = vmatprep.subr.bf16.mxu0 0
      %1356 = vmatpush1.bf16.msra.mxu0 0
      %1357 = vmatprep.subr.bf16.mxu0 0
      %1358 = vmatpush1.bf16.msra.mxu0 0
      %1359 = vmatprep.subr.bf16.mxu0 0
      %1360 = vmatpush1.bf16.msra.mxu0 0
      %1361 = vmatprep.subr.bf16.mxu0 0
      %1362 = vmatpush1.bf16.msra.mxu0 0
      %1363 = vmatprep.subr.bf16.mxu0 0
      %1364 = vmatpush1.bf16.msra.mxu0 0
      %1365 = vmatprep.subr.bf16.mxu0 0
      %1366 = vmatpush1.bf16.msra.mxu0 0
      %1367 = vmatprep.subr.bf16.mxu0 0
      %1368 = vmatpush1.bf16.msra.mxu0 0
      %1369 = vmatprep.subr.bf16.mxu0 0
      %1370 = vmatpush1.bf16.msra.mxu0 0
      %1371 = vmatprep.subr.bf16.mxu0 0
      %1372 = vmatpush1.bf16.msra.mxu0 0
      %1373 = vmatprep.subr.bf16.mxu0 0
      %1374 = vmatpush1.bf16.msra.mxu0 0
      %1375 = vmatprep.subr.bf16.mxu0 0
      %1376 = vmatpush1.bf16.msra.mxu0 0
      %1377 = vmatprep.subr.bf16.mxu0 0
      %1378 = vmatpush1.bf16.msra.mxu0 0
      %1379 = vmatprep.subr.bf16.mxu0 0
      %1380 = vmatpush1.bf16.msra.mxu0 0
      %1381 = vmatprep.subr.bf16.mxu0 0
      %1382 = vmatpush1.bf16.msra.mxu0 0
      %1383 = vmatprep.mubr.bf16.mxu0 0
      %1384 = vmatmul.mubr.bf16.gmra.mrb[0].mxu0 %v1346
      %v1385 = vpop.f32.mrb[0].mxu0
      %v1386 = vadd.f32 0.0, %v1385
      %v1387 = vpop.f32.mrb[0].mxu0
      %v1388 = vpop.f32.mrb[0].mxu0
      %v1389 = vpop.f32.mrb[0].mxu0
      %1390 = vdwg.mxu0
      %v1392 = vsel %vm1053, %v1292, 0
      %v1395 = vsel %vm1301, %v1296, 0
      %1397 = vmatprep.subr.bf16.mxu0 0
      %1398 = vmatpush1.bf16.msra.mxu0 %v1395
      %1399 = vmatprep.subr.bf16.mxu0 0
      %1400 = vmatpush1.bf16.msra.mxu0 0
      %1401 = vmatprep.subr.bf16.mxu0 0
      %1402 = vmatpush1.bf16.msra.mxu0 0
      %1403 = vmatprep.subr.bf16.mxu0 0
      %1404 = vmatpush1.bf16.msra.mxu0 0
      %1405 = vmatprep.subr.bf16.mxu0 0
      %1406 = vmatpush1.bf16.msra.mxu0 0
      %1407 = vmatprep.subr.bf16.mxu0 0
      %1408 = vmatpush1.bf16.msra.mxu0 0
      %1409 = vmatprep.subr.bf16.mxu0 0
      %1410 = vmatpush1.bf16.msra.mxu0 0
      %1411 = vmatprep.subr.bf16.mxu0 0
      %1412 = vmatpush1.bf16.msra.mxu0 0
      %1413 = vmatprep.subr.bf16.mxu0 0
      %1414 = vmatpush1.bf16.msra.mxu0 0
      %1415 = vmatprep.subr.bf16.mxu0 0
      %1416 = vmatpush1.bf16.msra.mxu0 0
      %1417 = vmatprep.subr.bf16.mxu0 0
      %1418 = vmatpush1.bf16.msra.mxu0 0
      %1419 = vmatprep.subr.bf16.mxu0 0
      %1420 = vmatpush1.bf16.msra.mxu0 0
      %1421 = vmatprep.subr.bf16.mxu0 0
      %1422 = vmatpush1.bf16.msra.mxu0 0
      %1423 = vmatprep.subr.bf16.mxu0 0
      %1424 = vmatpush1.bf16.msra.mxu0 0
      %1425 = vmatprep.subr.bf16.mxu0 0
      %1426 = vmatpush1.bf16.msra.mxu0 0
      %1427 = vmatprep.subr.bf16.mxu0 0
      %1428 = vmatpush1.bf16.msra.mxu0 0
      %1429 = vmatprep.mubr.bf16.mxu0 0
      %1430 = vmatmul.mubr.bf16.gmra.mrb[0].mxu0 %v1392
      %v1431 = vpop.f32.mrb[0].mxu0
      %v1432 = vadd.f32 0.0, %v1431
      %v1433 = vpop.f32.mrb[0].mxu0
      %v1434 = vpop.f32.mrb[0].mxu0
      %v1435 = vpop.f32.mrb[0].mxu0
      %1436 = vdwg.mxu0
      %v1438 = vsel %vm1053, %v1293, 0
      %v1441 = vsel %vm1301, %v1297, 0
      %1443 = vmatprep.subr.bf16.mxu0 0
      %1444 = vmatpush1.bf16.msra.mxu0 %v1441
      %1445 = vmatprep.subr.bf16.mxu0 0
      %1446 = vmatpush1.bf16.msra.mxu0 0
      %1447 = vmatprep.subr.bf16.mxu0 0
      %1448 = vmatpush1.bf16.msra.mxu0 0
      %1449 = vmatprep.subr.bf16.mxu0 0
      %1450 = vmatpush1.bf16.msra.mxu0 0
      %1451 = vmatprep.subr.bf16.mxu0 0
      %1452 = vmatpush1.bf16.msra.mxu0 0
      %1453 = vmatprep.subr.bf16.mxu0 0
      %1454 = vmatpush1.bf16.msra.mxu0 0
      %1455 = vmatprep.subr.bf16.mxu0 0
      %1456 = vmatpush1.bf16.msra.mxu0 0
      %1457 = vmatprep.subr.bf16.mxu0 0
      %1458 = vmatpush1.bf16.msra.mxu0 0
      %1459 = vmatprep.subr.bf16.mxu0 0
      %1460 = vmatpush1.bf16.msra.mxu0 0
      %1461 = vmatprep.subr.bf16.mxu0 0
      %1462 = vmatpush1.bf16.msra.mxu0 0
      %1463 = vmatprep.subr.bf16.mxu0 0
      %1464 = vmatpush1.bf16.msra.mxu0 0
      %1465 = vmatprep.subr.bf16.mxu0 0
      %1466 = vmatpush1.bf16.msra.mxu0 0
      %1467 = vmatprep.subr.bf16.mxu0 0
      %1468 = vmatpush1.bf16.msra.mxu0 0
      %1469 = vmatprep.subr.bf16.mxu0 0
      %1470 = vmatpush1.bf16.msra.mxu0 0
      %1471 = vmatprep.subr.bf16.mxu0 0
      %1472 = vmatpush1.bf16.msra.mxu0 0
      %1473 = vmatprep.subr.bf16.mxu0 0
      %1474 = vmatpush1.bf16.msra.mxu0 0
      %1475 = vmatprep.mubr.bf16.mxu0 0
      %1476 = vmatmul.mubr.bf16.gmra.mrb[0].mxu0 %v1438
      %v1477 = vpop.f32.mrb[0].mxu0
      %v1478 = vadd.f32 0.0, %v1477
      %v1479 = vpop.f32.mrb[0].mxu0
      %v1480 = vpop.f32.mrb[0].mxu0
      %v1481 = vpop.f32.mrb[0].mxu0
      %1482 = vdwg.mxu0
      %v1483 = vpack.c.bf16 %v1340, %v1340
      %v1484 = vpack.c.bf16 %v1386, %v1386
      %v1485 = vpack.c.bf16 %v1432, %v1432
      %v1486 = vpack.c.bf16 %v1478, %v1478
      %v1488 = vsel %vm1053, %v1483, 0
      %v1491 = vsel %vm1301, %v1041, 0
      %1493 = vmatprep.subr.bf16.mxu0 0
      %1494 = vmatpush1.bf16.msra.mxu0 %v1491
      %1495 = vmatprep.subr.bf16.mxu0 0
      %1496 = vmatpush1.bf16.msra.mxu0 0
      %1497 = vmatprep.subr.bf16.mxu0 0
      %1498 = vmatpush1.bf16.msra.mxu0 0
      %1499 = vmatprep.subr.bf16.mxu0 0
      %1500 = vmatpush1.bf16.msra.mxu0 0
      %1501 = vmatprep.subr.bf16.mxu0 0
      %1502 = vmatpush1.bf16.msra.mxu0 0
      %1503 = vmatprep.subr.bf16.mxu0 0
      %1504 = vmatpush1.bf16.msra.mxu0 0
      %1505 = vmatprep.subr.bf16.mxu0 0
      %1506 = vmatpush1.bf16.msra.mxu0 0
      %1507 = vmatprep.subr.bf16.mxu0 0
      %1508 = vmatpush1.bf16.msra.mxu0 0
      %1509 = vmatprep.subr.bf16.mxu0 0
      %1510 = vmatpush1.bf16.msra.mxu0 0
      %1511 = vmatprep.subr.bf16.mxu0 0
      %1512 = vmatpush1.bf16.msra.mxu0 0
      %1513 = vmatprep.subr.bf16.mxu0 0
      %1514 = vmatpush1.bf16.msra.mxu0 0
      %1515 = vmatprep.subr.bf16.mxu0 0
      %1516 = vmatpush1.bf16.msra.mxu0 0
      %1517 = vmatprep.subr.bf16.mxu0 0
      %1518 = vmatpush1.bf16.msra.mxu0 0
      %1519 = vmatprep.subr.bf16.mxu0 0
      %1520 = vmatpush1.bf16.msra.mxu0 0
      %1521 = vmatprep.subr.bf16.mxu0 0
      %1522 = vmatpush1.bf16.msra.mxu0 0
      %1523 = vmatprep.subr.bf16.mxu0 0
      %1524 = vmatpush1.bf16.msra.mxu0 0
      %1525 = vmatprep.mubr.bf16.mxu0 0
      %1526 = vmatmul.mubr.bf16.gmra.mrb[0].mxu0 %v1488
      %v1527 = vpop.f32.mrb[0].mxu0
      %v1528 = vadd.f32 0.0, %v1527
      %v1529 = vpop.f32.mrb[0].mxu0
      %v1530 = vpop.f32.mrb[0].mxu0
      %v1531 = vpop.f32.mrb[0].mxu0
      %1532 = vdwg.mxu0
      %v1534 = vsel %vm1053, %v1484, 0
      %v1537 = vsel %vm1301, %v1042, 0
      %1539 = vmatprep.subr.bf16.mxu0 0
      %1540 = vmatpush1.bf16.msra.mxu0 %v1537
      %1541 = vmatprep.subr.bf16.mxu0 0
      %1542 = vmatpush1.bf16.msra.mxu0 0
      %1543 = vmatprep.subr.bf16.mxu0 0
      %1544 = vmatpush1.bf16.msra.mxu0 0
      %1545 = vmatprep.subr.bf16.mxu0 0
      %1546 = vmatpush1.bf16.msra.mxu0 0
      %1547 = vmatprep.subr.bf16.mxu0 0
      %1548 = vmatpush1.bf16.msra.mxu0 0
      %1549 = vmatprep.subr.bf16.mxu0 0
      %1550 = vmatpush1.bf16.msra.mxu0 0
      %1551 = vmatprep.subr.bf16.mxu0 0
      %1552 = vmatpush1.bf16.msra.mxu0 0
      %1553 = vmatprep.subr.bf16.mxu0 0
      %1554 = vmatpush1.bf16.msra.mxu0 0
      %1555 = vmatprep.subr.bf16.mxu0 0
      %1556 = vmatpush1.bf16.msra.mxu0 0
      %1557 = vmatprep.subr.bf16.mxu0 0
      %1558 = vmatpush1.bf16.msra.mxu0 0
      %1559 = vmatprep.subr.bf16.mxu0 0
      %1560 = vmatpush1.bf16.msra.mxu0 0
      %1561 = vmatprep.subr.bf16.mxu0 0
      %1562 = vmatpush1.bf16.msra.mxu0 0
      %1563 = vmatprep.subr.bf16.mxu0 0
      %1564 = vmatpush1.bf16.msra.mxu0 0
      %1565 = vmatprep.subr.bf16.mxu0 0
      %1566 = vmatpush1.bf16.msra.mxu0 0
      %1567 = vmatprep.subr.bf16.mxu0 0
      %1568 = vmatpush1.bf16.msra.mxu0 0
      %1569 = vmatprep.subr.bf16.mxu0 0
      %1570 = vmatpush1.bf16.msra.mxu0 0
      %1571 = vmatprep.mubr.bf16.mxu0 0
      %1572 = vmatmul.mubr.bf16.gmra.mrb[0].mxu0 %v1534
      %v1573 = vpop.f32.mrb[0].mxu0
      %v1574 = vadd.f32 0.0, %v1573
      %v1575 = vpop.f32.mrb[0].mxu0
      %v1576 = vpop.f32.mrb[0].mxu0
      %v1577 = vpop.f32.mrb[0].mxu0
      %1578 = vdwg.mxu0
      %v1580 = vsel %vm1053, %v1485, 0
      %v1583 = vsel %vm1301, %v1043, 0
      %1585 = vmatprep.subr.bf16.mxu0 0
      %1586 = vmatpush1.bf16.msra.mxu0 %v1583
      %1587 = vmatprep.subr.bf16.mxu0 0
      %1588 = vmatpush1.bf16.msra.mxu0 0
      %1589 = vmatprep.subr.bf16.mxu0 0
      %1590 = vmatpush1.bf16.msra.mxu0 0
      %1591 = vmatprep.subr.bf16.mxu0 0
      %1592 = vmatpush1.bf16.msra.mxu0 0
      %1593 = vmatprep.subr.bf16.mxu0 0
      %1594 = vmatpush1.bf16.msra.mxu0 0
      %1595 = vmatprep.subr.bf16.mxu0 0
      %1596 = vmatpush1.bf16.msra.mxu0 0
      %1597 = vmatprep.subr.bf16.mxu0 0
      %1598 = vmatpush1.bf16.msra.mxu0 0
      %1599 = vmatprep.subr.bf16.mxu0 0
      %1600 = vmatpush1.bf16.msra.mxu0 0
      %1601 = vmatprep.subr.bf16.mxu0 0
      %1602 = vmatpush1.bf16.msra.mxu0 0
      %1603 = vmatprep.subr.bf16.mxu0 0
      %1604 = vmatpush1.bf16.msra.mxu0 0
      %1605 = vmatprep.subr.bf16.mxu0 0
      %1606 = vmatpush1.bf16.msra.mxu0 0
      %1607 = vmatprep.subr.bf16.mxu0 0
      %1608 = vmatpush1.bf16.msra.mxu0 0
      %1609 = vmatprep.subr.bf16.mxu0 0
      %1610 = vmatpush1.bf16.msra.mxu0 0
      %1611 = vmatprep.subr.bf16.mxu0 0
      %1612 = vmatpush1.bf16.msra.mxu0 0
      %1613 = vmatprep.subr.bf16.mxu0 0
      %1614 = vmatpush1.bf16.msra.mxu0 0
      %1615 = vmatprep.subr.bf16.mxu0 0
      %1616 = vmatpush1.bf16.msra.mxu0 0
      %1617 = vmatprep.mubr.bf16.mxu0 0
      %1618 = vmatmul.mubr.bf16.gmra.mrb[0].mxu0 %v1580
      %v1619 = vpop.f32.mrb[0].mxu0
      %v1620 = vadd.f32 0.0, %v1619
      %v1621 = vpop.f32.mrb[0].mxu0
      %v1622 = vpop.f32.mrb[0].mxu0
      %v1623 = vpop.f32.mrb[0].mxu0
      %1624 = vdwg.mxu0
      %v1626 = vsel %vm1053, %v1486, 0
      %v1629 = vsel %vm1301, %v1044, 0
      %1631 = vmatprep.subr.bf16.mxu0 0
      %1632 = vmatpush1.bf16.msra.mxu0 %v1629
      %1633 = vmatprep.subr.bf16.mxu0 0
      %1634 = vmatpush1.bf16.msra.mxu0 0
      %1635 = vmatprep.subr.bf16.mxu0 0
      %1636 = vmatpush1.bf16.msra.mxu0 0
      %1637 = vmatprep.subr.bf16.mxu0 0
      %1638 = vmatpush1.bf16.msra.mxu0 0
      %1639 = vmatprep.subr.bf16.mxu0 0
      %1640 = vmatpush1.bf16.msra.mxu0 0
      %1641 = vmatprep.subr.bf16.mxu0 0
      %1642 = vmatpush1.bf16.msra.mxu0 0
      %1643 = vmatprep.subr.bf16.mxu0 0
      %1644 = vmatpush1.bf16.msra.mxu0 0
      %1645 = vmatprep.subr.bf16.mxu0 0
      %1646 = vmatpush1.bf16.msra.mxu0 0
      %1647 = vmatprep.subr.bf16.mxu0 0
      %1648 = vmatpush1.bf16.msra.mxu0 0
      %1649 = vmatprep.subr.bf16.mxu0 0
      %1650 = vmatpush1.bf16.msra.mxu0 0
      %1651 = vmatprep.subr.bf16.mxu0 0
      %1652 = vmatpush1.bf16.msra.mxu0 0
      %1653 = vmatprep.subr.bf16.mxu0 0
      %1654 = vmatpush1.bf16.msra.mxu0 0
      %1655 = vmatprep.subr.bf16.mxu0 0
      %1656 = vmatpush1.bf16.msra.mxu0 0
      %1657 = vmatprep.subr.bf16.mxu0 0
      %1658 = vmatpush1.bf16.msra.mxu0 0
      %1659 = vmatprep.subr.bf16.mxu0 0
      %1660 = vmatpush1.bf16.msra.mxu0 0
      %1661 = vmatprep.subr.bf16.mxu0 0
      %1662 = vmatpush1.bf16.msra.mxu0 0
      %1663 = vmatprep.mubr.bf16.mxu0 0
      %1664 = vmatmul.mubr.bf16.gmra.mrb[0].mxu0 %v1626
      %v1665 = vpop.f32.mrb[0].mxu0
      %v1666 = vadd.f32 0.0, %v1665
      %v1667 = vpop.f32.mrb[0].mxu0
      %v1668 = vpop.f32.mrb[0].mxu0
      %v1669 = vpop.f32.mrb[0].mxu0
      %1670 = vdwg.mxu0
      %v1671 = vsel %vm424, %v1528, 0.0
      %v1672 = vsel %vm424, %v1574, 0.0
      %v1673 = vadd.f32 %v1671, %v1672
      %v1674 = vsel %vm424, %v1620, 0.0
      %v1675 = vadd.f32 %v1673, %v1674
      %v1676 = vsel %vm424, %v1666, 0.0
      %v1677 = vadd.f32 %v1675, %v1676
      %v1678 = vadd.f32 %v361, %v1677
      %v1679 = vsel %vm424, %v1678, 0.0
      %1680 = vadd.xlane.f32.xlu0 %v1679
      %v1681 = vpop.xlane.xlu0 %1680
      %v1682 = vrcp.pop 32.0
      %v1683 = vmul.f32 %v1681, %v1682
      %v1684 = vsub.f32 %v1678, %v1683
      %v1685 = vmul.f32 %v1684, %v1684
      %v1686 = vsel %vm424, %v1685, 0.0
      %1687 = vadd.xlane.f32.xlu0 %v1686
      %v1688 = vpop.xlane.xlu0 %1687
      %v1689 = vmul.f32 %v1688, %v1682
      %v1690 = vadd.f32 %v1689, 1e-05
      %v1691 = vrsqrt.pop %v1690
      %v1692 = vmul.f32 %v1684, %v1691
      %v1693 = vlaneseq
      %v1694 = vshrl.u32 %v1693, 7
      %v1695 = vsub.s32 0, %v1694
      %v1696 = vrot.slane %v362, %v1695
      %v1697 = vmul.f32 %v1692, %v1696
      %v1698 = vlaneseq
      %v1699 = vshrl.u32 %v1698, 7
      %v1700 = vsub.s32 1, %v1699
      %v1701 = vrot.slane %v362, %v1700
      %v1702 = vadd.f32 %v1697, %v1701
      %v1703 = vld [vmem:[%s344] sm:$0xf]
      %v1704 = vld [vmem:[%s344 + $0x4] sm:$0xf]
      %v1705 = vld [vmem:[%s344 + $0x8] sm:$0xf]
      %v1706 = vld [vmem:[%s344 + $0xc] sm:$0xf]
      %v1707 = vld [vmem:[%s344 + $0x10] sm:$0xf]
      %v1708 = vld [vmem:[%s344 + $0x14] sm:$0xf]
      %v1709 = vld [vmem:[%s344 + $0x18] sm:$0xf]
      %v1710 = vld [vmem:[%s344 + $0x1c] sm:$0xf]
      %v1711 = vpack.c.bf16 %v1702, %v1702
      %v1712 = vlaneseq
      %v1713 = vshrl.u32 %v1712, 7
      %v1714 = vsub.s32 4, %v1713
      %v1715 = vrot.slane %v362, %v1714
      %v1720 = vunpack.c.l.b16 %v1703
      %v1721 = vunpack.c.l.b16 %v1704
      %v1722 = vunpack.c.l.b16 %v1705
      %v1723 = vunpack.c.l.b16 %v1706
      %v1724 = vpack.c.b16 %v1721, %v1720
      %v1725 = vpack.c.b16 %v1723, %v1722
      %v1729 = vsel %vm424, %v1711, 0
      %1731 = vmatprep.subr.bf16.mxu0 0
      %1732 = vmatpush1.bf16.msra.mxu0 %v1724
      %1733 = vmatprep.subr.bf16.mxu0 0
      %1734 = vmatpush1.bf16.msra.mxu0 %v1725
      %1735 = vmatprep.subr.bf16.mxu0 0
      %1736 = vmatpush1.bf16.msra.mxu0 0
      %1737 = vmatprep.subr.bf16.mxu0 0
      %1738 = vmatpush1.bf16.msra.mxu0 0
      %1739 = vmatprep.subr.bf16.mxu0 0
      %1740 = vmatpush1.bf16.msra.mxu0 0
      %1741 = vmatprep.subr.bf16.mxu0 0
      %1742 = vmatpush1.bf16.msra.mxu0 0
      %1743 = vmatprep.subr.bf16.mxu0 0
      %1744 = vmatpush1.bf16.msra.mxu0 0
      %1745 = vmatprep.subr.bf16.mxu0 0
      %1746 = vmatpush1.bf16.msra.mxu0 0
      %1747 = vmatprep.subr.bf16.mxu0 0
      %1748 = vmatpush1.bf16.msra.mxu0 0
      %1749 = vmatprep.subr.bf16.mxu0 0
      %1750 = vmatpush1.bf16.msra.mxu0 0
      %1751 = vmatprep.subr.bf16.mxu0 0
      %1752 = vmatpush1.bf16.msra.mxu0 0
      %1753 = vmatprep.subr.bf16.mxu0 0
      %1754 = vmatpush1.bf16.msra.mxu0 0
      %1755 = vmatprep.subr.bf16.mxu0 0
      %1756 = vmatpush1.bf16.msra.mxu0 0
      %1757 = vmatprep.subr.bf16.mxu0 0
      %1758 = vmatpush1.bf16.msra.mxu0 0
      %1759 = vmatprep.subr.bf16.mxu0 0
      %1760 = vmatpush1.bf16.msra.mxu0 0
      %1761 = vmatprep.subr.bf16.mxu0 0
      %1762 = vmatpush1.bf16.msra.mxu0 0
      %1763 = vmatprep.mubr.bf16.mxu0 0
      %1764 = vmatmul.mubr.bf16.gmra.mrb[0].mxu0 %v1729
      %v1765 = vpop.f32.mrb[0].mxu0
      %v1766 = vadd.f32 %v1715, %v1765
      %v1767 = vpop.f32.mrb[0].mxu0
      %v1768 = vpop.f32.mrb[0].mxu0
      %v1769 = vpop.f32.mrb[0].mxu0
      %1770 = vdwg.mxu0
      %v1771 = vmax.f32 %v1766, 0.0
      %v1772 = vpack.c.bf16 %v1771, %v1771
      %v1773 = vlaneseq
      %v1774 = vshrl.u32 %v1773, 7
      %v1775 = vsub.s32 5, %v1774
      %v1776 = vrot.slane %v362, %v1775
      %v1781 = vunpack.c.l.b16 %v1707
      %v1782 = vunpack.c.l.b16 %v1708
      %v1783 = vunpack.c.l.b16 %v1709
      %v1784 = vunpack.c.l.b16 %v1710
      %v1785 = vpack.c.b16 %v1782, %v1781
      %v1786 = vpack.c.b16 %v1784, %v1783
      %vm1787 = vcmask 523264
      %v1789 = vsel %vm1787, %v1772, 0
      %v1792 = vsel %vm1787, %v1785, 0
      %v1795 = vsel %vm1787, %v1786, 0
      %1797 = vmatprep.subr.bf16.mxu0 0
      %1798 = vmatpush1.bf16.xpose.msra.mxu0 %v1792
      %1799 = vmatprep.subr.bf16.mxu0 0
      %1800 = vmatpush1.bf16.xpose.msra.mxu0 %v1795
      %1801 = vmatprep.subr.bf16.mxu0 0
      %1802 = vmatpush1.bf16.xpose.msra.mxu0 0
      %1803 = vmatprep.subr.bf16.mxu0 0
      %1804 = vmatpush1.bf16.xpose.msra.mxu0 0
      %1805 = vmatprep.subr.bf16.mxu0 0
      %1806 = vmatpush1.bf16.xpose.msra.mxu0 0
      %1807 = vmatprep.subr.bf16.mxu0 0
      %1808 = vmatpush1.bf16.xpose.msra.mxu0 0
      %1809 = vmatprep.subr.bf16.mxu0 0
      %1810 = vmatpush1.bf16.xpose.msra.mxu0 0
      %1811 = vmatprep.subr.bf16.mxu0 0
      %1812 = vmatpush1.bf16.xpose.msra.mxu0 0
      %1813 = vmatprep.subr.bf16.mxu0 0
      %1814 = vmatpush1.bf16.xpose.msra.mxu0 0
      %1815 = vmatprep.subr.bf16.mxu0 0
      %1816 = vmatpush1.bf16.xpose.msra.mxu0 0
      %1817 = vmatprep.subr.bf16.mxu0 0
      %1818 = vmatpush1.bf16.xpose.msra.mxu0 0
      %1819 = vmatprep.subr.bf16.mxu0 0
      %1820 = vmatpush1.bf16.xpose.msra.mxu0 0
      %1821 = vmatprep.subr.bf16.mxu0 0
      %1822 = vmatpush1.bf16.xpose.msra.mxu0 0
      %1823 = vmatprep.subr.bf16.mxu0 0
      %1824 = vmatpush1.bf16.xpose.msra.mxu0 0
      %1825 = vmatprep.subr.bf16.mxu0 0
      %1826 = vmatpush1.bf16.xpose.msra.mxu0 0
      %1827 = vmatprep.subr.bf16.mxu0 0
      %1828 = vmatpush1.bf16.xpose.msra.mxu0 0
      %1829 = vmatprep.mubr.bf16.mxu0 0
      %1830 = vmatmul.mubr.bf16.gmra.mrb[0].mxu0 %v1789
      %v1831 = vpop.f32.mrb[0].mxu0
      %v1832 = vadd.f32 %v1776, %v1831
      %v1833 = vpop.f32.mrb[0].mxu0
      %v1834 = vpop.f32.mrb[0].mxu0
      %v1835 = vpop.f32.mrb[0].mxu0
      %1836 = vdwg.mxu0
      %v1837 = vadd.f32 %v1702, %v1832
      %v1838 = vsel %vm424, %v1837, 0.0
      %1839 = vadd.xlane.f32.xlu0 %v1838
      %v1840 = vpop.xlane.xlu0 %1839
      %v1841 = vmul.f32 %v1840, %v1682
      %v1842 = vsub.f32 %v1837, %v1841
      %v1843 = vmul.f32 %v1842, %v1842
      %v1844 = vsel %vm424, %v1843, 0.0
      %1845 = vadd.xlane.f32.xlu0 %v1844
      %v1846 = vpop.xlane.xlu0 %1845
      %v1847 = vmul.f32 %v1846, %v1682
      %v1848 = vadd.f32 %v1847, 1e-05
      %v1849 = vrsqrt.pop %v1848
      %v1850 = vmul.f32 %v1842, %v1849
      %v1851 = vlaneseq
      %v1852 = vshrl.u32 %v1851, 7
      %v1853 = vsub.s32 2, %v1852
      %v1854 = vrot.slane %v362, %v1853
      %v1855 = vmul.f32 %v1850, %v1854
      %v1856 = vlaneseq
      %v1857 = vshrl.u32 %v1856, 7
      %v1858 = vsub.s32 3, %v1857
      %v1859 = vrot.slane %v362, %v1858
      %v1860 = vadd.f32 %v1855, %v1859
      %1861 = vst.msk [vmem:[#allocation2] sm:$0xff] %vm424, %v1860
      %p1862 = scmp.eq.s32.totalorder %s22, 1
      // Predicated region
      $region49: #{transformer_forward.2} parent=43 // pred_check
        %p1863 = pneg %p1862
      $region50: #{transformer_forward.2} parent=43 // pred_check_branch
        %1865 = sbr.rel (%p1863) target = $region52
      $region51: #{transformer_forward.2} parent=43 // pred_region
        %1866 = vst.msk [vmem:[%s352] sm:$0xff] %vm424, %v1860
      $region52: #{transformer_forward.2} parent=43 // pred_fallthru
        _
      %p1867 = scmp.lt.s32.totalorder %s21, 1
      %s1868 = scalar_select %p1867, %s21, 1
      %s1869 = smul.addr %s1868, 8
      %s1870 = scalar_lea.vmem %s6, %s1869
      // Predicated region
      $region53: #{transformer_forward.2} parent=43 // pred_check
        %p1871 = pneg %p203
      $region54: #{transformer_forward.2} parent=43 // pred_check_branch
        %1873 = sbr.rel (%p1871) target = $region56
      $region55: #{transformer_forward.2} parent=43 // pred_region
        _
      $region56: #{transformer_forward.2} parent=43 // pred_fallthru
        _
    $region44: #{transformer_forward.2} parent=5 // pred_fallthru
      _
    %p1874 = scmp.le.s32.totalorder 2, %s12
    // Predicated region
    $region57: #{transformer_forward.2} parent=5 // pred_check
      %p1875 = pneg %p1874
    $region58: #{transformer_forward.2} parent=5 // pred_check_branch
      %1877 = sbr.rel (%p1875) target = $region60
    $region59: #{transformer_forward.2} parent=5 // pred_region
      %s1878 = ssub.s32 %s12, 2
      // Predicated region
      $region61: #{transformer_forward.2} parent=59 // pred_check
        %p1879 = pneg %p209
      $region62: #{transformer_forward.2} parent=59 // pred_check_branch
        %1881 = sbr.rel (%p1879) target = $region64
      $region63: #{transformer_forward.2} parent=59 // pred_region
        %p1882 = scmp.lt.s32.totalorder %s23, 1
        %s1883 = scalar_select %p1882, %s23, 1
        %s1884 = smul.addr %s1883, 8
        %s1885 = scalar_lea.vmem %s6, %s1884
      $region64: #{transformer_forward.2} parent=59 // pred_fallthru
        _
    $region60: #{transformer_forward.2} parent=5 // pred_fallthru
      _
  $region6: #{transformer_forward.2} parent=0 // loop_footer
    %s16 = sadd.s32 1, %s12
  $region7: #{transformer_forward.2} parent=0 // loop_footer_branch
    %11 = sbr.rel target = $region3
  $region8: #{transformer_forward.2} parent=0 // loop_exit
    _

// kernel: transformer_forward.3
$region0: #{transformer_forward.3}
  #allocation0 [shape = 'u32[]', space=smem, size = 0x4, offset = 0x4, fixed_abs, tag = 'smem constant byte address 0x4 - core index']
  #allocation1 [shape = 'u32[144,128]{1,0:T(1,128)}', space=vmem, size = 0x12000, scoped, tag = 'internal scratch']
  #allocation2 [shape = 'f32[8,32]{1,0:T(8,128)}', space=vmem, size = 0x1000, scoped, tag = 'scratch operand']
  %s0 = inlined_call_operand.vmem [shape: f32[2,8,32], index: 0, kind: input, shape index: {}]
  %s1 = inlined_call_operand.vmem [shape: f32[2,8,32], index: 1, kind: input, shape index: {}]
  %s2 = inlined_call_operand.vmem [shape: f32[2,8,8], index: 2, kind: input, shape index: {}]
  %s3 = inlined_call_operand.vmem [shape: f32[2,8,8], index: 3, kind: input, shape index: {}]
  %s4 = inlined_call_operand.vmem [shape: bf16[2,24,32,8], index: 4, kind: input, shape index: {}]
  %s5 = inlined_call_operand.vmem [shape: bf16[2,8,8,32], index: 5, kind: input, shape index: {}]
  %s6 = inlined_call_operand.vmem [shape: bf16[2,2,32,64], index: 6, kind: input, shape index: {}]
  %s7 = inlined_call_operand.vmem [shape: f32[2,9,128], index: 7, kind: input, shape index: {}]
  %s8 = inlined_call_operand.vmem [shape: bf16[32,128], index: 8, kind: input, shape index: {}]
  %s9 = inlined_call_operand.hbm [shape: f32[2,8,128], index: 9, kind: output, shape index: {}]
  %s10 = sld [smem:[#allocation0]]
  $region77: #{transformer_forward.3} parent=0
    _
  %s12 = ssub.s32 1, %s10
  %s13 = scalar_select 0, %s12, %s10
  $region1: #{transformer_forward.3} parent=0
    #allocation3 [shape = 'u8[8192]{0}', space=vmem, size = 0x2000, scoped, tag = 'output window, operand 0']
    #allocation4 [shape = 's32[2]{0}', space=sflag, size = 0x8, scoped, tag = 'scoped memory for transformer_forward.3']
    %14 = vsyncpa [#allocation4], 0
    %s15 = scalar_lea.sflag [#allocation4], 1
    %16 = vsyncpa %s15, 0
    loop: start=0, step=1, limit=6
    $region2: #{transformer_forward.3} parent=1 // loop_pre_header
      _
    $region3: #{transformer_forward.3} parent=1 // loop_header
      %s18 = sphi 0, %s22
      %p19 = scmp.ge.s32.totalorder %s18, 6
      %s25 = sphi 0, %s37
      %s26 = sphi 0, %s33
      %s27 = sphi 0, %s25
      %s28 = sphi 0, %s26
      %s29 = sphi 0, %s27
      %s30 = sphi 0, %s28
      %s40 = sphi 0, %s42
      %s43 = sphi 0, %s40
      %s44 = sphi 0, %s43
      %s60 = sphi 0, %s44
      %s66 = sphi 0, %s68
      %s69 = sphi 0, %s66
      %s70 = sphi 0, %s69
      %s86 = sphi 0, %s70
      %s92 = sphi 0, %s94
      %s95 = sphi 0, %s92
      %s96 = sphi 0, %s95
      %s112 = sphi 0, %s96
      %s118 = sphi 0, %s120
      %s121 = sphi 0, %s118
      %s122 = sphi 0, %s121
      %s138 = sphi 0, %s122
      %s144 = sphi 0, %s146
      %s147 = sphi 0, %s144
      %s148 = sphi 0, %s147
      %s164 = sphi 0, %s148
      %s170 = sphi 0, %s172
      %s173 = sphi 0, %s170
      %s174 = sphi 0, %s173
      %s190 = sphi 0, %s174
      %s196 = sphi 0, %s198
      %s199 = sphi 0, %s196
      %s200 = sphi 0, %s199
      %s216 = sphi 0, %s200
      %s222 = sphi 0, %s224
      %s225 = sphi 0, %s222
      %s226 = sphi 0, %s225
      %s242 = sphi 0, %s226
      %s246 = sphi 0, %s246
      %s248 = sphi 0, %s246
      %s249 = sphi 0, %s248
      %s263 = sphi 0, %s249
      %s269 = sphi 0, %s271
      %s272 = sphi 0, %s269
      %s273 = sphi 0, %s272
      %s289 = sphi 0, %s273
    $region4: #{transformer_forward.3} parent=1 // loop_header_branch
      %21 = sbr.rel (%p19) target = $region8
    $region5: #{transformer_forward.3} parent=1 // loop_body
      %s23 = ssub.s32 %s18, 1
      %s24 = ssub.s32 %s18, 2
      %s31 = sadd.s32 1, %s26
      %p32 = scmp.ge.s32.totalorder %s31, 2
      %s33 = scalar_select %p32, 0, %s31
      %s34 = sadd.s32 1, %s25
      %s35 = scalar_select %p32, %s34, %s25
      %p36 = scmp.ge.s32.totalorder %s35, 2
      %s37 = scalar_select %p36, 0, %s35
      %s38 = ssub.s32 %s25, %s37
      %p39 = scmp.eq.s32.totalorder %s38, 0
      %s41 = sadd.s32 %s40, 1
      %s42 = scalar_select %p39, %s40, %s41
      %p45 = pneg %p39
      %p46 = scmp.eq.s32.totalorder %s18, 3
      %p47 = por %p45, %p46
      %p48 = scmp.ne.s32.totalorder %s40, %s43
      %p49 = scmp.eq.s32.totalorder %s18, 0
      %p50 = por %p48, %p49
      %p51 = scmp.ne.s32.totalorder %s40, %s43
      %p52 = scmp.eq.s32.totalorder %s23, 3
      %p53 = por %p51, %p52
      %p54 = scmp.ne.s32.totalorder %s43, %s44
      %p55 = scmp.eq.s32.totalorder %s23, 0
      %p56 = por %p54, %p55
      %p57 = scmp.ne.s32.totalorder %s43, %s44
      %p58 = scmp.eq.s32.totalorder %s24, 3
      %p59 = por %p57, %p58
      %p61 = scmp.ne.s32.totalorder %s44, %s60
      %p62 = scmp.eq.s32.totalorder %s24, 0
      %p63 = por %p61, %p62
      %s64 = ssub.s32 %s25, %s37
      %p65 = scmp.eq.s32.totalorder %s64, 0
      %s67 = sadd.s32 %s66, 1
      %s68 = scalar_select %p65, %s66, %s67
      %p71 = pneg %p65
      %p72 = scmp.eq.s32.totalorder %s18, 3
      %p73 = por %p71, %p72
      %p74 = scmp.ne.s32.totalorder %s66, %s69
      %p75 = scmp.eq.s32.totalorder %s18, 0
      %p76 = por %p74, %p75
      %p77 = scmp.ne.s32.totalorder %s66, %s69
      %p78 = scmp.eq.s32.totalorder %s23, 3
      %p79 = por %p77, %p78
      %p80 = scmp.ne.s32.totalorder %s69, %s70
      %p81 = scmp.eq.s32.totalorder %s23, 0
      %p82 = por %p80, %p81
      %p83 = scmp.ne.s32.totalorder %s69, %s70
      %p84 = scmp.eq.s32.totalorder %s24, 3
      %p85 = por %p83, %p84
      %p87 = scmp.ne.s32.totalorder %s70, %s86
      %p88 = scmp.eq.s32.totalorder %s24, 0
      %p89 = por %p87, %p88
      %s90 = ssub.s32 %s25, %s37
      %p91 = scmp.eq.s32.totalorder %s90, 0
      %s93 = sadd.s32 %s92, 1
      %s94 = scalar_select %p91, %s92, %s93
      %p97 = pneg %p91
      %p98 = scmp.eq.s32.totalorder %s18, 3
      %p99 = por %p97, %p98
      %p100 = scmp.ne.s32.totalorder %s92, %s95
      %p101 = scmp.eq.s32.totalorder %s18, 0
      %p102 = por %p100, %p101
      %p103 = scmp.ne.s32.totalorder %s92, %s95
      %p104 = scmp.eq.s32.totalorder %s23, 3
      %p105 = por %p103, %p104
      %p106 = scmp.ne.s32.totalorder %s95, %s96
      %p107 = scmp.eq.s32.totalorder %s23, 0
      %p108 = por %p106, %p107
      %p109 = scmp.ne.s32.totalorder %s95, %s96
      %p110 = scmp.eq.s32.totalorder %s24, 3
      %p111 = por %p109, %p110
      %p113 = scmp.ne.s32.totalorder %s96, %s112
      %p114 = scmp.eq.s32.totalorder %s24, 0
      %p115 = por %p113, %p114
      %s116 = ssub.s32 %s25, %s37
      %p117 = scmp.eq.s32.totalorder %s116, 0
      %s119 = sadd.s32 %s118, 1
      %s120 = scalar_select %p117, %s118, %s119
      %p123 = pneg %p117
      %p124 = scmp.eq.s32.totalorder %s18, 3
      %p125 = por %p123, %p124
      %p126 = scmp.ne.s32.totalorder %s118, %s121
      %p127 = scmp.eq.s32.totalorder %s18, 0
      %p128 = por %p126, %p127
      %p129 = scmp.ne.s32.totalorder %s118, %s121
      %p130 = scmp.eq.s32.totalorder %s23, 3
      %p131 = por %p129, %p130
      %p132 = scmp.ne.s32.totalorder %s121, %s122
      %p133 = scmp.eq.s32.totalorder %s23, 0
      %p134 = por %p132, %p133
      %p135 = scmp.ne.s32.totalorder %s121, %s122
      %p136 = scmp.eq.s32.totalorder %s24, 3
      %p137 = por %p135, %p136
      %p139 = scmp.ne.s32.totalorder %s122, %s138
      %p140 = scmp.eq.s32.totalorder %s24, 0
      %p141 = por %p139, %p140
      %s142 = ssub.s32 %s26, %s33
      %p143 = scmp.eq.s32.totalorder %s142, 0
      %s145 = sadd.s32 %s144, 1
      %s146 = scalar_select %p143, %s144, %s145
      %p149 = pneg %p143
      %p150 = scmp.eq.s32.totalorder %s18, 3
      %p151 = por %p149, %p150
      %p152 = scmp.ne.s32.totalorder %s144, %s147
      %p153 = scmp.eq.s32.totalorder %s18, 0
      %p154 = por %p152, %p153
      %p155 = scmp.ne.s32.totalorder %s144, %s147
      %p156 = scmp.eq.s32.totalorder %s23, 3
      %p157 = por %p155, %p156
      %p158 = scmp.ne.s32.totalorder %s147, %s148
      %p159 = scmp.eq.s32.totalorder %s23, 0
      %p160 = por %p158, %p159
      %p161 = scmp.ne.s32.totalorder %s147, %s148
      %p162 = scmp.eq.s32.totalorder %s24, 3
      %p163 = por %p161, %p162
      %p165 = scmp.ne.s32.totalorder %s148, %s164
      %p166 = scmp.eq.s32.totalorder %s24, 0
      %p167 = por %p165, %p166
      %s168 = ssub.s32 %s26, %s33
      %p169 = scmp.eq.s32.totalorder %s168, 0
      %s171 = sadd.s32 %s170, 1
      %s172 = scalar_select %p169, %s170, %s171
      %p175 = pneg %p169
      %p176 = scmp.eq.s32.totalorder %s18, 3
      %p177 = por %p175, %p176
      %p178 = scmp.ne.s32.totalorder %s170, %s173
      %p179 = scmp.eq.s32.totalorder %s18, 0
      %p180 = por %p178, %p179
      %p181 = scmp.ne.s32.totalorder %s170, %s173
      %p182 = scmp.eq.s32.totalorder %s23, 3
      %p183 = por %p181, %p182
      %p184 = scmp.ne.s32.totalorder %s173, %s174
      %p185 = scmp.eq.s32.totalorder %s23, 0
      %p186 = por %p184, %p185
      %p187 = scmp.ne.s32.totalorder %s173, %s174
      %p188 = scmp.eq.s32.totalorder %s24, 3
      %p189 = por %p187, %p188
      %p191 = scmp.ne.s32.totalorder %s174, %s190
      %p192 = scmp.eq.s32.totalorder %s24, 0
      %p193 = por %p191, %p192
      %s194 = ssub.s32 %s26, %s33
      %p195 = scmp.eq.s32.totalorder %s194, 0
      %s197 = sadd.s32 %s196, 1
      %s198 = scalar_select %p195, %s196, %s197
      %p201 = pneg %p195
      %p202 = scmp.eq.s32.totalorder %s18, 3
      %p203 = por %p201, %p202
      %p204 = scmp.ne.s32.totalorder %s196, %s199
      %p205 = scmp.eq.s32.totalorder %s18, 0
      %p206 = por %p204, %p205
      %p207 = scmp.ne.s32.totalorder %s196, %s199
      %p208 = scmp.eq.s32.totalorder %s23, 3
      %p209 = por %p207, %p208
      %p210 = scmp.ne.s32.totalorder %s199, %s200
      %p211 = scmp.eq.s32.totalorder %s23, 0
      %p212 = por %p210, %p211
      %p213 = scmp.ne.s32.totalorder %s199, %s200
      %p214 = scmp.eq.s32.totalorder %s24, 3
      %p215 = por %p213, %p214
      %p217 = scmp.ne.s32.totalorder %s200, %s216
      %p218 = scmp.eq.s32.totalorder %s24, 0
      %p219 = por %p217, %p218
      %s220 = ssub.s32 %s26, %s33
      %p221 = scmp.eq.s32.totalorder %s220, 0
      %s223 = sadd.s32 %s222, 1
      %s224 = scalar_select %p221, %s222, %s223
      %p227 = pneg %p221
      %p228 = scmp.eq.s32.totalorder %s18, 3
      %p229 = por %p227, %p228
      %p230 = scmp.ne.s32.totalorder %s222, %s225
      %p231 = scmp.eq.s32.totalorder %s18, 0
      %p232 = por %p230, %p231
      %p233 = scmp.ne.s32.totalorder %s222, %s225
      %p234 = scmp.eq.s32.totalorder %s23, 3
      %p235 = por %p233, %p234
      %p236 = scmp.ne.s32.totalorder %s225, %s226
      %p237 = scmp.eq.s32.totalorder %s23, 0
      %p238 = por %p236, %p237
      %p239 = scmp.ne.s32.totalorder %s225, %s226
      %p240 = scmp.eq.s32.totalorder %s24, 3
      %p241 = por %p239, %p240
      %p243 = scmp.ne.s32.totalorder %s226, %s242
      %p244 = scmp.eq.s32.totalorder %s24, 0
      %p245 = por %p243, %p244
      %s247 = sadd.s32 %s246, 1
      %p250 = scmp.eq.s32.totalorder %s18, 3
      %p251 = scmp.ne.s32.totalorder %s246, %s248
      %p252 = scmp.eq.s32.totalorder %s18, 0
      %p253 = por %p251, %p252
      %p254 = scmp.ne.s32.totalorder %s246, %s248
      %p255 = scmp.eq.s32.totalorder %s23, 3
      %p256 = por %p254, %p255
      %p257 = scmp.ne.s32.totalorder %s248, %s249
      %p258 = scmp.eq.s32.totalorder %s23, 0
      %p259 = por %p257, %p258
      %p260 = scmp.ne.s32.totalorder %s248, %s249
      %p261 = scmp.eq.s32.totalorder %s24, 3
      %p262 = por %p260, %p261
      %p264 = scmp.ne.s32.totalorder %s249, %s263
      %p265 = scmp.eq.s32.totalorder %s24, 0
      %p266 = por %p264, %p265
      %s267 = ssub.s32 %s25, %s37
      %p268 = scmp.eq.s32.totalorder %s267, 0
      %s270 = sadd.s32 %s269, 1
      %s271 = scalar_select %p268, %s269, %s270
      %p274 = pneg %p268
      %p275 = scmp.eq.s32.totalorder %s18, 3
      %p276 = por %p274, %p275
      %p277 = scmp.ne.s32.totalorder %s269, %s272
      %p278 = scmp.eq.s32.totalorder %s18, 0
      %p279 = por %p277, %p278
      %p280 = scmp.ne.s32.totalorder %s269, %s272
      %p281 = scmp.eq.s32.totalorder %s23, 3
      %p282 = por %p280, %p281
      %p283 = scmp.ne.s32.totalorder %s272, %s273
      %p284 = scmp.eq.s32.totalorder %s23, 0
      %p285 = por %p283, %p284
      %p286 = scmp.ne.s32.totalorder %s272, %s273
      %p287 = scmp.eq.s32.totalorder %s24, 3
      %p288 = por %p286, %p287
      %p290 = scmp.ne.s32.totalorder %s273, %s289
      %p291 = scmp.eq.s32.totalorder %s24, 0
      %p292 = por %p290, %p291
      %p293 = scmp.le.s32.totalorder 1, %s18
      %p294 = scmp.lt.s32.totalorder %s18, 5
      %p295 = pnand %p293, %p294
      %p296 = pneg %p295
      // Predicated region
      $region9: #{transformer_forward.3} parent=5 // pred_check
        _
      $region10: #{transformer_forward.3} parent=5 // pred_check_branch
        %298 = sbr.rel (%p295) target = $region12
      $region11: #{transformer_forward.3} parent=5 // pred_region
        %s299 = ssub.s32 %s18, 1
        // Predicated region
        $region13: #{transformer_forward.3} parent=11 // pred_check
          %p300 = pneg %p259
        $region14: #{transformer_forward.3} parent=11 // pred_check_branch
          %302 = sbr.rel (%p300) target = $region16
        $region15: #{transformer_forward.3} parent=11 // pred_region
          _
        $region16: #{transformer_forward.3} parent=11 // pred_fallthru
          _
      $region12: #{transformer_forward.3} parent=5 // pred_fallthru
        _
      %p303 = scmp.lt.s32.totalorder %s18, 4
      // Predicated region
      $region17: #{transformer_forward.3} parent=5 // pred_check
        %p304 = pneg %p303
      $region18: #{transformer_forward.3} parent=5 // pred_check_branch
        %306 = sbr.rel (%p304) target = $region20
      $region19: #{transformer_forward.3} parent=5 // pred_region
        // Predicated region
        $region21: #{transformer_forward.3} parent=19 // pred_check
          %p307 = pneg %p50
        $region22: #{transformer_forward.3} parent=19 // pred_check_branch
          %309 = sbr.rel (%p307) target = $region24
        $region23: #{transformer_forward.3} parent=19 // pred_region
          %p310 = scmp.lt.s32.totalorder %s25, 1
          %s311 = scalar_select %p310, %s25, 1
          %s312 = smul.addr %s311, 8
          %s313 = scalar_lea.vmem %s0, %s312
        $region24: #{transformer_forward.3} parent=19 // pred_fallthru
          _
        // Predicated region
        $region25: #{transformer_forward.3} parent=19 // pred_check
          %p314 = pneg %p76
        $region26: #{transformer_forward.3} parent=19 // pred_check_branch
          %316 = sbr.rel (%p314) target = $region28
        $region27: #{transformer_forward.3} parent=19 // pred_region
          %p317 = scmp.lt.s32.totalorder %s25, 1
          %s318 = scalar_select %p317, %s25, 1
          %s319 = smul.addr %s318, 8
          %s320 = scalar_lea.vmem %s1, %s319
        $region28: #{transformer_forward.3} parent=19 // pred_fallthru
          _
        // Predicated region
        $region29: #{transformer_forward.3} parent=19 // pred_check
          %p321 = pneg %p102
        $region30: #{transformer_forward.3} parent=19 // pred_check_branch
          %323 = sbr.rel (%p321) target = $region32
        $region31: #{transformer_forward.3} parent=19 // pred_region
          %p324 = scmp.lt.s32.totalorder %s25, 1
          %s325 = scalar_select %p324, %s25, 1
          %s326 = smul.addr %s325, 8
          %s327 = scalar_lea.vmem %s2, %s326
        $region32: #{transformer_forward.3} parent=19 // pred_fallthru
          _
        // Predicated region
        $region33: #{transformer_forward.3} parent=19 // pred_check
          %p328 = pneg %p128
        $region34: #{transformer_forward.3} parent=19 // pred_check_branch
          %330 = sbr.rel (%p328) target = $region36
        $region35: #{transformer_forward.3} parent=19 // pred_region
          %p331 = scmp.lt.s32.totalorder %s25, 1
          %s332 = scalar_select %p331, %s25, 1
          %s333 = smul.addr %s332, 8
          %s334 = scalar_lea.vmem %s3, %s333
        $region36: #{transformer_forward.3} parent=19 // pred_fallthru
          _
        // Predicated region
        $region37: #{transformer_forward.3} parent=19 // pred_check
          %p335 = pneg %p154
        $region38: #{transformer_forward.3} parent=19 // pred_check_branch
          %337 = sbr.rel (%p335) target = $region40
        $region39: #{transformer_forward.3} parent=19 // pred_region
          %p338 = scmp.lt.s32.totalorder %s26, 1
          %s339 = scalar_select %p338, %s26, 1
          %s340 = smul.addr %s339, 96
          %s341 = smul.addr %s340, 4
          %s342 = scalar_lea.vmem %s4, %s341
        $region40: #{transformer_forward.3} parent=19 // pred_fallthru
          _
        // Predicated region
        $region41: #{transformer_forward.3} parent=19 // pred_check
          %p343 = pneg %p180
        $region42: #{transformer_forward.3} parent=19 // pred_check_branch
          %345 = sbr.rel (%p343) target = $region44
        $region43: #{transformer_forward.3} parent=19 // pred_region
          %p346 = scmp.lt.s32.totalorder %s26, 1
          %s347 = scalar_select %p346, %s26, 1
          %s348 = smul.addr %s347, 8
          %s349 = smul.addr %s348, 4
          %s350 = scalar_lea.vmem %s5, %s349
        $region44: #{transformer_forward.3} parent=19 // pred_fallthru
          _
        // Predicated region
        $region45: #{transformer_forward.3} parent=19 // pred_check
          %p351 = pneg %p206
        $region46: #{transformer_forward.3} parent=19 // pred_check_branch
          %353 = sbr.rel (%p351) target = $region48
        $region47: #{transformer_forward.3} parent=19 // pred_region
          %p354 = scmp.lt.s32.totalorder %s26, 1
          %s355 = scalar_select %p354, %s26, 1
          %s356 = smul.addr %s355, 8
          %s357 = smul.addr %s356, 4
          %s358 = scalar_lea.vmem %s6, %s357
        $region48: #{transformer_forward.3} parent=19 // pred_fallthru
          _
        // Predicated region
        $region49: #{transformer_forward.3} parent=19 // pred_check
          %p359 = pneg %p232
        $region50: #{transformer_forward.3} parent=19 // pred_check_branch
          %361 = sbr.rel (%p359) target = $region52
        $region51: #{transformer_forward.3} parent=19 // pred_region
          %p362 = scmp.lt.s32.totalorder %s26, 1
          %s363 = scalar_select %p362, %s26, 1
          %s364 = smul.addr %s363, 2
          %s365 = smul.addr %s364, 8
          %s366 = scalar_lea.vmem %s7, %s365
        $region52: #{transformer_forward.3} parent=19 // pred_fallthru
          _
      $region20: #{transformer_forward.3} parent=5 // pred_fallthru
        _
      %p367 = scmp.le.s32.totalorder 1, %s18
      %p368 = scmp.lt.s32.totalorder %s18, 5
      %p369 = pnand %p367, %p368
      %p370 = pneg %p369
      // Predicated region
      $region53: #{transformer_forward.3} parent=5 // pred_check
        _
      $region54: #{transformer_forward.3} parent=5 // pred_check_branch
        %372 = sbr.rel (%p369) target = $region56
      $region55: #{transformer_forward.3} parent=5 // pred_region
        %s373 = ssub.s32 %s18, 1
        %p374 = scmp.lt.s32.totalorder %s27, 1
        %s375 = scalar_select %p374, %s27, 1
        %s376 = smul.addr %s375, 8
        %s377 = scalar_lea.vmem %s0, %s376
        %p378 = pneg %p56
        %p379 = pneg %p53
        %p380 = scmp.lt.s32.totalorder %s27, 1
        %s381 = scalar_select %p380, %s27, 1
        %s382 = smul.addr %s381, 8
        %s383 = scalar_lea.vmem %s1, %s382
        %p384 = pneg %p82
        %p385 = pneg %p79
        %p386 = scmp.lt.s32.totalorder %s27, 1
        %s387 = scalar_select %p386, %s27, 1
        %s388 = smul.addr %s387, 8
        %s389 = scalar_lea.vmem %s2, %s388
        %p390 = pneg %p108
        %p391 = pneg %p105
        %p392 = scmp.lt.s32.totalorder %s27, 1
        %s393 = scalar_select %p392, %s27, 1
        %s394 = smul.addr %s393, 8
        %s395 = scalar_lea.vmem %s3, %s394
        %p396 = pneg %p134
        %p397 = pneg %p131
        %p398 = scmp.lt.s32.totalorder %s28, 1
        %s399 = scalar_select %p398, %s28, 1
        %s400 = smul.addr %s399, 96
        %s401 = smul.addr %s400, 4
        %s402 = scalar_lea.vmem %s4, %s401
        %p403 = pneg %p160
        %p404 = pneg %p157
        %p405 = scmp.lt.s32.totalorder %s28, 1
        %s406 = scalar_select %p405, %s28, 1
        %s407 = smul.addr %s406, 8
        %s408 = smul.addr %s407, 4
        %s409 = scalar_lea.vmem %s5, %s408
        %p410 = pneg %p186
        %p411 = pneg %p183
        %p412 = scmp.lt.s32.totalorder %s28, 1
        %s413 = scalar_select %p412, %s28, 1
        %s414 = smul.addr %s413, 8
        %s415 = smul.addr %s414, 4
        %s416 = scalar_lea.vmem %s6, %s415
        %p417 = pneg %p212
        %p418 = pneg %p209
        %p419 = scmp.lt.s32.totalorder %s28, 1
        %s420 = scalar_select %p419, %s28, 1
        %s421 = smul.addr %s420, 2
        %s422 = smul.addr %s421, 8
        %s423 = scalar_lea.vmem %s7, %s422
        %p424 = pneg %p238
        %p425 = pneg %p235
        %p426 = pneg %p259
        %p427 = pneg %p256
        %p428 = pneg %p285
        %p429 = pneg %p282
        %s430 = sand.u32 %s272, 1
        %s431 = scalar_lea.sflag [#allocation4], %s430
        %s432 = sand.u32 %s272, 1
        %s433 = smul.addr %s432, 8
        %s434 = scalar_lea.vmem [#allocation3], %s433
        %p435 = scmp.lt.s32.totalorder %s27, 1
        %s436 = scalar_select %p435, %s27, 1
        %s437 = smul.addr %s436, 8
        %s438 = scalar_lea.vmem %s0, %s437
        %p439 = scmp.lt.s32.totalorder %s27, 1
        %s440 = scalar_select %p439, %s27, 1
        %s441 = smul.addr %s440, 8
        %s442 = scalar_lea.vmem %s1, %s441
        %p443 = scmp.lt.s32.totalorder %s27, 1
        %s444 = scalar_select %p443, %s27, 1
        %s445 = smul.addr %s444, 8
        %s446 = scalar_lea.vmem %s2, %s445
        %p447 = scmp.lt.s32.totalorder %s27, 1
        %s448 = scalar_select %p447, %s27, 1
        %s449 = smul.addr %s448, 8
        %s450 = scalar_lea.vmem %s3, %s449
        %p451 = scmp.lt.s32.totalorder %s28, 1
        %s452 = scalar_select %p451, %s28, 1
        %s453 = smul.addr %s452, 96
        %s454 = smul.addr %s453, 4
        %s455 = scalar_lea.vmem %s4, %s454
        %p456 = scmp.lt.s32.totalorder %s28, 1
        %s457 = scalar_select %p456, %s28, 1
        %s458 = smul.addr %s457, 8
        %s459 = smul.addr %s458, 4
        %s460 = scalar_lea.vmem %s5, %s459
        %p461 = scmp.lt.s32.totalorder %s28, 1
        %s462 = scalar_select %p461, %s28, 1
        %s463 = smul.addr %s462, 8
        %s464 = smul.addr %s463, 4
        %s465 = scalar_lea.vmem %s6, %s464
        %p466 = scmp.lt.s32.totalorder %s28, 1
        %s467 = scalar_select %p466, %s28, 1
        %s468 = smul.addr %s467, 2
        %s469 = smul.addr %s468, 8
        %s470 = scalar_lea.vmem %s7, %s469
        %p472 = scmp.eq.s32.totalorder %s28, 0
        // Predicated region
        $region57: #{transformer_forward.3} parent=55 // pred_check
          %p473 = pneg %p472
        $region58: #{transformer_forward.3} parent=55 // pred_check_branch
          %475 = sbr.rel (%p473) target = $region60
        $region59: #{transformer_forward.3} parent=55 // pred_region
          %v476 = vld [vmem:[%s438] sm:$0xff]
          %vm477 = vcmask 261120
          %478 = vst.msk [vmem:[#allocation2] sm:$0xff] %vm477, %v476
        $region60: #{transformer_forward.3} parent=55 // pred_fallthru
          _
        %v479 = vld [vmem:[#allocation2] sm:$0xff]
        %v480 = vld [vmem:[%s442] sm:$0xff]
        %v481 = vld [vmem:[%s470] sm:$0xff]
        %v482 = vld [vmem:[%s470 + $0x8] sm:$0x1]
        %v483 = vld [vmem:[%s455] sm:$0xf]
        %v484 = vld [vmem:[%s455 + $0x4] sm:$0xf]
        %v485 = vld [vmem:[%s455 + $0x8] sm:$0xf]
        %v486 = vld [vmem:[%s455 + $0xc] sm:$0xf]
        %v487 = vld [vmem:[%s455 + $0x10] sm:$0xf]
        %v488 = vld [vmem:[%s455 + $0x14] sm:$0xf]
        %v489 = vld [vmem:[%s455 + $0x18] sm:$0xf]
        %v490 = vld [vmem:[%s455 + $0x1c] sm:$0xf]
        %v491 = vld [vmem:[%s455 + $0x20] sm:$0xf]
        %v492 = vld [vmem:[%s455 + $0x24] sm:$0xf]
        %v493 = vld [vmem:[%s455 + $0x28] sm:$0xf]
        %v494 = vld [vmem:[%s455 + $0x2c] sm:$0xf]
        %v495 = vld [vmem:[%s455 + $0x30] sm:$0xf]
        %v496 = vld [vmem:[%s455 + $0x34] sm:$0xf]
        %v497 = vld [vmem:[%s455 + $0x38] sm:$0xf]
        %v498 = vld [vmem:[%s455 + $0x3c] sm:$0xf]
        %v499 = vld [vmem:[%s455 + $0x40] sm:$0xf]
        %v500 = vld [vmem:[%s455 + $0x44] sm:$0xf]
        %v501 = vld [vmem:[%s455 + $0x48] sm:$0xf]
        %v502 = vld [vmem:[%s455 + $0x4c] sm:$0xf]
        %v503 = vld [vmem:[%s455 + $0x50] sm:$0xf]
        %v504 = vld [vmem:[%s455 + $0x54] sm:$0xf]
        %v505 = vld [vmem:[%s455 + $0x58] sm:$0xf]
        %v506 = vld [vmem:[%s455 + $0x5c] sm:$0xf]
        %v507 = vld [vmem:[%s455 + $0x60] sm:$0xf]
        %v508 = vld [vmem:[%s455 + $0x64] sm:$0xf]
        %v509 = vld [vmem:[%s455 + $0x68] sm:$0xf]
        %v510 = vld [vmem:[%s455 + $0x6c] sm:$0xf]
        %v511 = vld [vmem:[%s455 + $0x70] sm:$0xf]
        %v512 = vld [vmem:[%s455 + $0x74] sm:$0xf]
        %v513 = vld [vmem:[%s455 + $0x78] sm:$0xf]
        %v514 = vld [vmem:[%s455 + $0x7c] sm:$0xf]
        %v515 = vld [vmem:[%s455 + $0x80] sm:$0xf]
        %v516 = vld [vmem:[%s455 + $0x84] sm:$0xf]
        %v517 = vld [vmem:[%s455 + $0x88] sm:$0xf]
        %v518 = vld [vmem:[%s455 + $0x8c] sm:$0xf]
        %v519 = vld [vmem:[%s455 + $0x90] sm:$0xf]
        %v520 = vld [vmem:[%s455 + $0x94] sm:$0xf]
        %v521 = vld [vmem:[%s455 + $0x98] sm:$0xf]
        %v522 = vld [vmem:[%s455 + $0x9c] sm:$0xf]
        %v523 = vld [vmem:[%s455 + $0xa0] sm:$0xf]
        %v524 = vld [vmem:[%s455 + $0xa4] sm:$0xf]
        %v525 = vld [vmem:[%s455 + $0xa8] sm:$0xf]
        %v526 = vld [vmem:[%s455 + $0xac] sm:$0xf]
        %v527 = vld [vmem:[%s455 + $0xb0] sm:$0xf]
        %v528 = vld [vmem:[%s455 + $0xb4] sm:$0xf]
        %v529 = vld [vmem:[%s455 + $0xb8] sm:$0xf]
        %v530 = vld [vmem:[%s455 + $0xbc] sm:$0xf]
        %v531 = vld [vmem:[%s455 + $0xc0] sm:$0xf]
        %v532 = vld [vmem:[%s455 + $0xc4] sm:$0xf]
        %v533 = vld [vmem:[%s455 + $0xc8] sm:$0xf]
        %v534 = vld [vmem:[%s455 + $0xcc] sm:$0xf]
        %v535 = vld [vmem:[%s455 + $0xd0] sm:$0xf]
        %v536 = vld [vmem:[%s455 + $0xd4] sm:$0xf]
        %v537 = vld [vmem:[%s455 + $0xd8] sm:$0xf]
        %v538 = vld [vmem:[%s455 + $0xdc] sm:$0xf]
        %v539 = vld [vmem:[%s455 + $0xe0] sm:$0xf]
        %v540 = vld [vmem:[%s455 + $0xe4] sm:$0xf]
        %v541 = vld [vmem:[%s455 + $0xe8] sm:$0xf]
        %v542 = vld [vmem:[%s455 + $0xec] sm:$0xf]
        %v543 = vld [vmem:[%s455 + $0xf0] sm:$0xf]
        %v544 = vld [vmem:[%s455 + $0xf4] sm:$0xf]
        %v545 = vld [vmem:[%s455 + $0xf8] sm:$0xf]
        %v546 = vld [vmem:[%s455 + $0xfc] sm:$0xf]
        %v547 = vld [vmem:[%s455 + $0x100] sm:$0xf]
        %v548 = vld [vmem:[%s455 + $0x104] sm:$0xf]
        %v549 = vld [vmem:[%s455 + $0x108] sm:$0xf]
        %v550 = vld [vmem:[%s455 + $0x10c] sm:$0xf]
        %v551 = vld [vmem:[%s455 + $0x110] sm:$0xf]
        %v552 = vld [vmem:[%s455 + $0x114] sm:$0xf]
        %v553 = vld [vmem:[%s455 + $0x118] sm:$0xf]
        %v554 = vld [vmem:[%s455 + $0x11c] sm:$0xf]
        %v555 = vld [vmem:[%s455 + $0x120] sm:$0xf]
        %v556 = vld [vmem:[%s455 + $0x124] sm:$0xf]
        %v557 = vld [vmem:[%s455 + $0x128] sm:$0xf]
        %v558 = vld [vmem:[%s455 + $0x12c] sm:$0xf]
        %v559 = vld [vmem:[%s455 + $0x130] sm:$0xf]
        %v560 = vld [vmem:[%s455 + $0x134] sm:$0xf]
        %v561 = vld [vmem:[%s455 + $0x138] sm:$0xf]
        %v562 = vld [vmem:[%s455 + $0x13c] sm:$0xf]
        %v563 = vld [vmem:[%s455 + $0x140] sm:$0xf]
        %v564 = vld [vmem:[%s455 + $0x144] sm:$0xf]
        %v565 = vld [vmem:[%s455 + $0x148] sm:$0xf]
        %v566 = vld [vmem:[%s455 + $0x14c] sm:$0xf]
        %v567 = vld [vmem:[%s455 + $0x150] sm:$0xf]
        %v568 = vld [vmem:[%s455 + $0x154] sm:$0xf]
        %v569 = vld [vmem:[%s455 + $0x158] sm:$0xf]
        %v570 = vld [vmem:[%s455 + $0x15c] sm:$0xf]
        %v571 = vld [vmem:[%s455 + $0x160] sm:$0xf]
        %v572 = vld [vmem:[%s455 + $0x164] sm:$0xf]
        %v573 = vld [vmem:[%s455 + $0x168] sm:$0xf]
        %v574 = vld [vmem:[%s455 + $0x16c] sm:$0xf]
        %v575 = vld [vmem:[%s455 + $0x170] sm:$0xf]
        %v576 = vld [vmem:[%s455 + $0x174] sm:$0xf]
        %v577 = vld [vmem:[%s455 + $0x178] sm:$0xf]
        %v578 = vld [vmem:[%s455 + $0x17c] sm:$0xf]
        %v579 = vld [vmem:[%s460] sm:$0xf]
        %v580 = vld [vmem:[%s460 + $0x4] sm:$0xf]
        %v581 = vld [vmem:[%s460 + $0x8] sm:$0xf]
        %v582 = vld [vmem:[%s460 + $0xc] sm:$0xf]
        %v583 = vld [vmem:[%s460 + $0x10] sm:$0xf]
        %v584 = vld [vmem:[%s460 + $0x14] sm:$0xf]
        %v585 = vld [vmem:[%s460 + $0x18] sm:$0xf]
        %v586 = vld [vmem:[%s460 + $0x1c] sm:$0xf]
        %v587 = vpack.c.bf16 %v479, %v479
        %v592 = vunpack.c.l.b16 %v483
        %v593 = vunpack.c.l.b16 %v484
        %v594 = vunpack.c.l.b16 %v485
        %v595 = vunpack.c.l.b16 %v486
        %v596 = vpack.c.b16 %v593, %v592
        %v597 = vpack.c.b16 %v595, %v594
        %vm600 = vcmask 261120
        %v602 = vsel %vm600, %v587, 0
        %604 = vmatprep.subr.bf16.mxu0 0
        %605 = vmatpush1.bf16.msra.mxu0 %v596
        %606 = vmatprep.subr.bf16.mxu0 0
        %607 = vmatpush1.bf16.msra.mxu0 %v597
        %608 = vmatprep.subr.bf16.mxu0 0
        %609 = vmatpush1.bf16.msra.mxu0 0
        %610 = vmatprep.subr.bf16.mxu0 0
        %611 = vmatpush1.bf16.msra.mxu0 0
        %612 = vmatprep.subr.bf16.mxu0 0
        %613 = vmatpush1.bf16.msra.mxu0 0
        %614 = vmatprep.subr.bf16.mxu0 0
        %615 = vmatpush1.bf16.msra.mxu0 0
        %616 = vmatprep.subr.bf16.mxu0 0
        %617 = vmatpush1.bf16.msra.mxu0 0
        %618 = vmatprep.subr.bf16.mxu0 0
        %619 = vmatpush1.bf16.msra.mxu0 0
        %620 = vmatprep.subr.bf16.mxu0 0
        %621 = vmatpush1.bf16.msra.mxu0 0
        %622 = vmatprep.subr.bf16.mxu0 0
        %623 = vmatpush1.bf16.msra.mxu0 0
        %624 = vmatprep.subr.bf16.mxu0 0
        %625 = vmatpush1.bf16.msra.mxu0 0
        %626 = vmatprep.subr.bf16.mxu0 0
        %627 = vmatpush1.bf16.msra.mxu0 0
        %628 = vmatprep.subr.bf16.mxu0 0
        %629 = vmatpush1.bf16.msra.mxu0 0
        %630 = vmatprep.subr.bf16.mxu0 0
        %631 = vmatpush1.bf16.msra.mxu0 0
        %632 = vmatprep.subr.bf16.mxu0 0
        %633 = vmatpush1.bf16.msra.mxu0 0
        %634 = vmatprep.subr.bf16.mxu0 0
        %635 = vmatpush1.bf16.msra.mxu0 0
        %636 = vmatprep.mubr.bf16.mxu0 0
        %637 = vmatmul.mubr.bf16.gmra.mrb[0].mxu0 %v602
        %v638 = vpop.f32.mrb[0].mxu0
        %v639 = vadd.f32 0.0, %v638
        %v640 = vpop.f32.mrb[0].mxu0
        %v641 = vpop.f32.mrb[0].mxu0
        %v642 = vpop.f32.mrb[0].mxu0
        %643 = vdwg.mxu0
        %v648 = vunpack.c.l.b16 %v487
        %v649 = vunpack.c.l.b16 %v488
        %v650 = vunpack.c.l.b16 %v489
        %v651 = vunpack.c.l.b16 %v490
        %v652 = vpack.c.b16 %v649, %v648
        %v653 = vpack.c.b16 %v651, %v650
        %656 = vmatprep.subr.bf16.mxu0 0
        %657 = vmatpush1.bf16.msra.mxu0 %v652
        %658 = vmatprep.subr.bf16.mxu0 0
        %659 = vmatpush1.bf16.msra.mxu0 %v653
        %660 = vmatprep.subr.bf16.mxu0 0
        %661 = vmatpush1.bf16.msra.mxu0 0
        %662 = vmatprep.subr.bf16.mxu0 0
        %663 = vmatpush1.bf16.msra.mxu0 0
        %664 = vmatprep.subr.bf16.mxu0 0
        %665 = vmatpush1.bf16.msra.mxu0 0
        %666 = vmatprep.subr.bf16.mxu0 0
        %667 = vmatpush1.bf16.msra.mxu0 0
        %668 = vmatprep.subr.bf16.mxu0 0
        %669 = vmatpush1.bf16.msra.mxu0 0
        %670 = vmatprep.subr.bf16.mxu0 0
        %671 = vmatpush1.bf16.msra.mxu0 0
        %672 = vmatprep.subr.bf16.mxu0 0
        %673 = vmatpush1.bf16.msra.mxu0 0
        %674 = vmatprep.subr.bf16.mxu0 0
        %675 = vmatpush1.bf16.msra.mxu0 0
        %676 = vmatprep.subr.bf16.mxu0 0
        %677 = vmatpush1.bf16.msra.mxu0 0
        %678 = vmatprep.subr.bf16.mxu0 0
        %679 = vmatpush1.bf16.msra.mxu0 0
        %680 = vmatprep.subr.bf16.mxu0 0
        %681 = vmatpush1.bf16.msra.mxu0 0
        %682 = vmatprep.subr.bf16.mxu0 0
        %683 = vmatpush1.bf16.msra.mxu0 0
        %684 = vmatprep.subr.bf16.mxu0 0
        %685 = vmatpush1.bf16.msra.mxu0 0
        %686 = vmatprep.subr.bf16.mxu0 0
        %687 = vmatpush1.bf16.msra.mxu0 0
        %688 = vmatprep.mubr.bf16.mxu0 0
        %689 = vmatmul.mubr.bf16.gmra.mrb[0].mxu0 %v602
        %v690 = vpop.f32.mrb[0].mxu0
        %v691 = vadd.f32 0.0, %v690
        %v692 = vpop.f32.mrb[0].mxu0
        %v693 = vpop.f32.mrb[0].mxu0
        %v694 = vpop.f32.mrb[0].mxu0
        %695 = vdwg.mxu0
        %v700 = vunpack.c.l.b16 %v491
        %v701 = vunpack.c.l.b16 %v492
        %v702 = vunpack.c.l.b16 %v493
        %v703 = vunpack.c.l.b16 %v494
        %v704 = vpack.c.b16 %v701, %v700
        %v705 = vpack.c.b16 %v703, %v702
        %708 = vmatprep.subr.bf16.mxu0 0
        %709 = vmatpush1.bf16.msra.mxu0 %v704
        %710 = vmatprep.subr.bf16.mxu0 0
        %711 = vmatpush1.bf16.msra.mxu0 %v705
        %712 = vmatprep.subr.bf16.mxu0 0
        %713 = vmatpush1.bf16.msra.mxu0 0
        %714 = vmatprep.subr.bf16.mxu0 0
        %715 = vmatpush1.bf16.msra.mxu0 0
        %716 = vmatprep.subr.bf16.mxu0 0
        %717 = vmatpush1.bf16.msra.mxu0 0
        %718 = vmatprep.subr.bf16.mxu0 0
        %719 = vmatpush1.bf16.msra.mxu0 0
        %720 = vmatprep.subr.bf16.mxu0 0
        %721 = vmatpush1.bf16.msra.mxu0 0
        %722 = vmatprep.subr.bf16.mxu0 0
        %723 = vmatpush1.bf16.msra.mxu0 0
        %724 = vmatprep.subr.bf16.mxu0 0
        %725 = vmatpush1.bf16.msra.mxu0 0
        %726 = vmatprep.subr.bf16.mxu0 0
        %727 = vmatpush1.bf16.msra.mxu0 0
        %728 = vmatprep.subr.bf16.mxu0 0
        %729 = vmatpush1.bf16.msra.mxu0 0
        %730 = vmatprep.subr.bf16.mxu0 0
        %731 = vmatpush1.bf16.msra.mxu0 0
        %732 = vmatprep.subr.bf16.mxu0 0
        %733 = vmatpush1.bf16.msra.mxu0 0
        %734 = vmatprep.subr.bf16.mxu0 0
        %735 = vmatpush1.bf16.msra.mxu0 0
        %736 = vmatprep.subr.bf16.mxu0 0
        %737 = vmatpush1.bf16.msra.mxu0 0
        %738 = vmatprep.subr.bf16.mxu0 0
        %739 = vmatpush1.bf16.msra.mxu0 0
        %740 = vmatprep.mubr.bf16.mxu0 0
        %741 = vmatmul.mubr.bf16.gmra.mrb[0].mxu0 %v602
        %v742 = vpop.f32.mrb[0].mxu0
        %v743 = vadd.f32 0.0, %v742
        %v744 = vpop.f32.mrb[0].mxu0
        %v745 = vpop.f32.mrb[0].mxu0
        %v746 = vpop.f32.mrb[0].mxu0
        %747 = vdwg.mxu0
        %v752 = vunpack.c.l.b16 %v495
        %v753 = vunpack.c.l.b16 %v496
        %v754 = vunpack.c.l.b16 %v497
        %v755 = vunpack.c.l.b16 %v498
        %v756 = vpack.c.b16 %v753, %v752
        %v757 = vpack.c.b16 %v755, %v754
        %760 = vmatprep.subr.bf16.mxu0 0
        %761 = vmatpush1.bf16.msra.mxu0 %v756
        %762 = vmatprep.subr.bf16.mxu0 0
        %763 = vmatpush1.bf16.msra.mxu0 %v757
        %764 = vmatprep.subr.bf16.mxu0 0
        %765 = vmatpush1.bf16.msra.mxu0 0
        %766 = vmatprep.subr.bf16.mxu0 0
        %767 = vmatpush1.bf16.msra.mxu0 0
        %768 = vmatprep.subr.bf16.mxu0 0
        %769 = vmatpush1.bf16.msra.mxu0 0
        %770 = vmatprep.subr.bf16.mxu0 0
        %771 = vmatpush1.bf16.msra.mxu0 0
        %772 = vmatprep.subr.bf16.mxu0 0
        %773 = vmatpush1.bf16.msra.mxu0 0
        %774 = vmatprep.subr.bf16.mxu0 0
        %775 = vmatpush1.bf16.msra.mxu0 0
        %776 = vmatprep.subr.bf16.mxu0 0
        %777 = vmatpush1.bf16.msra.mxu0 0
        %778 = vmatprep.subr.bf16.mxu0 0
        %779 = vmatpush1.bf16.msra.mxu0 0
        %780 = vmatprep.subr.bf16.mxu0 0
        %781 = vmatpush1.bf16.msra.mxu0 0
        %782 = vmatprep.subr.bf16.mxu0 0
        %783 = vmatpush1.bf16.msra.mxu0 0
        %784 = vmatprep.subr.bf16.mxu0 0
        %785 = vmatpush1.bf16.msra.mxu0 0
        %786 = vmatprep.subr.bf16.mxu0 0
        %787 = vmatpush1.bf16.msra.mxu0 0
        %788 = vmatprep.subr.bf16.mxu0 0
        %789 = vmatpush1.bf16.msra.mxu0 0
        %790 = vmatprep.subr.bf16.mxu0 0
        %791 = vmatpush1.bf16.msra.mxu0 0
        %792 = vmatprep.mubr.bf16.mxu0 0
        %793 = vmatmul.mubr.bf16.gmra.mrb[0].mxu0 %v602
        %v794 = vpop.f32.mrb[0].mxu0
        %v795 = vadd.f32 0.0, %v794
        %v796 = vpop.f32.mrb[0].mxu0
        %v797 = vpop.f32.mrb[0].mxu0
        %v798 = vpop.f32.mrb[0].mxu0
        %799 = vdwg.mxu0
        %v804 = vunpack.c.l.b16 %v499
        %v805 = vunpack.c.l.b16 %v500
        %v806 = vunpack.c.l.b16 %v501
        %v807 = vunpack.c.l.b16 %v502
        %v808 = vpack.c.b16 %v805, %v804
        %v809 = vpack.c.b16 %v807, %v806
        %812 = vmatprep.subr.bf16.mxu0 0
        %813 = vmatpush1.bf16.msra.mxu0 %v808
        %814 = vmatprep.subr.bf16.mxu0 0
        %815 = vmatpush1.bf16.msra.mxu0 %v809
        %816 = vmatprep.subr.bf16.mxu0 0
        %817 = vmatpush1.bf16.msra.mxu0 0
        %818 = vmatprep.subr.bf16.mxu0 0
        %819 = vmatpush1.bf16.msra.mxu0 0
        %820 = vmatprep.subr.bf16.mxu0 0
        %821 = vmatpush1.bf16.msra.mxu0 0
        %822 = vmatprep.subr.bf16.mxu0 0
        %823 = vmatpush1.bf16.msra.mxu0 0
        %824 = vmatprep.subr.bf16.mxu0 0
        %825 = vmatpush1.bf16.msra.mxu0 0
        %826 = vmatprep.subr.bf16.mxu0 0
        %827 = vmatpush1.bf16.msra.mxu0 0
        %828 = vmatprep.subr.bf16.mxu0 0
        %829 = vmatpush1.bf16.msra.mxu0 0
        %830 = vmatprep.subr.bf16.mxu0 0
        %831 = vmatpush1.bf16.msra.mxu0 0
        %832 = vmatprep.subr.bf16.mxu0 0
        %833 = vmatpush1.bf16.msra.mxu0 0
        %834 = vmatprep.subr.bf16.mxu0 0
        %835 = vmatpush1.bf16.msra.mxu0 0
        %836 = vmatprep.subr.bf16.mxu0 0
        %837 = vmatpush1.bf16.msra.mxu0 0
        %838 = vmatprep.subr.bf16.mxu0 0
        %839 = vmatpush1.bf16.msra.mxu0 0
        %840 = vmatprep.subr.bf16.mxu0 0
        %841 = vmatpush1.bf16.msra.mxu0 0
        %842 = vmatprep.subr.bf16.mxu0 0
        %843 = vmatpush1.bf16.msra.mxu0 0
        %844 = vmatprep.mubr.bf16.mxu0 0
        %845 = vmatmul.mubr.bf16.gmra.mrb[0].mxu0 %v602
        %v846 = vpop.f32.mrb[0].mxu0
        %v847 = vadd.f32 0.0, %v846
        %v848 = vpop.f32.mrb[0].mxu0
        %v849 = vpop.f32.mrb[0].mxu0
        %v850 = vpop.f32.mrb[0].mxu0
        %851 = vdwg.mxu0
        %v856 = vunpack.c.l.b16 %v503
        %v857 = vunpack.c.l.b16 %v504
        %v858 = vunpack.c.l.b16 %v505
        %v859 = vunpack.c.l.b16 %v506
        %v860 = vpack.c.b16 %v857, %v856
        %v861 = vpack.c.b16 %v859, %v858
        %864 = vmatprep.subr.bf16.mxu0 0
        %865 = vmatpush1.bf16.msra.mxu0 %v860
        %866 = vmatprep.subr.bf16.mxu0 0
        %867 = vmatpush1.bf16.msra.mxu0 %v861
        %868 = vmatprep.subr.bf16.mxu0 0
        %869 = vmatpush1.bf16.msra.mxu0 0
        %870 = vmatprep.subr.bf16.mxu0 0
        %871 = vmatpush1.bf16.msra.mxu0 0
        %872 = vmatprep.subr.bf16.mxu0 0
        %873 = vmatpush1.bf16.msra.mxu0 0
        %874 = vmatprep.subr.bf16.mxu0 0
        %875 = vmatpush1.bf16.msra.mxu0 0
        %876 = vmatprep.subr.bf16.mxu0 0
        %877 = vmatpush1.bf16.msra.mxu0 0
        %878 = vmatprep.subr.bf16.mxu0 0
        %879 = vmatpush1.bf16.msra.mxu0 0
        %880 = vmatprep.subr.bf16.mxu0 0
        %881 = vmatpush1.bf16.msra.mxu0 0
        %882 = vmatprep.subr.bf16.mxu0 0
        %883 = vmatpush1.bf16.msra.mxu0 0
        %884 = vmatprep.subr.bf16.mxu0 0
        %885 = vmatpush1.bf16.msra.mxu0 0
        %886 = vmatprep.subr.bf16.mxu0 0
        %887 = vmatpush1.bf16.msra.mxu0 0
        %888 = vmatprep.subr.bf16.mxu0 0
        %889 = vmatpush1.bf16.msra.mxu0 0
        %890 = vmatprep.subr.bf16.mxu0 0
        %891 = vmatpush1.bf16.msra.mxu0 0
        %892 = vmatprep.subr.bf16.mxu0 0
        %893 = vmatpush1.bf16.msra.mxu0 0
        %894 = vmatprep.subr.bf16.mxu0 0
        %895 = vmatpush1.bf16.msra.mxu0 0
        %896 = vmatprep.mubr.bf16.mxu0 0
        %897 = vmatmul.mubr.bf16.gmra.mrb[0].mxu0 %v602
        %v898 = vpop.f32.mrb[0].mxu0
        %v899 = vadd.f32 0.0, %v898
        %v900 = vpop.f32.mrb[0].mxu0
        %v901 = vpop.f32.mrb[0].mxu0
        %v902 = vpop.f32.mrb[0].mxu0
        %903 = vdwg.mxu0
        %v908 = vunpack.c.l.b16 %v507
        %v909 = vunpack.c.l.b16 %v508
        %v910 = vunpack.c.l.b16 %v509
        %v911 = vunpack.c.l.b16 %v510
        %v912 = vpack.c.b16 %v909, %v908
        %v913 = vpack.c.b16 %v911, %v910
        %916 = vmatprep.subr.bf16.mxu0 0
        %917 = vmatpush1.bf16.msra.mxu0 %v912
        %918 = vmatprep.subr.bf16.mxu0 0
        %919 = vmatpush1.bf16.msra.mxu0 %v913
        %920 = vmatprep.subr.bf16.mxu0 0
        %921 = vmatpush1.bf16.msra.mxu0 0
        %922 = vmatprep.subr.bf16.mxu0 0
        %923 = vmatpush1.bf16.msra.mxu0 0
        %924 = vmatprep.subr.bf16.mxu0 0
        %925 = vmatpush1.bf16.msra.mxu0 0
        %926 = vmatprep.subr.bf16.mxu0 0
        %927 = vmatpush1.bf16.msra.mxu0 0
        %928 = vmatprep.subr.bf16.mxu0 0
        %929 = vmatpush1.bf16.msra.mxu0 0
        %930 = vmatprep.subr.bf16.mxu0 0
        %931 = vmatpush1.bf16.msra.mxu0 0
        %932 = vmatprep.subr.bf16.mxu0 0
        %933 = vmatpush1.bf16.msra.mxu0 0
        %934 = vmatprep.subr.bf16.mxu0 0
        %935 = vmatpush1.bf16.msra.mxu0 0
        %936 = vmatprep.subr.bf16.mxu0 0
        %937 = vmatpush1.bf16.msra.mxu0 0
        %938 = vmatprep.subr.bf16.mxu0 0
        %939 = vmatpush1.bf16.msra.mxu0 0
        %940 = vmatprep.subr.bf16.mxu0 0
        %941 = vmatpush1.bf16.msra.mxu0 0
        %942 = vmatprep.subr.bf16.mxu0 0
        %943 = vmatpush1.bf16.msra.mxu0 0
        %944 = vmatprep.subr.bf16.mxu0 0
        %945 = vmatpush1.bf16.msra.mxu0 0
        %946 = vmatprep.subr.bf16.mxu0 0
        %947 = vmatpush1.bf16.msra.mxu0 0
        %948 = vmatprep.mubr.bf16.mxu0 0
        %949 = vmatmul.mubr.bf16.gmra.mrb[0].mxu0 %v602
        %v950 = vpop.f32.mrb[0].mxu0
        %v951 = vadd.f32 0.0, %v950
        %v952 = vpop.f32.mrb[0].mxu0
        %v953 = vpop.f32.mrb[0].mxu0
        %v954 = vpop.f32.mrb[0].mxu0
        %955 = vdwg.mxu0
        %v960 = vunpack.c.l.b16 %v511
        %v961 = vunpack.c.l.b16 %v512
        %v962 = vunpack.c.l.b16 %v513
        %v963 = vunpack.c.l.b16 %v514
        %v964 = vpack.c.b16 %v961, %v960
        %v965 = vpack.c.b16 %v963, %v962
        %968 = vmatprep.subr.bf16.mxu0 0
        %969 = vmatpush1.bf16.msra.mxu0 %v964
        %970 = vmatprep.subr.bf16.mxu0 0
        %971 = vmatpush1.bf16.msra.mxu0 %v965
        %972 = vmatprep.subr.bf16.mxu0 0
        %973 = vmatpush1.bf16.msra.mxu0 0
        %974 = vmatprep.subr.bf16.mxu0 0
        %975 = vmatpush1.bf16.msra.mxu0 0
        %976 = vmatprep.subr.bf16.mxu0 0
        %977 = vmatpush1.bf16.msra.mxu0 0
        %978 = vmatprep.subr.bf16.mxu0 0
        %979 = vmatpush1.bf16.msra.mxu0 0
        %980 = vmatprep.subr.bf16.mxu0 0
        %981 = vmatpush1.bf16.msra.mxu0 0
        %982 = vmatprep.subr.bf16.mxu0 0
        %983 = vmatpush1.bf16.msra.mxu0 0
        %984 = vmatprep.subr.bf16.mxu0 0
        %985 = vmatpush1.bf16.msra.mxu0 0
        %986 = vmatprep.subr.bf16.mxu0 0
        %987 = vmatpush1.bf16.msra.mxu0 0
        %988 = vmatprep.subr.bf16.mxu0 0
        %989 = vmatpush1.bf16.msra.mxu0 0
        %990 = vmatprep.subr.bf16.mxu0 0
        %991 = vmatpush1.bf16.msra.mxu0 0
        %992 = vmatprep.subr.bf16.mxu0 0
        %993 = vmatpush1.bf16.msra.mxu0 0
        %994 = vmatprep.subr.bf16.mxu0 0
        %995 = vmatpush1.bf16.msra.mxu0 0
        %996 = vmatprep.subr.bf16.mxu0 0
        %997 = vmatpush1.bf16.msra.mxu0 0
        %998 = vmatprep.subr.bf16.mxu0 0
        %999 = vmatpush1.bf16.msra.mxu0 0
        %1000 = vmatprep.mubr.bf16.mxu0 0
        %1001 = vmatmul.mubr.bf16.gmra.mrb[0].mxu0 %v602
        %v1002 = vpop.f32.mrb[0].mxu0
        %v1003 = vadd.f32 0.0, %v1002
        %v1004 = vpop.f32.mrb[0].mxu0
        %v1005 = vpop.f32.mrb[0].mxu0
        %v1006 = vpop.f32.mrb[0].mxu0
        %1007 = vdwg.mxu0
        %v1012 = vunpack.c.l.b16 %v515
        %v1013 = vunpack.c.l.b16 %v516
        %v1014 = vunpack.c.l.b16 %v517
        %v1015 = vunpack.c.l.b16 %v518
        %v1016 = vpack.c.b16 %v1013, %v1012
        %v1017 = vpack.c.b16 %v1015, %v1014
        %1020 = vmatprep.subr.bf16.mxu0 0
        %1021 = vmatpush1.bf16.msra.mxu0 %v1016
        %1022 = vmatprep.subr.bf16.mxu0 0
        %1023 = vmatpush1.bf16.msra.mxu0 %v1017
        %1024 = vmatprep.subr.bf16.mxu0 0
        %1025 = vmatpush1.bf16.msra.mxu0 0
        %1026 = vmatprep.subr.bf16.mxu0 0
        %1027 = vmatpush1.bf16.msra.mxu0 0
        %1028 = vmatprep.subr.bf16.mxu0 0
        %1029 = vmatpush1.bf16.msra.mxu0 0
        %1030 = vmatprep.subr.bf16.mxu0 0
        %1031 = vmatpush1.bf16.msra.mxu0 0
        %1032 = vmatprep.subr.bf16.mxu0 0
        %1033 = vmatpush1.bf16.msra.mxu0 0
        %1034 = vmatprep.subr.bf16.mxu0 0
        %1035 = vmatpush1.bf16.msra.mxu0 0
        %1036 = vmatprep.subr.bf16.mxu0 0
        %1037 = vmatpush1.bf16.msra.mxu0 0
        %1038 = vmatprep.subr.bf16.mxu0 0
        %1039 = vmatpush1.bf16.msra.mxu0 0
        %1040 = vmatprep.subr.bf16.mxu0 0
        %1041 = vmatpush1.bf16.msra.mxu0 0
        %1042 = vmatprep.subr.bf16.mxu0 0
        %1043 = vmatpush1.bf16.msra.mxu0 0
        %1044 = vmatprep.subr.bf16.mxu0 0
        %1045 = vmatpush1.bf16.msra.mxu0 0
        %1046 = vmatprep.subr.bf16.mxu0 0
        %1047 = vmatpush1.bf16.msra.mxu0 0
        %1048 = vmatprep.subr.bf16.mxu0 0
        %1049 = vmatpush1.bf16.msra.mxu0 0
        %1050 = vmatprep.subr.bf16.mxu0 0
        %1051 = vmatpush1.bf16.msra.mxu0 0
        %1052 = vmatprep.mubr.bf16.mxu0 0
        %1053 = vmatmul.mubr.bf16.gmra.mrb[0].mxu0 %v602
        %v1054 = vpop.f32.mrb[0].mxu0
        %v1055 = vadd.f32 0.0, %v1054
        %v1056 = vpop.f32.mrb[0].mxu0
        %v1057 = vpop.f32.mrb[0].mxu0
        %v1058 = vpop.f32.mrb[0].mxu0
        %1059 = vdwg.mxu0
        %v1064 = vunpack.c.l.b16 %v519
        %v1065 = vunpack.c.l.b16 %v520
        %v1066 = vunpack.c.l.b16 %v521
        %v1067 = vunpack.c.l.b16 %v522
        %v1068 = vpack.c.b16 %v1065, %v1064
        %v1069 = vpack.c.b16 %v1067, %v1066
        %1072 = vmatprep.subr.bf16.mxu0 0
        %1073 = vmatpush1.bf16.msra.mxu0 %v1068
        %1074 = vmatprep.subr.bf16.mxu0 0
        %1075 = vmatpush1.bf16.msra.mxu0 %v1069
        %1076 = vmatprep.subr.bf16.mxu0 0
        %1077 = vmatpush1.bf16.msra.mxu0 0
        %1078 = vmatprep.subr.bf16.mxu0 0
        %1079 = vmatpush1.bf16.msra.mxu0 0
        %1080 = vmatprep.subr.bf16.mxu0 0
        %1081 = vmatpush1.bf16.msra.mxu0 0
        %1082 = vmatprep.subr.bf16.mxu0 0
        %1083 = vmatpush1.bf16.msra.mxu0 0
        %1084 = vmatprep.subr.bf16.mxu0 0
        %1085 = vmatpush1.bf16.msra.mxu0 0
        %1086 = vmatprep.subr.bf16.mxu0 0
        %1087 = vmatpush1.bf16.msra.mxu0 0
        %1088 = vmatprep.subr.bf16.mxu0 0
        %1089 = vmatpush1.bf16.msra.mxu0 0
        %1090 = vmatprep.subr.bf16.mxu0 0
        %1091 = vmatpush1.bf16.msra.mxu0 0
        %1092 = vmatprep.subr.bf16.mxu0 0
        %1093 = vmatpush1.bf16.msra.mxu0 0
        %1094 = vmatprep.subr.bf16.mxu0 0
        %1095 = vmatpush1.bf16.msra.mxu0 0
        %1096 = vmatprep.subr.bf16.mxu0 0
        %1097 = vmatpush1.bf16.msra.mxu0 0
        %1098 = vmatprep.subr.bf16.mxu0 0
        %1099 = vmatpush1.bf16.msra.mxu0 0
        %1100 = vmatprep.subr.bf16.mxu0 0
        %1101 = vmatpush1.bf16.msra.mxu0 0
        %1102 = vmatprep.subr.bf16.mxu0 0
        %1103 = vmatpush1.bf16.msra.mxu0 0
        %1104 = vmatprep.mubr.bf16.mxu0 0
        %1105 = vmatmul.mubr.bf16.gmra.mrb[0].mxu0 %v602
        %v1106 = vpop.f32.mrb[0].mxu0
        %v1107 = vadd.f32 0.0, %v1106
        %v1108 = vpop.f32.mrb[0].mxu0
        %v1109 = vpop.f32.mrb[0].mxu0
        %v1110 = vpop.f32.mrb[0].mxu0
        %1111 = vdwg.mxu0
        %v1116 = vunpack.c.l.b16 %v523
        %v1117 = vunpack.c.l.b16 %v524
        %v1118 = vunpack.c.l.b16 %v525
        %v1119 = vunpack.c.l.b16 %v526
        %v1120 = vpack.c.b16 %v1117, %v1116
        %v1121 = vpack.c.b16 %v1119, %v1118
        %1124 = vmatprep.subr.bf16.mxu0 0
        %1125 = vmatpush1.bf16.msra.mxu0 %v1120
        %1126 = vmatprep.subr.bf16.mxu0 0
        %1127 = vmatpush1.bf16.msra.mxu0 %v1121
        %1128 = vmatprep.subr.bf16.mxu0 0
        %1129 = vmatpush1.bf16.msra.mxu0 0
        %1130 = vmatprep.subr.bf16.mxu0 0
        %1131 = vmatpush1.bf16.msra.mxu0 0
        %1132 = vmatprep.subr.bf16.mxu0 0
        %1133 = vmatpush1.bf16.msra.mxu0 0
        %1134 = vmatprep.subr.bf16.mxu0 0
        %1135 = vmatpush1.bf16.msra.mxu0 0
        %1136 = vmatprep.subr.bf16.mxu0 0
        %1137 = vmatpush1.bf16.msra.mxu0 0
        %1138 = vmatprep.subr.bf16.mxu0 0
        %1139 = vmatpush1.bf16.msra.mxu0 0
        %1140 = vmatprep.subr.bf16.mxu0 0
        %1141 = vmatpush1.bf16.msra.mxu0 0
        %1142 = vmatprep.subr.bf16.mxu0 0
        %1143 = vmatpush1.bf16.msra.mxu0 0
        %1144 = vmatprep.subr.bf16.mxu0 0
        %1145 = vmatpush1.bf16.msra.mxu0 0
        %1146 = vmatprep.subr.bf16.mxu0 0
        %1147 = vmatpush1.bf16.msra.mxu0 0
        %1148 = vmatprep.subr.bf16.mxu0 0
        %1149 = vmatpush1.bf16.msra.mxu0 0
        %1150 = vmatprep.subr.bf16.mxu0 0
        %1151 = vmatpush1.bf16.msra.mxu0 0
        %1152 = vmatprep.subr.bf16.mxu0 0
        %1153 = vmatpush1.bf16.msra.mxu0 0
        %1154 = vmatprep.subr.bf16.mxu0 0
        %1155 = vmatpush1.bf16.msra.mxu0 0
        %1156 = vmatprep.mubr.bf16.mxu0 0
        %1157 = vmatmul.mubr.bf16.gmra.mrb[0].mxu0 %v602
        %v1158 = vpop.f32.mrb[0].mxu0
        %v1159 = vadd.f32 0.0, %v1158
        %v1160 = vpop.f32.mrb[0].mxu0
        %v1161 = vpop.f32.mrb[0].mxu0
        %v1162 = vpop.f32.mrb[0].mxu0
        %1163 = vdwg.mxu0
        %v1168 = vunpack.c.l.b16 %v527
        %v1169 = vunpack.c.l.b16 %v528
        %v1170 = vunpack.c.l.b16 %v529
        %v1171 = vunpack.c.l.b16 %v530
        %v1172 = vpack.c.b16 %v1169, %v1168
        %v1173 = vpack.c.b16 %v1171, %v1170
        %1176 = vmatprep.subr.bf16.mxu0 0
        %1177 = vmatpush1.bf16.msra.mxu0 %v1172
        %1178 = vmatprep.subr.bf16.mxu0 0
        %1179 = vmatpush1.bf16.msra.mxu0 %v1173
        %1180 = vmatprep.subr.bf16.mxu0 0
        %1181 = vmatpush1.bf16.msra.mxu0 0
        %1182 = vmatprep.subr.bf16.mxu0 0
        %1183 = vmatpush1.bf16.msra.mxu0 0
        %1184 = vmatprep.subr.bf16.mxu0 0
        %1185 = vmatpush1.bf16.msra.mxu0 0
        %1186 = vmatprep.subr.bf16.mxu0 0
        %1187 = vmatpush1.bf16.msra.mxu0 0
        %1188 = vmatprep.subr.bf16.mxu0 0
        %1189 = vmatpush1.bf16.msra.mxu0 0
        %1190 = vmatprep.subr.bf16.mxu0 0
        %1191 = vmatpush1.bf16.msra.mxu0 0
        %1192 = vmatprep.subr.bf16.mxu0 0
        %1193 = vmatpush1.bf16.msra.mxu0 0
        %1194 = vmatprep.subr.bf16.mxu0 0
        %1195 = vmatpush1.bf16.msra.mxu0 0
        %1196 = vmatprep.subr.bf16.mxu0 0
        %1197 = vmatpush1.bf16.msra.mxu0 0
        %1198 = vmatprep.subr.bf16.mxu0 0
        %1199 = vmatpush1.bf16.msra.mxu0 0
        %1200 = vmatprep.subr.bf16.mxu0 0
        %1201 = vmatpush1.bf16.msra.mxu0 0
        %1202 = vmatprep.subr.bf16.mxu0 0
        %1203 = vmatpush1.bf16.msra.mxu0 0
        %1204 = vmatprep.subr.bf16.mxu0 0
        %1205 = vmatpush1.bf16.msra.mxu0 0
        %1206 = vmatprep.subr.bf16.mxu0 0
        %1207 = vmatpush1.bf16.msra.mxu0 0
        %1208 = vmatprep.mubr.bf16.mxu0 0
        %1209 = vmatmul.mubr.bf16.gmra.mrb[0].mxu0 %v602
        %v1210 = vpop.f32.mrb[0].mxu0
        %v1211 = vadd.f32 0.0, %v1210
        %v1212 = vpop.f32.mrb[0].mxu0
        %v1213 = vpop.f32.mrb[0].mxu0
        %v1214 = vpop.f32.mrb[0].mxu0
        %1215 = vdwg.mxu0
        %v1216 = vld [vmem:[%s446] sm:$0xff]
        %v1217 = vpack.c.bf16 %v639, %v639
        %v1218 = vpack.c.bf16 %v691, %v691
        %v1219 = vpack.c.bf16 %v743, %v743
        %v1220 = vpack.c.bf16 %v795, %v795
        %v1221 = vpack.c.bf16 %v847, %v847
        %v1222 = vpack.c.bf16 %v899, %v899
        %v1223 = vpack.c.bf16 %v951, %v951
        %v1224 = vpack.c.bf16 %v1003, %v1003
        %vm1225 = vcmask 64512
        %v1227 = vsel %vm1225, %v1217, 0
        %v1230 = vsel %vm1225, %v1221, 0
        %1232 = vmatprep.subr.bf16.mxu0 0
        %1233 = vmatpush1.bf16.xpose.msra.mxu0 %v1230
        %1234 = vmatprep.subr.bf16.mxu0 0
        %1235 = vmatpush1.bf16.xpose.msra.mxu0 0
        %1236 = vmatprep.subr.bf16.mxu0 0
        %1237 = vmatpush1.bf16.xpose.msra.mxu0 0
        %1238 = vmatprep.subr.bf16.mxu0 0
        %1239 = vmatpush1.bf16.xpose.msra.mxu0 0
        %1240 = vmatprep.subr.bf16.mxu0 0
        %1241 = vmatpush1.bf16.xpose.msra.mxu0 0
        %1242 = vmatprep.subr.bf16.mxu0 0
        %1243 = vmatpush1.bf16.xpose.msra.mxu0 0
        %1244 = vmatprep.subr.bf16.mxu0 0
        %1245 = vmatpush1.bf16.xpose.msra.mxu0 0
        %1246 = vmatprep.subr.bf16.mxu0 0
        %1247 = vmatpush1.bf16.xpose.msra.mxu0 0
        %1248 = vmatprep.subr.bf16.mxu0 0
        %1249 = vmatpush1.bf16.xpose.msra.mxu0 0
        %1250 = vmatprep.subr.bf16.mxu0 0
        %1251 = vmatpush1.bf16.xpose.msra.mxu0 0
        %1252 = vmatprep.subr.bf16.mxu0 0
        %1253 = vmatpush1.bf16.xpose.msra.mxu0 0
        %1254 = vmatprep.subr.bf16.mxu0 0
        %1255 = vmatpush1.bf16.xpose.msra.mxu0 0
        %1256 = vmatprep.subr.bf16.mxu0 0
        %1257 = vmatpush1.bf16.xpose.msra.mxu0 0
        %1258 = vmatprep.subr.bf16.mxu0 0
        %1259 = vmatpush1.bf16.xpose.msra.mxu0 0
        %1260 = vmatprep.subr.bf16.mxu0 0
        %1261 = vmatpush1.bf16.xpose.msra.mxu0 0
        %1262 = vmatprep.subr.bf16.mxu0 0
        %1263 = vmatpush1.bf16.xpose.msra.mxu0 0
        %1264 = vmatprep.mubr.bf16.mxu0 0
        %1265 = vmatmul.mubr.bf16.gmra.mrb[0].mxu0 %v1227
        %v1266 = vpop.f32.mrb[0].mxu0
        %v1267 = vadd.f32 0.0, %v1266
        %v1268 = vpop.f32.mrb[0].mxu0
        %v1269 = vpop.f32.mrb[0].mxu0
        %v1270 = vpop.f32.mrb[0].mxu0
        %1271 = vdwg.mxu0
        %v1273 = vsel %vm1225, %v1218, 0
        %v1276 = vsel %vm1225, %v1222, 0
        %1278 = vmatprep.subr.bf16.mxu0 0
        %1279 = vmatpush1.bf16.xpose.msra.mxu0 %v1276
        %1280 = vmatprep.subr.bf16.mxu0 0
        %1281 = vmatpush1.bf16.xpose.msra.mxu0 0
        %1282 = vmatprep.subr.bf16.mxu0 0
        %1283 = vmatpush1.bf16.xpose.msra.mxu0 0
        %1284 = vmatprep.subr.bf16.mxu0 0
        %1285 = vmatpush1.bf16.xpose.msra.mxu0 0
        %1286 = vmatprep.subr.bf16.mxu0 0
        %1287 = vmatpush1.bf16.xpose.msra.mxu0 0
        %1288 = vmatprep.subr.bf16.mxu0 0
        %1289 = vmatpush1.bf16.xpose.msra.mxu0 0
        %1290 = vmatprep.subr.bf16.mxu0 0
        %1291 = vmatpush1.bf16.xpose.msra.mxu0 0
        %1292 = vmatprep.subr.bf16.mxu0 0
        %1293 = vmatpush1.bf16.xpose.msra.mxu0 0
        %1294 = vmatprep.subr.bf16.mxu0 0
        %1295 = vmatpush1.bf16.xpose.msra.mxu0 0
        %1296 = vmatprep.subr.bf16.mxu0 0
        %1297 = vmatpush1.bf16.xpose.msra.mxu0 0
        %1298 = vmatprep.subr.bf16.mxu0 0
        %1299 = vmatpush1.bf16.xpose.msra.mxu0 0
        %1300 = vmatprep.subr.bf16.mxu0 0
        %1301 = vmatpush1.bf16.xpose.msra.mxu0 0
        %1302 = vmatprep.subr.bf16.mxu0 0
        %1303 = vmatpush1.bf16.xpose.msra.mxu0 0
        %1304 = vmatprep.subr.bf16.mxu0 0
        %1305 = vmatpush1.bf16.xpose.msra.mxu0 0
        %1306 = vmatprep.subr.bf16.mxu0 0
        %1307 = vmatpush1.bf16.xpose.msra.mxu0 0
        %1308 = vmatprep.subr.bf16.mxu0 0
        %1309 = vmatpush1.bf16.xpose.msra.mxu0 0
        %1310 = vmatprep.mubr.bf16.mxu0 0
        %1311 = vmatmul.mubr.bf16.gmra.mrb[0].mxu0 %v1273
        %v1312 = vpop.f32.mrb[0].mxu0
        %v1313 = vadd.f32 0.0, %v1312
        %v1314 = vpop.f32.mrb[0].mxu0
        %v1315 = vpop.f32.mrb[0].mxu0
        %v1316 = vpop.f32.mrb[0].mxu0
        %1317 = vdwg.mxu0
        %v1319 = vsel %vm1225, %v1219, 0
        %v1322 = vsel %vm1225, %v1223, 0
        %1324 = vmatprep.subr.bf16.mxu0 0
        %1325 = vmatpush1.bf16.xpose.msra.mxu0 %v1322
        %1326 = vmatprep.subr.bf16.mxu0 0
        %1327 = vmatpush1.bf16.xpose.msra.mxu0 0
        %1328 = vmatprep.subr.bf16.mxu0 0
        %1329 = vmatpush1.bf16.xpose.msra.mxu0 0
        %1330 = vmatprep.subr.bf16.mxu0 0
        %1331 = vmatpush1.bf16.xpose.msra.mxu0 0
        %1332 = vmatprep.subr.bf16.mxu0 0
        %1333 = vmatpush1.bf16.xpose.msra.mxu0 0
        %1334 = vmatprep.subr.bf16.mxu0 0
        %1335 = vmatpush1.bf16.xpose.msra.mxu0 0
        %1336 = vmatprep.subr.bf16.mxu0 0
        %1337 = vmatpush1.bf16.xpose.msra.mxu0 0
        %1338 = vmatprep.subr.bf16.mxu0 0
        %1339 = vmatpush1.bf16.xpose.msra.mxu0 0
        %1340 = vmatprep.subr.bf16.mxu0 0
        %1341 = vmatpush1.bf16.xpose.msra.mxu0 0
        %1342 = vmatprep.subr.bf16.mxu0 0
        %1343 = vmatpush1.bf16.xpose.msra.mxu0 0
        %1344 = vmatprep.subr.bf16.mxu0 0
        %1345 = vmatpush1.bf16.xpose.msra.mxu0 0
        %1346 = vmatprep.subr.bf16.mxu0 0
        %1347 = vmatpush1.bf16.xpose.msra.mxu0 0
        %1348 = vmatprep.subr.bf16.mxu0 0
        %1349 = vmatpush1.bf16.xpose.msra.mxu0 0
        %1350 = vmatprep.subr.bf16.mxu0 0
        %1351 = vmatpush1.bf16.xpose.msra.mxu0 0
        %1352 = vmatprep.subr.bf16.mxu0 0
        %1353 = vmatpush1.bf16.xpose.msra.mxu0 0
        %1354 = vmatprep.subr.bf16.mxu0 0
        %1355 = vmatpush1.bf16.xpose.msra.mxu0 0
        %1356 = vmatprep.mubr.bf16.mxu0 0
        %1357 = vmatmul.mubr.bf16.gmra.mrb[0].mxu0 %v1319
        %v1358 = vpop.f32.mrb[0].mxu0
        %v1359 = vadd.f32 0.0, %v1358
        %v1360 = vpop.f32.mrb[0].mxu0
        %v1361 = vpop.f32.mrb[0].mxu0
        %v1362 = vpop.f32.mrb[0].mxu0
        %1363 = vdwg.mxu0
        %v1365 = vsel %vm1225, %v1220, 0
        %v1368 = vsel %vm1225, %v1224, 0
        %1370 = vmatprep.subr.bf16.mxu0 0
        %1371 = vmatpush1.bf16.xpose.msra.mxu0 %v1368
        %1372 = vmatprep.subr.bf16.mxu0 0
        %1373 = vmatpush1.bf16.xpose.msra.mxu0 0
        %1374 = vmatprep.subr.bf16.mxu0 0
        %1375 = vmatpush1.bf16.xpose.msra.mxu0 0
        %1376 = vmatprep.subr.bf16.mxu0 0
        %1377 = vmatpush1.bf16.xpose.msra.mxu0 0
        %1378 = vmatprep.subr.bf16.mxu0 0
        %1379 = vmatpush1.bf16.xpose.msra.mxu0 0
        %1380 = vmatprep.subr.bf16.mxu0 0
        %1381 = vmatpush1.bf16.xpose.msra.mxu0 0
        %1382 = vmatprep.subr.bf16.mxu0 0
        %1383 = vmatpush1.bf16.xpose.msra.mxu0 0
        %1384 = vmatprep.subr.bf16.mxu0 0
        %1385 = vmatpush1.bf16.xpose.msra.mxu0 0
        %1386 = vmatprep.subr.bf16.mxu0 0
        %1387 = vmatpush1.bf16.xpose.msra.mxu0 0
        %1388 = vmatprep.subr.bf16.mxu0 0
        %1389 = vmatpush1.bf16.xpose.msra.mxu0 0
        %1390 = vmatprep.subr.bf16.mxu0 0
        %1391 = vmatpush1.bf16.xpose.msra.mxu0 0
        %1392 = vmatprep.subr.bf16.mxu0 0
        %1393 = vmatpush1.bf16.xpose.msra.mxu0 0
        %1394 = vmatprep.subr.bf16.mxu0 0
        %1395 = vmatpush1.bf16.xpose.msra.mxu0 0
        %1396 = vmatprep.subr.bf16.mxu0 0
        %1397 = vmatpush1.bf16.xpose.msra.mxu0 0
        %1398 = vmatprep.subr.bf16.mxu0 0
        %1399 = vmatpush1.bf16.xpose.msra.mxu0 0
        %1400 = vmatprep.subr.bf16.mxu0 0
        %1401 = vmatpush1.bf16.xpose.msra.mxu0 0
        %1402 = vmatprep.mubr.bf16.mxu0 0
        %1403 = vmatmul.mubr.bf16.gmra.mrb[0].mxu0 %v1365
        %v1404 = vpop.f32.mrb[0].mxu0
        %v1405 = vadd.f32 0.0, %v1404
        %v1406 = vpop.f32.mrb[0].mxu0
        %v1407 = vpop.f32.mrb[0].mxu0
        %v1408 = vpop.f32.mrb[0].mxu0
        %1409 = vdwg.mxu0
        %v1410 = vmul.f32 %v1267, 0.35355338
        %v1411 = vmul.f32 %v1313, 0.35355338
        %v1412 = vmul.f32 %v1359, 0.35355338
        %v1413 = vmul.f32 %v1405, 0.35355338
        %v1414 = vadd.f32 %v1410, %v1216
        %v1415 = vadd.f32 %v1411, %v1216
        %v1416 = vadd.f32 %v1412, %v1216
        %v1417 = vadd.f32 %v1413, %v1216
        %v1418 = vsel %vm1225, %v1414, -inf
        %1419 = vmax.xlane.f32.xlu0 %v1418
        %v1420 = vpop.xlane.xlu0 %1419
        %v1421 = vsel %vm1225, %v1415, -inf
        %1422 = vmax.xlane.f32.xlu0 %v1421
        %v1423 = vpop.xlane.xlu0 %1422
        %v1424 = vsel %vm1225, %v1416, -inf
        %1425 = vmax.xlane.f32.xlu0 %v1424
        %v1426 = vpop.xlane.xlu0 %1425
        %v1427 = vsel %vm1225, %v1417, -inf
        %1428 = vmax.xlane.f32.xlu0 %v1427
        %v1429 = vpop.xlane.xlu0 %1428
        %v1430 = vsub.f32 %v1414, %v1420
        %v1431 = vsub.f32 %v1415, %v1423
        %v1432 = vsub.f32 %v1416, %v1426
        %v1433 = vsub.f32 %v1417, %v1429
        %v1434 = vmul.f32 %v1430, 1.442695
        %v1435 = vpow.pop %v1434
        %v1436 = vmul.f32 %v1431, 1.442695
        %v1437 = vpow.pop %v1436
        %v1438 = vmul.f32 %v1432, 1.442695
        %v1439 = vpow.pop %v1438
        %v1440 = vmul.f32 %v1433, 1.442695
        %v1441 = vpow.pop %v1440
        %v1442 = vsel %vm1225, %v1435, 0.0
        %1443 = vadd.xlane.f32.xlu0 %v1442
        %v1444 = vpop.xlane.xlu0 %1443
        %v1445 = vsel %vm1225, %v1437, 0.0
        %1446 = vadd.xlane.f32.xlu0 %v1445
        %v1447 = vpop.xlane.xlu0 %1446
        %v1448 = vsel %vm1225, %v1439, 0.0
        %1449 = vadd.xlane.f32.xlu0 %v1448
        %v1450 = vpop.xlane.xlu0 %1449
        %v1451 = vsel %vm1225, %v1441, 0.0
        %1452 = vadd.xlane.f32.xlu0 %v1451
        %v1453 = vpop.xlane.xlu0 %1452
        %v1454 = vrcp.pop %v1444
        %v1455 = vrcp.pop %v1447
        %v1456 = vrcp.pop %v1450
        %v1457 = vrcp.pop %v1453
        %v1458 = vmul.f32 %v1435, %v1454
        %v1459 = vmul.f32 %v1437, %v1455
        %v1460 = vmul.f32 %v1439, %v1456
        %v1461 = vmul.f32 %v1441, %v1457
        %v1462 = vpack.c.bf16 %v1458, %v1458
        %v1463 = vpack.c.bf16 %v1459, %v1459
        %v1464 = vpack.c.bf16 %v1460, %v1460
        %v1465 = vpack.c.bf16 %v1461, %v1461
        %v1466 = vpack.c.bf16 %v1055, %v1055
        %v1467 = vpack.c.bf16 %v1107, %v1107
        %v1468 = vpack.c.bf16 %v1159, %v1159
        %v1469 = vpack.c.bf16 %v1211, %v1211
        %v1471 = vsel %vm1225, %v1462, 0
        %vm1473 = vcmask 1043456
        %v1475 = vsel %vm1473, %v1466, 0
        %1477 = vmatprep.subr.bf16.mxu0 0
        %1478 = vmatpush1.bf16.msra.mxu0 %v1475
        %1479 = vmatprep.subr.bf16.mxu0 0
        %1480 = vmatpush1.bf16.msra.mxu0 0
        %1481 = vmatprep.subr.bf16.mxu0 0
        %1482 = vmatpush1.bf16.msra.mxu0 0
        %1483 = vmatprep.subr.bf16.mxu0 0
        %1484 = vmatpush1.bf16.msra.mxu0 0
        %1485 = vmatprep.subr.bf16.mxu0 0
        %1486 = vmatpush1.bf16.msra.mxu0 0
        %1487 = vmatprep.subr.bf16.mxu0 0
        %1488 = vmatpush1.bf16.msra.mxu0 0
        %1489 = vmatprep.subr.bf16.mxu0 0
        %1490 = vmatpush1.bf16.msra.mxu0 0
        %1491 = vmatprep.subr.bf16.mxu0 0
        %1492 = vmatpush1.bf16.msra.mxu0 0
        %1493 = vmatprep.subr.bf16.mxu0 0
        %1494 = vmatpush1.bf16.msra.mxu0 0
        %1495 = vmatprep.subr.bf16.mxu0 0
        %1496 = vmatpush1.bf16.msra.mxu0 0
        %1497 = vmatprep.subr.bf16.mxu0 0
        %1498 = vmatpush1.bf16.msra.mxu0 0
        %1499 = vmatprep.subr.bf16.mxu0 0
        %1500 = vmatpush1.bf16.msra.mxu0 0
        %1501 = vmatprep.subr.bf16.mxu0 0
        %1502 = vmatpush1.bf16.msra.mxu0 0
        %1503 = vmatprep.subr.bf16.mxu0 0
        %1504 = vmatpush1.bf16.msra.mxu0 0
        %1505 = vmatprep.subr.bf16.mxu0 0
        %1506 = vmatpush1.bf16.msra.mxu0 0
        %1507 = vmatprep.subr.bf16.mxu0 0
        %1508 = vmatpush1.bf16.msra.mxu0 0
        %1509 = vmatprep.mubr.bf16.mxu0 0
        %1510 = vmatmul.mubr.bf16.gmra.mrb[0].mxu0 %v1471
        %v1511 = vpop.f32.mrb[0].mxu0
        %v1512 = vadd.f32 0.0, %v1511
        %v1513 = vpop.f32.mrb[0].mxu0
        %v1514 = vpop.f32.mrb[0].mxu0
        %v1515 = vpop.f32.mrb[0].mxu0
        %1516 = vdwg.mxu0
        %v1518 = vsel %vm1225, %v1463, 0
        %v1521 = vsel %vm1473, %v1467, 0
        %1523 = vmatprep.subr.bf16.mxu0 0
        %1524 = vmatpush1.bf16.msra.mxu0 %v1521
        %1525 = vmatprep.subr.bf16.mxu0 0
        %1526 = vmatpush1.bf16.msra.mxu0 0
        %1527 = vmatprep.subr.bf16.mxu0 0
        %1528 = vmatpush1.bf16.msra.mxu0 0
        %1529 = vmatprep.subr.bf16.mxu0 0
        %1530 = vmatpush1.bf16.msra.mxu0 0
        %1531 = vmatprep.subr.bf16.mxu0 0
        %1532 = vmatpush1.bf16.msra.mxu0 0
        %1533 = vmatprep.subr.bf16.mxu0 0
        %1534 = vmatpush1.bf16.msra.mxu0 0
        %1535 = vmatprep.subr.bf16.mxu0 0
        %1536 = vmatpush1.bf16.msra.mxu0 0
        %1537 = vmatprep.subr.bf16.mxu0 0
        %1538 = vmatpush1.bf16.msra.mxu0 0
        %1539 = vmatprep.subr.bf16.mxu0 0
        %1540 = vmatpush1.bf16.msra.mxu0 0
        %1541 = vmatprep.subr.bf16.mxu0 0
        %1542 = vmatpush1.bf16.msra.mxu0 0
        %1543 = vmatprep.subr.bf16.mxu0 0
        %1544 = vmatpush1.bf16.msra.mxu0 0
        %1545 = vmatprep.subr.bf16.mxu0 0
        %1546 = vmatpush1.bf16.msra.mxu0 0
        %1547 = vmatprep.subr.bf16.mxu0 0
        %1548 = vmatpush1.bf16.msra.mxu0 0
        %1549 = vmatprep.subr.bf16.mxu0 0
        %1550 = vmatpush1.bf16.msra.mxu0 0
        %1551 = vmatprep.subr.bf16.mxu0 0
        %1552 = vmatpush1.bf16.msra.mxu0 0
        %1553 = vmatprep.subr.bf16.mxu0 0
        %1554 = vmatpush1.bf16.msra.mxu0 0
        %1555 = vmatprep.mubr.bf16.mxu0 0
        %1556 = vmatmul.mubr.bf16.gmra.mrb[0].mxu0 %v1518
        %v1557 = vpop.f32.mrb[0].mxu0
        %v1558 = vadd.f32 0.0, %v1557
        %v1559 = vpop.f32.mrb[0].mxu0
        %v1560 = vpop.f32.mrb[0].mxu0
        %v1561 = vpop.f32.mrb[0].mxu0
        %1562 = vdwg.mxu0
        %v1564 = vsel %vm1225, %v1464, 0
        %v1567 = vsel %vm1473, %v1468, 0
        %1569 = vmatprep.subr.bf16.mxu0 0
        %1570 = vmatpush1.bf16.msra.mxu0 %v1567
        %1571 = vmatprep.subr.bf16.mxu0 0
        %1572 = vmatpush1.bf16.msra.mxu0 0
        %1573 = vmatprep.subr.bf16.mxu0 0
        %1574 = vmatpush1.bf16.msra.mxu0 0
        %1575 = vmatprep.subr.bf16.mxu0 0
        %1576 = vmatpush1.bf16.msra.mxu0 0
        %1577 = vmatprep.subr.bf16.mxu0 0
        %1578 = vmatpush1.bf16.msra.mxu0 0
        %1579 = vmatprep.subr.bf16.mxu0 0
        %1580 = vmatpush1.bf16.msra.mxu0 0
        %1581 = vmatprep.subr.bf16.mxu0 0
        %1582 = vmatpush1.bf16.msra.mxu0 0
        %1583 = vmatprep.subr.bf16.mxu0 0
        %1584 = vmatpush1.bf16.msra.mxu0 0
        %1585 = vmatprep.subr.bf16.mxu0 0
        %1586 = vmatpush1.bf16.msra.mxu0 0
        %1587 = vmatprep.subr.bf16.mxu0 0
        %1588 = vmatpush1.bf16.msra.mxu0 0
        %1589 = vmatprep.subr.bf16.mxu0 0
        %1590 = vmatpush1.bf16.msra.mxu0 0
        %1591 = vmatprep.subr.bf16.mxu0 0
        %1592 = vmatpush1.bf16.msra.mxu0 0
        %1593 = vmatprep.subr.bf16.mxu0 0
        %1594 = vmatpush1.bf16.msra.mxu0 0
        %1595 = vmatprep.subr.bf16.mxu0 0
        %1596 = vmatpush1.bf16.msra.mxu0 0
        %1597 = vmatprep.subr.bf16.mxu0 0
        %1598 = vmatpush1.bf16.msra.mxu0 0
        %1599 = vmatprep.subr.bf16.mxu0 0
        %1600 = vmatpush1.bf16.msra.mxu0 0
        %1601 = vmatprep.mubr.bf16.mxu0 0
        %1602 = vmatmul.mubr.bf16.gmra.mrb[0].mxu0 %v1564
        %v1603 = vpop.f32.mrb[0].mxu0
        %v1604 = vadd.f32 0.0, %v1603
        %v1605 = vpop.f32.mrb[0].mxu0
        %v1606 = vpop.f32.mrb[0].mxu0
        %v1607 = vpop.f32.mrb[0].mxu0
        %1608 = vdwg.mxu0
        %v1610 = vsel %vm1225, %v1465, 0
        %v1613 = vsel %vm1473, %v1469, 0
        %1615 = vmatprep.subr.bf16.mxu0 0
        %1616 = vmatpush1.bf16.msra.mxu0 %v1613
        %1617 = vmatprep.subr.bf16.mxu0 0
        %1618 = vmatpush1.bf16.msra.mxu0 0
        %1619 = vmatprep.subr.bf16.mxu0 0
        %1620 = vmatpush1.bf16.msra.mxu0 0
        %1621 = vmatprep.subr.bf16.mxu0 0
        %1622 = vmatpush1.bf16.msra.mxu0 0
        %1623 = vmatprep.subr.bf16.mxu0 0
        %1624 = vmatpush1.bf16.msra.mxu0 0
        %1625 = vmatprep.subr.bf16.mxu0 0
        %1626 = vmatpush1.bf16.msra.mxu0 0
        %1627 = vmatprep.subr.bf16.mxu0 0
        %1628 = vmatpush1.bf16.msra.mxu0 0
        %1629 = vmatprep.subr.bf16.mxu0 0
        %1630 = vmatpush1.bf16.msra.mxu0 0
        %1631 = vmatprep.subr.bf16.mxu0 0
        %1632 = vmatpush1.bf16.msra.mxu0 0
        %1633 = vmatprep.subr.bf16.mxu0 0
        %1634 = vmatpush1.bf16.msra.mxu0 0
        %1635 = vmatprep.subr.bf16.mxu0 0
        %1636 = vmatpush1.bf16.msra.mxu0 0
        %1637 = vmatprep.subr.bf16.mxu0 0
        %1638 = vmatpush1.bf16.msra.mxu0 0
        %1639 = vmatprep.subr.bf16.mxu0 0
        %1640 = vmatpush1.bf16.msra.mxu0 0
        %1641 = vmatprep.subr.bf16.mxu0 0
        %1642 = vmatpush1.bf16.msra.mxu0 0
        %1643 = vmatprep.subr.bf16.mxu0 0
        %1644 = vmatpush1.bf16.msra.mxu0 0
        %1645 = vmatprep.subr.bf16.mxu0 0
        %1646 = vmatpush1.bf16.msra.mxu0 0
        %1647 = vmatprep.mubr.bf16.mxu0 0
        %1648 = vmatmul.mubr.bf16.gmra.mrb[0].mxu0 %v1610
        %v1649 = vpop.f32.mrb[0].mxu0
        %v1650 = vadd.f32 0.0, %v1649
        %v1651 = vpop.f32.mrb[0].mxu0
        %v1652 = vpop.f32.mrb[0].mxu0
        %v1653 = vpop.f32.mrb[0].mxu0
        %1654 = vdwg.mxu0
        %v1655 = vpack.c.bf16 %v1512, %v1512
        %v1656 = vpack.c.bf16 %v1558, %v1558
        %v1657 = vpack.c.bf16 %v1604, %v1604
        %v1658 = vpack.c.bf16 %v1650, %v1650
        %v1660 = vsel %vm1225, %v1655, 0
        %v1663 = vsel %vm1473, %v579, 0
        %1665 = vmatprep.subr.bf16.mxu0 0
        %1666 = vmatpush1.bf16.msra.mxu0 %v1663
        %1667 = vmatprep.subr.bf16.mxu0 0
        %1668 = vmatpush1.bf16.msra.mxu0 0
        %1669 = vmatprep.subr.bf16.mxu0 0
        %1670 = vmatpush1.bf16.msra.mxu0 0
        %1671 = vmatprep.subr.bf16.mxu0 0
        %1672 = vmatpush1.bf16.msra.mxu0 0
        %1673 = vmatprep.subr.bf16.mxu0 0
        %1674 = vmatpush1.bf16.msra.mxu0 0
        %1675 = vmatprep.subr.bf16.mxu0 0
        %1676 = vmatpush1.bf16.msra.mxu0 0
        %1677 = vmatprep.subr.bf16.mxu0 0
        %1678 = vmatpush1.bf16.msra.mxu0 0
        %1679 = vmatprep.subr.bf16.mxu0 0
        %1680 = vmatpush1.bf16.msra.mxu0 0
        %1681 = vmatprep.subr.bf16.mxu0 0
        %1682 = vmatpush1.bf16.msra.mxu0 0
        %1683 = vmatprep.subr.bf16.mxu0 0
        %1684 = vmatpush1.bf16.msra.mxu0 0
        %1685 = vmatprep.subr.bf16.mxu0 0
        %1686 = vmatpush1.bf16.msra.mxu0 0
        %1687 = vmatprep.subr.bf16.mxu0 0
        %1688 = vmatpush1.bf16.msra.mxu0 0
        %1689 = vmatprep.subr.bf16.mxu0 0
        %1690 = vmatpush1.bf16.msra.mxu0 0
        %1691 = vmatprep.subr.bf16.mxu0 0
        %1692 = vmatpush1.bf16.msra.mxu0 0
        %1693 = vmatprep.subr.bf16.mxu0 0
        %1694 = vmatpush1.bf16.msra.mxu0 0
        %1695 = vmatprep.subr.bf16.mxu0 0
        %1696 = vmatpush1.bf16.msra.mxu0 0
        %1697 = vmatprep.mubr.bf16.mxu0 0
        %1698 = vmatmul.mubr.bf16.gmra.mrb[0].mxu0 %v1660
        %v1699 = vpop.f32.mrb[0].mxu0
        %v1700 = vadd.f32 0.0, %v1699
        %v1701 = vpop.f32.mrb[0].mxu0
        %v1702 = vpop.f32.mrb[0].mxu0
        %v1703 = vpop.f32.mrb[0].mxu0
        %1704 = vdwg.mxu0
        %v1706 = vsel %vm1225, %v1656, 0
        %v1709 = vsel %vm1473, %v580, 0
        %1711 = vmatprep.subr.bf16.mxu0 0
        %1712 = vmatpush1.bf16.msra.mxu0 %v1709
        %1713 = vmatprep.subr.bf16.mxu0 0
        %1714 = vmatpush1.bf16.msra.mxu0 0
        %1715 = vmatprep.subr.bf16.mxu0 0
        %1716 = vmatpush1.bf16.msra.mxu0 0
        %1717 = vmatprep.subr.bf16.mxu0 0
        %1718 = vmatpush1.bf16.msra.mxu0 0
        %1719 = vmatprep.subr.bf16.mxu0 0
        %1720 = vmatpush1.bf16.msra.mxu0 0
        %1721 = vmatprep.subr.bf16.mxu0 0
        %1722 = vmatpush1.bf16.msra.mxu0 0
        %1723 = vmatprep.subr.bf16.mxu0 0
        %1724 = vmatpush1.bf16.msra.mxu0 0
        %1725 = vmatprep.subr.bf16.mxu0 0
        %1726 = vmatpush1.bf16.msra.mxu0 0
        %1727 = vmatprep.subr.bf16.mxu0 0
        %1728 = vmatpush1.bf16.msra.mxu0 0
        %1729 = vmatprep.subr.bf16.mxu0 0
        %1730 = vmatpush1.bf16.msra.mxu0 0
        %1731 = vmatprep.subr.bf16.mxu0 0
        %1732 = vmatpush1.bf16.msra.mxu0 0
        %1733 = vmatprep.subr.bf16.mxu0 0
        %1734 = vmatpush1.bf16.msra.mxu0 0
        %1735 = vmatprep.subr.bf16.mxu0 0
        %1736 = vmatpush1.bf16.msra.mxu0 0
        %1737 = vmatprep.subr.bf16.mxu0 0
        %1738 = vmatpush1.bf16.msra.mxu0 0
        %1739 = vmatprep.subr.bf16.mxu0 0
        %1740 = vmatpush1.bf16.msra.mxu0 0
        %1741 = vmatprep.subr.bf16.mxu0 0
        %1742 = vmatpush1.bf16.msra.mxu0 0
        %1743 = vmatprep.mubr.bf16.mxu0 0
        %1744 = vmatmul.mubr.bf16.gmra.mrb[0].mxu0 %v1706
        %v1745 = vpop.f32.mrb[0].mxu0
        %v1746 = vadd.f32 0.0, %v1745
        %v1747 = vpop.f32.mrb[0].mxu0
        %v1748 = vpop.f32.mrb[0].mxu0
        %v1749 = vpop.f32.mrb[0].mxu0
        %1750 = vdwg.mxu0
        %v1752 = vsel %vm1225, %v1657, 0
        %v1755 = vsel %vm1473, %v581, 0
        %1757 = vmatprep.subr.bf16.mxu0 0
        %1758 = vmatpush1.bf16.msra.mxu0 %v1755
        %1759 = vmatprep.subr.bf16.mxu0 0
        %1760 = vmatpush1.bf16.msra.mxu0 0
        %1761 = vmatprep.subr.bf16.mxu0 0
        %1762 = vmatpush1.bf16.msra.mxu0 0
        %1763 = vmatprep.subr.bf16.mxu0 0
        %1764 = vmatpush1.bf16.msra.mxu0 0
        %1765 = vmatprep.subr.bf16.mxu0 0
        %1766 = vmatpush1.bf16.msra.mxu0 0
        %1767 = vmatprep.subr.bf16.mxu0 0
        %1768 = vmatpush1.bf16.msra.mxu0 0
        %1769 = vmatprep.subr.bf16.mxu0 0
        %1770 = vmatpush1.bf16.msra.mxu0 0
        %1771 = vmatprep.subr.bf16.mxu0 0
        %1772 = vmatpush1.bf16.msra.mxu0 0
        %1773 = vmatprep.subr.bf16.mxu0 0
        %1774 = vmatpush1.bf16.msra.mxu0 0
        %1775 = vmatprep.subr.bf16.mxu0 0
        %1776 = vmatpush1.bf16.msra.mxu0 0
        %1777 = vmatprep.subr.bf16.mxu0 0
        %1778 = vmatpush1.bf16.msra.mxu0 0
        %1779 = vmatprep.subr.bf16.mxu0 0
        %1780 = vmatpush1.bf16.msra.mxu0 0
        %1781 = vmatprep.subr.bf16.mxu0 0
        %1782 = vmatpush1.bf16.msra.mxu0 0
        %1783 = vmatprep.subr.bf16.mxu0 0
        %1784 = vmatpush1.bf16.msra.mxu0 0
        %1785 = vmatprep.subr.bf16.mxu0 0
        %1786 = vmatpush1.bf16.msra.mxu0 0
        %1787 = vmatprep.subr.bf16.mxu0 0
        %1788 = vmatpush1.bf16.msra.mxu0 0
        %1789 = vmatprep.mubr.bf16.mxu0 0
        %1790 = vmatmul.mubr.bf16.gmra.mrb[0].mxu0 %v1752
        %v1791 = vpop.f32.mrb[0].mxu0
        %v1792 = vadd.f32 0.0, %v1791
        %v1793 = vpop.f32.mrb[0].mxu0
        %v1794 = vpop.f32.mrb[0].mxu0
        %v1795 = vpop.f32.mrb[0].mxu0
        %1796 = vdwg.mxu0
        %v1798 = vsel %vm1225, %v1658, 0
        %v1801 = vsel %vm1473, %v582, 0
        %1803 = vmatprep.subr.bf16.mxu0 0
        %1804 = vmatpush1.bf16.msra.mxu0 %v1801
        %1805 = vmatprep.subr.bf16.mxu0 0
        %1806 = vmatpush1.bf16.msra.mxu0 0
        %1807 = vmatprep.subr.bf16.mxu0 0
        %1808 = vmatpush1.bf16.msra.mxu0 0
        %1809 = vmatprep.subr.bf16.mxu0 0
        %1810 = vmatpush1.bf16.msra.mxu0 0
        %1811 = vmatprep.subr.bf16.mxu0 0
        %1812 = vmatpush1.bf16.msra.mxu0 0
        %1813 = vmatprep.subr.bf16.mxu0 0
        %1814 = vmatpush1.bf16.msra.mxu0 0
        %1815 = vmatprep.subr.bf16.mxu0 0
        %1816 = vmatpush1.bf16.msra.mxu0 0
        %1817 = vmatprep.subr.bf16.mxu0 0
        %1818 = vmatpush1.bf16.msra.mxu0 0
        %1819 = vmatprep.subr.bf16.mxu0 0
        %1820 = vmatpush1.bf16.msra.mxu0 0
        %1821 = vmatprep.subr.bf16.mxu0 0
        %1822 = vmatpush1.bf16.msra.mxu0 0
        %1823 = vmatprep.subr.bf16.mxu0 0
        %1824 = vmatpush1.bf16.msra.mxu0 0
        %1825 = vmatprep.subr.bf16.mxu0 0
        %1826 = vmatpush1.bf16.msra.mxu0 0
        %1827 = vmatprep.subr.bf16.mxu0 0
        %1828 = vmatpush1.bf16.msra.mxu0 0
        %1829 = vmatprep.subr.bf16.mxu0 0
        %1830 = vmatpush1.bf16.msra.mxu0 0
        %1831 = vmatprep.subr.bf16.mxu0 0
        %1832 = vmatpush1.bf16.msra.mxu0 0
        %1833 = vmatprep.subr.bf16.mxu0 0
        %1834 = vmatpush1.bf16.msra.mxu0 0
        %1835 = vmatprep.mubr.bf16.mxu0 0
        %1836 = vmatmul.mubr.bf16.gmra.mrb[0].mxu0 %v1798
        %v1837 = vpop.f32.mrb[0].mxu0
        %v1838 = vadd.f32 0.0, %v1837
        %v1839 = vpop.f32.mrb[0].mxu0
        %v1840 = vpop.f32.mrb[0].mxu0
        %v1841 = vpop.f32.mrb[0].mxu0
        %1842 = vdwg.mxu0
        %v1843 = vsel %vm600, %v1700, 0.0
        %v1844 = vsel %vm600, %v1746, 0.0
        %v1845 = vadd.f32 %v1843, %v1844
        %v1846 = vsel %vm600, %v1792, 0.0
        %v1847 = vadd.f32 %v1845, %v1846
        %v1848 = vsel %vm600, %v1838, 0.0
        %v1849 = vadd.f32 %v1847, %v1848
        %v1850 = vadd.f32 %v479, %v1849
        %v1851 = vsel %vm600, %v1850, 0.0
        %1852 = vadd.xlane.f32.xlu0 %v1851
        %v1853 = vpop.xlane.xlu0 %1852
        %v1854 = vrcp.pop 32.0
        %v1855 = vmul.f32 %v1853, %v1854
        %v1856 = vsub.f32 %v1850, %v1855
        %v1857 = vmul.f32 %v1856, %v1856
        %v1858 = vsel %vm600, %v1857, 0.0
        %1859 = vadd.xlane.f32.xlu0 %v1858
        %v1860 = vpop.xlane.xlu0 %1859
        %v1861 = vmul.f32 %v1860, %v1854
        %v1862 = vadd.f32 %v1861, 1e-05
        %v1863 = vrsqrt.pop %v1862
        %v1864 = vmul.f32 %v1856, %v1863
        %v1865 = vlaneseq
        %v1866 = vshrl.u32 %v1865, 7
        %v1867 = vsub.s32 0, %v1866
        %v1868 = vrot.slane %v481, %v1867
        %v1869 = vmul.f32 %v1864, %v1868
        %v1870 = vlaneseq
        %v1871 = vshrl.u32 %v1870, 7
        %v1872 = vsub.s32 1, %v1871
        %v1873 = vrot.slane %v481, %v1872
        %v1874 = vadd.f32 %v1869, %v1873
        %v1875 = vpack.c.bf16 %v1874, %v1874
        %v1880 = vunpack.c.l.b16 %v531
        %v1881 = vunpack.c.l.b16 %v532
        %v1882 = vunpack.c.l.b16 %v533
        %v1883 = vunpack.c.l.b16 %v534
        %v1884 = vpack.c.b16 %v1881, %v1880
        %v1885 = vpack.c.b16 %v1883, %v1882
        %v1889 = vsel %vm600, %v1875, 0
        %1891 = vmatprep.subr.bf16.mxu0 0
        %1892 = vmatpush1.bf16.msra.mxu0 %v1884
        %1893 = vmatprep.subr.bf16.mxu0 0
        %1894 = vmatpush1.bf16.msra.mxu0 %v1885
        %1895 = vmatprep.subr.bf16.mxu0 0
        %1896 = vmatpush1.bf16.msra.mxu0 0
        %1897 = vmatprep.subr.bf16.mxu0 0
        %1898 = vmatpush1.bf16.msra.mxu0 0
        %1899 = vmatprep.subr.bf16.mxu0 0
        %1900 = vmatpush1.bf16.msra.mxu0 0
        %1901 = vmatprep.subr.bf16.mxu0 0
        %1902 = vmatpush1.bf16.msra.mxu0 0
        %1903 = vmatprep.subr.bf16.mxu0 0
        %1904 = vmatpush1.bf16.msra.mxu0 0
        %1905 = vmatprep.subr.bf16.mxu0 0
        %1906 = vmatpush1.bf16.msra.mxu0 0
        %1907 = vmatprep.subr.bf16.mxu0 0
        %1908 = vmatpush1.bf16.msra.mxu0 0
        %1909 = vmatprep.subr.bf16.mxu0 0
        %1910 = vmatpush1.bf16.msra.mxu0 0
        %1911 = vmatprep.subr.bf16.mxu0 0
        %1912 = vmatpush1.bf16.msra.mxu0 0
        %1913 = vmatprep.subr.bf16.mxu0 0
        %1914 = vmatpush1.bf16.msra.mxu0 0
        %1915 = vmatprep.subr.bf16.mxu0 0
        %1916 = vmatpush1.bf16.msra.mxu0 0
        %1917 = vmatprep.subr.bf16.mxu0 0
        %1918 = vmatpush1.bf16.msra.mxu0 0
        %1919 = vmatprep.subr.bf16.mxu0 0
        %1920 = vmatpush1.bf16.msra.mxu0 0
        %1921 = vmatprep.subr.bf16.mxu0 0
        %1922 = vmatpush1.bf16.msra.mxu0 0
        %1923 = vmatprep.mubr.bf16.mxu0 0
        %1924 = vmatmul.mubr.bf16.gmra.mrb[0].mxu0 %v1889
        %v1925 = vpop.f32.mrb[0].mxu0
        %v1926 = vadd.f32 0.0, %v1925
        %v1927 = vpop.f32.mrb[0].mxu0
        %v1928 = vpop.f32.mrb[0].mxu0
        %v1929 = vpop.f32.mrb[0].mxu0
        %1930 = vdwg.mxu0
        %v1935 = vunpack.c.l.b16 %v535
        %v1936 = vunpack.c.l.b16 %v536
        %v1937 = vunpack.c.l.b16 %v537
        %v1938 = vunpack.c.l.b16 %v538
        %v1939 = vpack.c.b16 %v1936, %v1935
        %v1940 = vpack.c.b16 %v1938, %v1937
        %1943 = vmatprep.subr.bf16.mxu0 0
        %1944 = vmatpush1.bf16.msra.mxu0 %v1939
        %1945 = vmatprep.subr.bf16.mxu0 0
        %1946 = vmatpush1.bf16.msra.mxu0 %v1940
        %1947 = vmatprep.subr.bf16.mxu0 0
        %1948 = vmatpush1.bf16.msra.mxu0 0
        %1949 = vmatprep.subr.bf16.mxu0 0
        %1950 = vmatpush1.bf16.msra.mxu0 0
        %1951 = vmatprep.subr.bf16.mxu0 0
        %1952 = vmatpush1.bf16.msra.mxu0 0
        %1953 = vmatprep.subr.bf16.mxu0 0
        %1954 = vmatpush1.bf16.msra.mxu0 0
        %1955 = vmatprep.subr.bf16.mxu0 0
        %1956 = vmatpush1.bf16.msra.mxu0 0
        %1957 = vmatprep.subr.bf16.mxu0 0
        %1958 = vmatpush1.bf16.msra.mxu0 0
        %1959 = vmatprep.subr.bf16.mxu0 0
        %1960 = vmatpush1.bf16.msra.mxu0 0
        %1961 = vmatprep.subr.bf16.mxu0 0
        %1962 = vmatpush1.bf16.msra.mxu0 0
        %1963 = vmatprep.subr.bf16.mxu0 0
        %1964 = vmatpush1.bf16.msra.mxu0 0
        %1965 = vmatprep.subr.bf16.mxu0 0
        %1966 = vmatpush1.bf16.msra.mxu0 0
        %1967 = vmatprep.subr.bf16.mxu0 0
        %1968 = vmatpush1.bf16.msra.mxu0 0
        %1969 = vmatprep.subr.bf16.mxu0 0
        %1970 = vmatpush1.bf16.msra.mxu0 0
        %1971 = vmatprep.subr.bf16.mxu0 0
        %1972 = vmatpush1.bf16.msra.mxu0 0
        %1973 = vmatprep.subr.bf16.mxu0 0
        %1974 = vmatpush1.bf16.msra.mxu0 0
        %1975 = vmatprep.mubr.bf16.mxu0 0
        %1976 = vmatmul.mubr.bf16.gmra.mrb[0].mxu0 %v1889
        %v1977 = vpop.f32.mrb[0].mxu0
        %v1978 = vadd.f32 0.0, %v1977
        %v1979 = vpop.f32.mrb[0].mxu0
        %v1980 = vpop.f32.mrb[0].mxu0
        %v1981 = vpop.f32.mrb[0].mxu0
        %1982 = vdwg.mxu0
        %v1987 = vunpack.c.l.b16 %v539
        %v1988 = vunpack.c.l.b16 %v540
        %v1989 = vunpack.c.l.b16 %v541
        %v1990 = vunpack.c.l.b16 %v542
        %v1991 = vpack.c.b16 %v1988, %v1987
        %v1992 = vpack.c.b16 %v1990, %v1989
        %1995 = vmatprep.subr.bf16.mxu0 0
        %1996 = vmatpush1.bf16.msra.mxu0 %v1991
        %1997 = vmatprep.subr.bf16.mxu0 0
        %1998 = vmatpush1.bf16.msra.mxu0 %v1992
        %1999 = vmatprep.subr.bf16.mxu0 0
        %2000 = vmatpush1.bf16.msra.mxu0 0
        %2001 = vmatprep.subr.bf16.mxu0 0
        %2002 = vmatpush1.bf16.msra.mxu0 0
        %2003 = vmatprep.subr.bf16.mxu0 0
        %2004 = vmatpush1.bf16.msra.mxu0 0
        %2005 = vmatprep.subr.bf16.mxu0 0
        %2006 = vmatpush1.bf16.msra.mxu0 0
        %2007 = vmatprep.subr.bf16.mxu0 0
        %2008 = vmatpush1.bf16.msra.mxu0 0
        %2009 = vmatprep.subr.bf16.mxu0 0
        %2010 = vmatpush1.bf16.msra.mxu0 0
        %2011 = vmatprep.subr.bf16.mxu0 0
        %2012 = vmatpush1.bf16.msra.mxu0 0
        %2013 = vmatprep.subr.bf16.mxu0 0
        %2014 = vmatpush1.bf16.msra.mxu0 0
        %2015 = vmatprep.subr.bf16.mxu0 0
        %2016 = vmatpush1.bf16.msra.mxu0 0
        %2017 = vmatprep.subr.bf16.mxu0 0
        %2018 = vmatpush1.bf16.msra.mxu0 0
        %2019 = vmatprep.subr.bf16.mxu0 0
        %2020 = vmatpush1.bf16.msra.mxu0 0
        %2021 = vmatprep.subr.bf16.mxu0 0
        %2022 = vmatpush1.bf16.msra.mxu0 0
        %2023 = vmatprep.subr.bf16.mxu0 0
        %2024 = vmatpush1.bf16.msra.mxu0 0
        %2025 = vmatprep.subr.bf16.mxu0 0
        %2026 = vmatpush1.bf16.msra.mxu0 0
        %2027 = vmatprep.mubr.bf16.mxu0 0
        %2028 = vmatmul.mubr.bf16.gmra.mrb[0].mxu0 %v1889
        %v2029 = vpop.f32.mrb[0].mxu0
        %v2030 = vadd.f32 0.0, %v2029
        %v2031 = vpop.f32.mrb[0].mxu0
        %v2032 = vpop.f32.mrb[0].mxu0
        %v2033 = vpop.f32.mrb[0].mxu0
        %2034 = vdwg.mxu0
        %v2039 = vunpack.c.l.b16 %v543
        %v2040 = vunpack.c.l.b16 %v544
        %v2041 = vunpack.c.l.b16 %v545
        %v2042 = vunpack.c.l.b16 %v546
        %v2043 = vpack.c.b16 %v2040, %v2039
        %v2044 = vpack.c.b16 %v2042, %v2041
        %2047 = vmatprep.subr.bf16.mxu0 0
        %2048 = vmatpush1.bf16.msra.mxu0 %v2043
        %2049 = vmatprep.subr.bf16.mxu0 0
        %2050 = vmatpush1.bf16.msra.mxu0 %v2044
        %2051 = vmatprep.subr.bf16.mxu0 0
        %2052 = vmatpush1.bf16.msra.mxu0 0
        %2053 = vmatprep.subr.bf16.mxu0 0
        %2054 = vmatpush1.bf16.msra.mxu0 0
        %2055 = vmatprep.subr.bf16.mxu0 0
        %2056 = vmatpush1.bf16.msra.mxu0 0
        %2057 = vmatprep.subr.bf16.mxu0 0
        %2058 = vmatpush1.bf16.msra.mxu0 0
        %2059 = vmatprep.subr.bf16.mxu0 0
        %2060 = vmatpush1.bf16.msra.mxu0 0
        %2061 = vmatprep.subr.bf16.mxu0 0
        %2062 = vmatpush1.bf16.msra.mxu0 0
        %2063 = vmatprep.subr.bf16.mxu0 0
        %2064 = vmatpush1.bf16.msra.mxu0 0
        %2065 = vmatprep.subr.bf16.mxu0 0
        %2066 = vmatpush1.bf16.msra.mxu0 0
        %2067 = vmatprep.subr.bf16.mxu0 0
        %2068 = vmatpush1.bf16.msra.mxu0 0
        %2069 = vmatprep.subr.bf16.mxu0 0
        %2070 = vmatpush1.bf16.msra.mxu0 0
        %2071 = vmatprep.subr.bf16.mxu0 0
        %2072 = vmatpush1.bf16.msra.mxu0 0
        %2073 = vmatprep.subr.bf16.mxu0 0
        %2074 = vmatpush1.bf16.msra.mxu0 0
        %2075 = vmatprep.subr.bf16.mxu0 0
        %2076 = vmatpush1.bf16.msra.mxu0 0
        %2077 = vmatprep.subr.bf16.mxu0 0
        %2078 = vmatpush1.bf16.msra.mxu0 0
        %2079 = vmatprep.mubr.bf16.mxu0 0
        %2080 = vmatmul.mubr.bf16.gmra.mrb[0].mxu0 %v1889
        %v2081 = vpop.f32.mrb[0].mxu0
        %v2082 = vadd.f32 0.0, %v2081
        %v2083 = vpop.f32.mrb[0].mxu0
        %v2084 = vpop.f32.mrb[0].mxu0
        %v2085 = vpop.f32.mrb[0].mxu0
        %2086 = vdwg.mxu0
        %v2087 = vpack.c.bf16 %v480, %v480
        %v2092 = vunpack.c.l.b16 %v547
        %v2093 = vunpack.c.l.b16 %v548
        %v2094 = vunpack.c.l.b16 %v549
        %v2095 = vunpack.c.l.b16 %v550
        %v2096 = vpack.c.b16 %v2093, %v2092
        %v2097 = vpack.c.b16 %v2095, %v2094
        %v2101 = vsel %vm600, %v2087, 0
        %2103 = vmatprep.subr.bf16.mxu0 0
        %2104 = vmatpush1.bf16.msra.mxu0 %v2096
        %2105 = vmatprep.subr.bf16.mxu0 0
        %2106 = vmatpush1.bf16.msra.mxu0 %v2097
        %2107 = vmatprep.subr.bf16.mxu0 0
        %2108 = vmatpush1.bf16.msra.mxu0 0
        %2109 = vmatprep.subr.bf16.mxu0 0
        %2110 = vmatpush1.bf16.msra.mxu0 0
        %2111 = vmatprep.subr.bf16.mxu0 0
        %2112 = vmatpush1.bf16.msra.mxu0 0
        %2113 = vmatprep.subr.bf16.mxu0 0
        %2114 = vmatpush1.bf16.msra.mxu0 0
        %2115 = vmatprep.subr.bf16.mxu0 0
        %2116 = vmatpush1.bf16.msra.mxu0 0
        %2117 = vmatprep.subr.bf16.mxu0 0
        %2118 = vmatpush1.bf16.msra.mxu0 0
        %2119 = vmatprep.subr.bf16.mxu0 0
        %2120 = vmatpush1.bf16.msra.mxu0 0
        %2121 = vmatprep.subr.bf16.mxu0 0
        %2122 = vmatpush1.bf16.msra.mxu0 0
        %2123 = vmatprep.subr.bf16.mxu0 0
        %2124 = vmatpush1.bf16.msra.mxu0 0
        %2125 = vmatprep.subr.bf16.mxu0 0
        %2126 = vmatpush1.bf16.msra.mxu0 0
        %2127 = vmatprep.subr.bf16.mxu0 0
        %2128 = vmatpush1.bf16.msra.mxu0 0
        %2129 = vmatprep.subr.bf16.mxu0 0
        %2130 = vmatpush1.bf16.msra.mxu0 0
        %2131 = vmatprep.subr.bf16.mxu0 0
        %2132 = vmatpush1.bf16.msra.mxu0 0
        %2133 = vmatprep.subr.bf16.mxu0 0
        %2134 = vmatpush1.bf16.msra.mxu0 0
        %2135 = vmatprep.mubr.bf16.mxu0 0
        %2136 = vmatmul.mubr.bf16.gmra.mrb[0].mxu0 %v2101
        %v2137 = vpop.f32.mrb[0].mxu0
        %v2138 = vadd.f32 0.0, %v2137
        %v2139 = vpop.f32.mrb[0].mxu0
        %v2140 = vpop.f32.mrb[0].mxu0
        %v2141 = vpop.f32.mrb[0].mxu0
        %2142 = vdwg.mxu0
        %v2147 = vunpack.c.l.b16 %v551
        %v2148 = vunpack.c.l.b16 %v552
        %v2149 = vunpack.c.l.b16 %v553
        %v2150 = vunpack.c.l.b16 %v554
        %v2151 = vpack.c.b16 %v2148, %v2147
        %v2152 = vpack.c.b16 %v2150, %v2149
        %2155 = vmatprep.subr.bf16.mxu0 0
        %2156 = vmatpush1.bf16.msra.mxu0 %v2151
        %2157 = vmatprep.subr.bf16.mxu0 0
        %2158 = vmatpush1.bf16.msra.mxu0 %v2152
        %2159 = vmatprep.subr.bf16.mxu0 0
        %2160 = vmatpush1.bf16.msra.mxu0 0
        %2161 = vmatprep.subr.bf16.mxu0 0
        %2162 = vmatpush1.bf16.msra.mxu0 0
        %2163 = vmatprep.subr.bf16.mxu0 0
        %2164 = vmatpush1.bf16.msra.mxu0 0
        %2165 = vmatprep.subr.bf16.mxu0 0
        %2166 = vmatpush1.bf16.msra.mxu0 0
        %2167 = vmatprep.subr.bf16.mxu0 0
        %2168 = vmatpush1.bf16.msra.mxu0 0
        %2169 = vmatprep.subr.bf16.mxu0 0
        %2170 = vmatpush1.bf16.msra.mxu0 0
        %2171 = vmatprep.subr.bf16.mxu0 0
        %2172 = vmatpush1.bf16.msra.mxu0 0
        %2173 = vmatprep.subr.bf16.mxu0 0
        %2174 = vmatpush1.bf16.msra.mxu0 0
        %2175 = vmatprep.subr.bf16.mxu0 0
        %2176 = vmatpush1.bf16.msra.mxu0 0
        %2177 = vmatprep.subr.bf16.mxu0 0
        %2178 = vmatpush1.bf16.msra.mxu0 0
        %2179 = vmatprep.subr.bf16.mxu0 0
        %2180 = vmatpush1.bf16.msra.mxu0 0
        %2181 = vmatprep.subr.bf16.mxu0 0
        %2182 = vmatpush1.bf16.msra.mxu0 0
        %2183 = vmatprep.subr.bf16.mxu0 0
        %2184 = vmatpush1.bf16.msra.mxu0 0
        %2185 = vmatprep.subr.bf16.mxu0 0
        %2186 = vmatpush1.bf16.msra.mxu0 0
        %2187 = vmatprep.mubr.bf16.mxu0 0
        %2188 = vmatmul.mubr.bf16.gmra.mrb[0].mxu0 %v2101
        %v2189 = vpop.f32.mrb[0].mxu0
        %v2190 = vadd.f32 0.0, %v2189
        %v2191 = vpop.f32.mrb[0].mxu0
        %v2192 = vpop.f32.mrb[0].mxu0
        %v2193 = vpop.f32.mrb[0].mxu0
        %2194 = vdwg.mxu0
        %v2199 = vunpack.c.l.b16 %v555
        %v2200 = vunpack.c.l.b16 %v556
        %v2201 = vunpack.c.l.b16 %v557
        %v2202 = vunpack.c.l.b16 %v558
        %v2203 = vpack.c.b16 %v2200, %v2199
        %v2204 = vpack.c.b16 %v2202, %v2201
        %2207 = vmatprep.subr.bf16.mxu0 0
        %2208 = vmatpush1.bf16.msra.mxu0 %v2203
        %2209 = vmatprep.subr.bf16.mxu0 0
        %2210 = vmatpush1.bf16.msra.mxu0 %v2204
        %2211 = vmatprep.subr.bf16.mxu0 0
        %2212 = vmatpush1.bf16.msra.mxu0 0
        %2213 = vmatprep.subr.bf16.mxu0 0
        %2214 = vmatpush1.bf16.msra.mxu0 0
        %2215 = vmatprep.subr.bf16.mxu0 0
        %2216 = vmatpush1.bf16.msra.mxu0 0
        %2217 = vmatprep.subr.bf16.mxu0 0
        %2218 = vmatpush1.bf16.msra.mxu0 0
        %2219 = vmatprep.subr.bf16.mxu0 0
        %2220 = vmatpush1.bf16.msra.mxu0 0
        %2221 = vmatprep.subr.bf16.mxu0 0
        %2222 = vmatpush1.bf16.msra.mxu0 0
        %2223 = vmatprep.subr.bf16.mxu0 0
        %2224 = vmatpush1.bf16.msra.mxu0 0
        %2225 = vmatprep.subr.bf16.mxu0 0
        %2226 = vmatpush1.bf16.msra.mxu0 0
        %2227 = vmatprep.subr.bf16.mxu0 0
        %2228 = vmatpush1.bf16.msra.mxu0 0
        %2229 = vmatprep.subr.bf16.mxu0 0
        %2230 = vmatpush1.bf16.msra.mxu0 0
        %2231 = vmatprep.subr.bf16.mxu0 0
        %2232 = vmatpush1.bf16.msra.mxu0 0
        %2233 = vmatprep.subr.bf16.mxu0 0
        %2234 = vmatpush1.bf16.msra.mxu0 0
        %2235 = vmatprep.subr.bf16.mxu0 0
        %2236 = vmatpush1.bf16.msra.mxu0 0
        %2237 = vmatprep.subr.bf16.mxu0 0
        %2238 = vmatpush1.bf16.msra.mxu0 0
        %2239 = vmatprep.mubr.bf16.mxu0 0
        %2240 = vmatmul.mubr.bf16.gmra.mrb[0].mxu0 %v2101
        %v2241 = vpop.f32.mrb[0].mxu0
        %v2242 = vadd.f32 0.0, %v2241
        %v2243 = vpop.f32.mrb[0].mxu0
        %v2244 = vpop.f32.mrb[0].mxu0
        %v2245 = vpop.f32.mrb[0].mxu0
        %2246 = vdwg.mxu0
        %v2251 = vunpack.c.l.b16 %v559
        %v2252 = vunpack.c.l.b16 %v560
        %v2253 = vunpack.c.l.b16 %v561
        %v2254 = vunpack.c.l.b16 %v562
        %v2255 = vpack.c.b16 %v2252, %v2251
        %v2256 = vpack.c.b16 %v2254, %v2253
        %2259 = vmatprep.subr.bf16.mxu0 0
        %2260 = vmatpush1.bf16.msra.mxu0 %v2255
        %2261 = vmatprep.subr.bf16.mxu0 0
        %2262 = vmatpush1.bf16.msra.mxu0 %v2256
        %2263 = vmatprep.subr.bf16.mxu0 0
        %2264 = vmatpush1.bf16.msra.mxu0 0
        %2265 = vmatprep.subr.bf16.mxu0 0
        %2266 = vmatpush1.bf16.msra.mxu0 0
        %2267 = vmatprep.subr.bf16.mxu0 0
        %2268 = vmatpush1.bf16.msra.mxu0 0
        %2269 = vmatprep.subr.bf16.mxu0 0
        %2270 = vmatpush1.bf16.msra.mxu0 0
        %2271 = vmatprep.subr.bf16.mxu0 0
        %2272 = vmatpush1.bf16.msra.mxu0 0
        %2273 = vmatprep.subr.bf16.mxu0 0
        %2274 = vmatpush1.bf16.msra.mxu0 0
        %2275 = vmatprep.subr.bf16.mxu0 0
        %2276 = vmatpush1.bf16.msra.mxu0 0
        %2277 = vmatprep.subr.bf16.mxu0 0
        %2278 = vmatpush1.bf16.msra.mxu0 0
        %2279 = vmatprep.subr.bf16.mxu0 0
        %2280 = vmatpush1.bf16.msra.mxu0 0
        %2281 = vmatprep.subr.bf16.mxu0 0
        %2282 = vmatpush1.bf16.msra.mxu0 0
        %2283 = vmatprep.subr.bf16.mxu0 0
        %2284 = vmatpush1.bf16.msra.mxu0 0
        %2285 = vmatprep.subr.bf16.mxu0 0
        %2286 = vmatpush1.bf16.msra.mxu0 0
        %2287 = vmatprep.subr.bf16.mxu0 0
        %2288 = vmatpush1.bf16.msra.mxu0 0
        %2289 = vmatprep.subr.bf16.mxu0 0
        %2290 = vmatpush1.bf16.msra.mxu0 0
        %2291 = vmatprep.mubr.bf16.mxu0 0
        %2292 = vmatmul.mubr.bf16.gmra.mrb[0].mxu0 %v2101
        %v2293 = vpop.f32.mrb[0].mxu0
        %v2294 = vadd.f32 0.0, %v2293
        %v2295 = vpop.f32.mrb[0].mxu0
        %v2296 = vpop.f32.mrb[0].mxu0
        %v2297 = vpop.f32.mrb[0].mxu0
        %2298 = vdwg.mxu0
        %v2303 = vunpack.c.l.b16 %v563
        %v2304 = vunpack.c.l.b16 %v564
        %v2305 = vunpack.c.l.b16 %v565
        %v2306 = vunpack.c.l.b16 %v566
        %v2307 = vpack.c.b16 %v2304, %v2303
        %v2308 = vpack.c.b16 %v2306, %v2305
        %2311 = vmatprep.subr.bf16.mxu0 0
        %2312 = vmatpush1.bf16.msra.mxu0 %v2307
        %2313 = vmatprep.subr.bf16.mxu0 0
        %2314 = vmatpush1.bf16.msra.mxu0 %v2308
        %2315 = vmatprep.subr.bf16.mxu0 0
        %2316 = vmatpush1.bf16.msra.mxu0 0
        %2317 = vmatprep.subr.bf16.mxu0 0
        %2318 = vmatpush1.bf16.msra.mxu0 0
        %2319 = vmatprep.subr.bf16.mxu0 0
        %2320 = vmatpush1.bf16.msra.mxu0 0
        %2321 = vmatprep.subr.bf16.mxu0 0
        %2322 = vmatpush1.bf16.msra.mxu0 0
        %2323 = vmatprep.subr.bf16.mxu0 0
        %2324 = vmatpush1.bf16.msra.mxu0 0
        %2325 = vmatprep.subr.bf16.mxu0 0
        %2326 = vmatpush1.bf16.msra.mxu0 0
        %2327 = vmatprep.subr.bf16.mxu0 0
        %2328 = vmatpush1.bf16.msra.mxu0 0
        %2329 = vmatprep.subr.bf16.mxu0 0
        %2330 = vmatpush1.bf16.msra.mxu0 0
        %2331 = vmatprep.subr.bf16.mxu0 0
        %2332 = vmatpush1.bf16.msra.mxu0 0
        %2333 = vmatprep.subr.bf16.mxu0 0
        %2334 = vmatpush1.bf16.msra.mxu0 0
        %2335 = vmatprep.subr.bf16.mxu0 0
        %2336 = vmatpush1.bf16.msra.mxu0 0
        %2337 = vmatprep.subr.bf16.mxu0 0
        %2338 = vmatpush1.bf16.msra.mxu0 0
        %2339 = vmatprep.subr.bf16.mxu0 0
        %2340 = vmatpush1.bf16.msra.mxu0 0
        %2341 = vmatprep.subr.bf16.mxu0 0
        %2342 = vmatpush1.bf16.msra.mxu0 0
        %2343 = vmatprep.mubr.bf16.mxu0 0
        %2344 = vmatmul.mubr.bf16.gmra.mrb[0].mxu0 %v2101
        %v2345 = vpop.f32.mrb[0].mxu0
        %v2346 = vadd.f32 0.0, %v2345
        %v2347 = vpop.f32.mrb[0].mxu0
        %v2348 = vpop.f32.mrb[0].mxu0
        %v2349 = vpop.f32.mrb[0].mxu0
        %2350 = vdwg.mxu0
        %v2355 = vunpack.c.l.b16 %v567
        %v2356 = vunpack.c.l.b16 %v568
        %v2357 = vunpack.c.l.b16 %v569
        %v2358 = vunpack.c.l.b16 %v570
        %v2359 = vpack.c.b16 %v2356, %v2355
        %v2360 = vpack.c.b16 %v2358, %v2357
        %2363 = vmatprep.subr.bf16.mxu0 0
        %2364 = vmatpush1.bf16.msra.mxu0 %v2359
        %2365 = vmatprep.subr.bf16.mxu0 0
        %2366 = vmatpush1.bf16.msra.mxu0 %v2360
        %2367 = vmatprep.subr.bf16.mxu0 0
        %2368 = vmatpush1.bf16.msra.mxu0 0
        %2369 = vmatprep.subr.bf16.mxu0 0
        %2370 = vmatpush1.bf16.msra.mxu0 0
        %2371 = vmatprep.subr.bf16.mxu0 0
        %2372 = vmatpush1.bf16.msra.mxu0 0
        %2373 = vmatprep.subr.bf16.mxu0 0
        %2374 = vmatpush1.bf16.msra.mxu0 0
        %2375 = vmatprep.subr.bf16.mxu0 0
        %2376 = vmatpush1.bf16.msra.mxu0 0
        %2377 = vmatprep.subr.bf16.mxu0 0
        %2378 = vmatpush1.bf16.msra.mxu0 0
        %2379 = vmatprep.subr.bf16.mxu0 0
        %2380 = vmatpush1.bf16.msra.mxu0 0
        %2381 = vmatprep.subr.bf16.mxu0 0
        %2382 = vmatpush1.bf16.msra.mxu0 0
        %2383 = vmatprep.subr.bf16.mxu0 0
        %2384 = vmatpush1.bf16.msra.mxu0 0
        %2385 = vmatprep.subr.bf16.mxu0 0
        %2386 = vmatpush1.bf16.msra.mxu0 0
        %2387 = vmatprep.subr.bf16.mxu0 0
        %2388 = vmatpush1.bf16.msra.mxu0 0
        %2389 = vmatprep.subr.bf16.mxu0 0
        %2390 = vmatpush1.bf16.msra.mxu0 0
        %2391 = vmatprep.subr.bf16.mxu0 0
        %2392 = vmatpush1.bf16.msra.mxu0 0
        %2393 = vmatprep.subr.bf16.mxu0 0
        %2394 = vmatpush1.bf16.msra.mxu0 0
        %2395 = vmatprep.mubr.bf16.mxu0 0
        %2396 = vmatmul.mubr.bf16.gmra.mrb[0].mxu0 %v2101
        %v2397 = vpop.f32.mrb[0].mxu0
        %v2398 = vadd.f32 0.0, %v2397
        %v2399 = vpop.f32.mrb[0].mxu0
        %v2400 = vpop.f32.mrb[0].mxu0
        %v2401 = vpop.f32.mrb[0].mxu0
        %2402 = vdwg.mxu0
        %v2407 = vunpack.c.l.b16 %v571
        %v2408 = vunpack.c.l.b16 %v572
        %v2409 = vunpack.c.l.b16 %v573
        %v2410 = vunpack.c.l.b16 %v574
        %v2411 = vpack.c.b16 %v2408, %v2407
        %v2412 = vpack.c.b16 %v2410, %v2409
        %2415 = vmatprep.subr.bf16.mxu0 0
        %2416 = vmatpush1.bf16.msra.mxu0 %v2411
        %2417 = vmatprep.subr.bf16.mxu0 0
        %2418 = vmatpush1.bf16.msra.mxu0 %v2412
        %2419 = vmatprep.subr.bf16.mxu0 0
        %2420 = vmatpush1.bf16.msra.mxu0 0
        %2421 = vmatprep.subr.bf16.mxu0 0
        %2422 = vmatpush1.bf16.msra.mxu0 0
        %2423 = vmatprep.subr.bf16.mxu0 0
        %2424 = vmatpush1.bf16.msra.mxu0 0
        %2425 = vmatprep.subr.bf16.mxu0 0
        %2426 = vmatpush1.bf16.msra.mxu0 0
        %2427 = vmatprep.subr.bf16.mxu0 0
        %2428 = vmatpush1.bf16.msra.mxu0 0
        %2429 = vmatprep.subr.bf16.mxu0 0
        %2430 = vmatpush1.bf16.msra.mxu0 0
        %2431 = vmatprep.subr.bf16.mxu0 0
        %2432 = vmatpush1.bf16.msra.mxu0 0
        %2433 = vmatprep.subr.bf16.mxu0 0
        %2434 = vmatpush1.bf16.msra.mxu0 0
        %2435 = vmatprep.subr.bf16.mxu0 0
        %2436 = vmatpush1.bf16.msra.mxu0 0
        %2437 = vmatprep.subr.bf16.mxu0 0
        %2438 = vmatpush1.bf16.msra.mxu0 0
        %2439 = vmatprep.subr.bf16.mxu0 0
        %2440 = vmatpush1.bf16.msra.mxu0 0
        %2441 = vmatprep.subr.bf16.mxu0 0
        %2442 = vmatpush1.bf16.msra.mxu0 0
        %2443 = vmatprep.subr.bf16.mxu0 0
        %2444 = vmatpush1.bf16.msra.mxu0 0
        %2445 = vmatprep.subr.bf16.mxu0 0
        %2446 = vmatpush1.bf16.msra.mxu0 0
        %2447 = vmatprep.mubr.bf16.mxu0 0
        %2448 = vmatmul.mubr.bf16.gmra.mrb[0].mxu0 %v2101
        %v2449 = vpop.f32.mrb[0].mxu0
        %v2450 = vadd.f32 0.0, %v2449
        %v2451 = vpop.f32.mrb[0].mxu0
        %v2452 = vpop.f32.mrb[0].mxu0
        %v2453 = vpop.f32.mrb[0].mxu0
        %2454 = vdwg.mxu0
        %v2459 = vunpack.c.l.b16 %v575
        %v2460 = vunpack.c.l.b16 %v576
        %v2461 = vunpack.c.l.b16 %v577
        %v2462 = vunpack.c.l.b16 %v578
        %v2463 = vpack.c.b16 %v2460, %v2459
        %v2464 = vpack.c.b16 %v2462, %v2461
        %2467 = vmatprep.subr.bf16.mxu0 0
        %2468 = vmatpush1.bf16.msra.mxu0 %v2463
        %2469 = vmatprep.subr.bf16.mxu0 0
        %2470 = vmatpush1.bf16.msra.mxu0 %v2464
        %2471 = vmatprep.subr.bf16.mxu0 0
        %2472 = vmatpush1.bf16.msra.mxu0 0
        %2473 = vmatprep.subr.bf16.mxu0 0
        %2474 = vmatpush1.bf16.msra.mxu0 0
        %2475 = vmatprep.subr.bf16.mxu0 0
        %2476 = vmatpush1.bf16.msra.mxu0 0
        %2477 = vmatprep.subr.bf16.mxu0 0
        %2478 = vmatpush1.bf16.msra.mxu0 0
        %2479 = vmatprep.subr.bf16.mxu0 0
        %2480 = vmatpush1.bf16.msra.mxu0 0
        %2481 = vmatprep.subr.bf16.mxu0 0
        %2482 = vmatpush1.bf16.msra.mxu0 0
        %2483 = vmatprep.subr.bf16.mxu0 0
        %2484 = vmatpush1.bf16.msra.mxu0 0
        %2485 = vmatprep.subr.bf16.mxu0 0
        %2486 = vmatpush1.bf16.msra.mxu0 0
        %2487 = vmatprep.subr.bf16.mxu0 0
        %2488 = vmatpush1.bf16.msra.mxu0 0
        %2489 = vmatprep.subr.bf16.mxu0 0
        %2490 = vmatpush1.bf16.msra.mxu0 0
        %2491 = vmatprep.subr.bf16.mxu0 0
        %2492 = vmatpush1.bf16.msra.mxu0 0
        %2493 = vmatprep.subr.bf16.mxu0 0
        %2494 = vmatpush1.bf16.msra.mxu0 0
        %2495 = vmatprep.subr.bf16.mxu0 0
        %2496 = vmatpush1.bf16.msra.mxu0 0
        %2497 = vmatprep.subr.bf16.mxu0 0
        %2498 = vmatpush1.bf16.msra.mxu0 0
        %2499 = vmatprep.mubr.bf16.mxu0 0
        %2500 = vmatmul.mubr.bf16.gmra.mrb[0].mxu0 %v2101
        %v2501 = vpop.f32.mrb[0].mxu0
        %v2502 = vadd.f32 0.0, %v2501
        %v2503 = vpop.f32.mrb[0].mxu0
        %v2504 = vpop.f32.mrb[0].mxu0
        %v2505 = vpop.f32.mrb[0].mxu0
        %2506 = vdwg.mxu0
        %v2507 = vld [vmem:[%s450] sm:$0xff]
        %v2508 = vpack.c.bf16 %v1926, %v1926
        %v2509 = vpack.c.bf16 %v1978, %v1978
        %v2510 = vpack.c.bf16 %v2030, %v2030
        %v2511 = vpack.c.bf16 %v2082, %v2082
        %v2512 = vpack.c.bf16 %v2138, %v2138
        %v2513 = vpack.c.bf16 %v2190, %v2190
        %v2514 = vpack.c.bf16 %v2242, %v2242
        %v2515 = vpack.c.bf16 %v2294, %v2294
        %v2517 = vsel %vm1225, %v2508, 0
        %v2520 = vsel %vm1225, %v2512, 0
        %2522 = vmatprep.subr.bf16.mxu0 0
        %2523 = vmatpush1.bf16.xpose.msra.mxu0 %v2520
        %2524 = vmatprep.subr.bf16.mxu0 0
        %2525 = vmatpush1.bf16.xpose.msra.mxu0 0
        %2526 = vmatprep.subr.bf16.mxu0 0
        %2527 = vmatpush1.bf16.xpose.msra.mxu0 0
        %2528 = vmatprep.subr.bf16.mxu0 0
        %2529 = vmatpush1.bf16.xpose.msra.mxu0 0
        %2530 = vmatprep.subr.bf16.mxu0 0
        %2531 = vmatpush1.bf16.xpose.msra.mxu0 0
        %2532 = vmatprep.subr.bf16.mxu0 0
        %2533 = vmatpush1.bf16.xpose.msra.mxu0 0
        %2534 = vmatprep.subr.bf16.mxu0 0
        %2535 = vmatpush1.bf16.xpose.msra.mxu0 0
        %2536 = vmatprep.subr.bf16.mxu0 0
        %2537 = vmatpush1.bf16.xpose.msra.mxu0 0
        %2538 = vmatprep.subr.bf16.mxu0 0
        %2539 = vmatpush1.bf16.xpose.msra.mxu0 0
        %2540 = vmatprep.subr.bf16.mxu0 0
        %2541 = vmatpush1.bf16.xpose.msra.mxu0 0
        %2542 = vmatprep.subr.bf16.mxu0 0
        %2543 = vmatpush1.bf16.xpose.msra.mxu0 0
        %2544 = vmatprep.subr.bf16.mxu0 0
        %2545 = vmatpush1.bf16.xpose.msra.mxu0 0
        %2546 = vmatprep.subr.bf16.mxu0 0
        %2547 = vmatpush1.bf16.xpose.msra.mxu0 0
        %2548 = vmatprep.subr.bf16.mxu0 0
        %2549 = vmatpush1.bf16.xpose.msra.mxu0 0
        %2550 = vmatprep.subr.bf16.mxu0 0
        %2551 = vmatpush1.bf16.xpose.msra.mxu0 0
        %2552 = vmatprep.subr.bf16.mxu0 0
        %2553 = vmatpush1.bf16.xpose.msra.mxu0 0
        %2554 = vmatprep.mubr.bf16.mxu0 0
        %2555 = vmatmul.mubr.bf16.gmra.mrb[0].mxu0 %v2517
        %v2556 = vpop.f32.mrb[0].mxu0
        %v2557 = vadd.f32 0.0, %v2556
        %v2558 = vpop.f32.mrb[0].mxu0
        %v2559 = vpop.f32.mrb[0].mxu0
        %v2560 = vpop.f32.mrb[0].mxu0
        %2561 = vdwg.mxu0
        %v2563 = vsel %vm1225, %v2509, 0
        %v2566 = vsel %vm1225, %v2513, 0
        %2568 = vmatprep.subr.bf16.mxu0 0
        %2569 = vmatpush1.bf16.xpose.msra.mxu0 %v2566
        %2570 = vmatprep.subr.bf16.mxu0 0
        %2571 = vmatpush1.bf16.xpose.msra.mxu0 0
        %2572 = vmatprep.subr.bf16.mxu0 0
        %2573 = vmatpush1.bf16.xpose.msra.mxu0 0
        %2574 = vmatprep.subr.bf16.mxu0 0
        %2575 = vmatpush1.bf16.xpose.msra.mxu0 0
        %2576 = vmatprep.subr.bf16.mxu0 0
        %2577 = vmatpush1.bf16.xpose.msra.mxu0 0
        %2578 = vmatprep.subr.bf16.mxu0 0
        %2579 = vmatpush1.bf16.xpose.msra.mxu0 0
        %2580 = vmatprep.subr.bf16.mxu0 0
        %2581 = vmatpush1.bf16.xpose.msra.mxu0 0
        %2582 = vmatprep.subr.bf16.mxu0 0
        %2583 = vmatpush1.bf16.xpose.msra.mxu0 0
        %2584 = vmatprep.subr.bf16.mxu0 0
        %2585 = vmatpush1.bf16.xpose.msra.mxu0 0
        %2586 = vmatprep.subr.bf16.mxu0 0
        %2587 = vmatpush1.bf16.xpose.msra.mxu0 0
        %2588 = vmatprep.subr.bf16.mxu0 0
        %2589 = vmatpush1.bf16.xpose.msra.mxu0 0
        %2590 = vmatprep.subr.bf16.mxu0 0
        %2591 = vmatpush1.bf16.xpose.msra.mxu0 0
        %2592 = vmatprep.subr.bf16.mxu0 0
        %2593 = vmatpush1.bf16.xpose.msra.mxu0 0
        %2594 = vmatprep.subr.bf16.mxu0 0
        %2595 = vmatpush1.bf16.xpose.msra.mxu0 0
        %2596 = vmatprep.subr.bf16.mxu0 0
        %2597 = vmatpush1.bf16.xpose.msra.mxu0 0
        %2598 = vmatprep.subr.bf16.mxu0 0
        %2599 = vmatpush1.bf16.xpose.msra.mxu0 0
        %2600 = vmatprep.mubr.bf16.mxu0 0
        %2601 = vmatmul.mubr.bf16.gmra.mrb[0].mxu0 %v2563
        %v2602 = vpop.f32.mrb[0].mxu0
        %v2603 = vadd.f32 0.0, %v2602
        %v2604 = vpop.f32.mrb[0].mxu0
        %v2605 = vpop.f32.mrb[0].mxu0
        %v2606 = vpop.f32.mrb[0].mxu0
        %2607 = vdwg.mxu0
        %v2609 = vsel %vm1225, %v2510, 0
        %v2612 = vsel %vm1225, %v2514, 0
        %2614 = vmatprep.subr.bf16.mxu0 0
        %2615 = vmatpush1.bf16.xpose.msra.mxu0 %v2612
        %2616 = vmatprep.subr.bf16.mxu0 0
        %2617 = vmatpush1.bf16.xpose.msra.mxu0 0
        %2618 = vmatprep.subr.bf16.mxu0 0
        %2619 = vmatpush1.bf16.xpose.msra.mxu0 0
        %2620 = vmatprep.subr.bf16.mxu0 0
        %2621 = vmatpush1.bf16.xpose.msra.mxu0 0
        %2622 = vmatprep.subr.bf16.mxu0 0
        %2623 = vmatpush1.bf16.xpose.msra.mxu0 0
        %2624 = vmatprep.subr.bf16.mxu0 0
        %2625 = vmatpush1.bf16.xpose.msra.mxu0 0
        %2626 = vmatprep.subr.bf16.mxu0 0
        %2627 = vmatpush1.bf16.xpose.msra.mxu0 0
        %2628 = vmatprep.subr.bf16.mxu0 0
        %2629 = vmatpush1.bf16.xpose.msra.mxu0 0
        %2630 = vmatprep.subr.bf16.mxu0 0
        %2631 = vmatpush1.bf16.xpose.msra.mxu0 0
        %2632 = vmatprep.subr.bf16.mxu0 0
        %2633 = vmatpush1.bf16.xpose.msra.mxu0 0
        %2634 = vmatprep.subr.bf16.mxu0 0
        %2635 = vmatpush1.bf16.xpose.msra.mxu0 0
        %2636 = vmatprep.subr.bf16.mxu0 0
        %2637 = vmatpush1.bf16.xpose.msra.mxu0 0
        %2638 = vmatprep.subr.bf16.mxu0 0
        %2639 = vmatpush1.bf16.xpose.msra.mxu0 0
        %2640 = vmatprep.subr.bf16.mxu0 0
        %2641 = vmatpush1.bf16.xpose.msra.mxu0 0
        %2642 = vmatprep.subr.bf16.mxu0 0
        %2643 = vmatpush1.bf16.xpose.msra.mxu0 0
        %2644 = vmatprep.subr.bf16.mxu0 0
        %2645 = vmatpush1.bf16.xpose.msra.mxu0 0
        %2646 = vmatprep.mubr.bf16.mxu0 0
        %2647 = vmatmul.mubr.bf16.gmra.mrb[0].mxu0 %v2609
        %v2648 = vpop.f32.mrb[0].mxu0
        %v2649 = vadd.f32 0.0, %v2648
        %v2650 = vpop.f32.mrb[0].mxu0
        %v2651 = vpop.f32.mrb[0].mxu0
        %v2652 = vpop.f32.mrb[0].mxu0
        %2653 = vdwg.mxu0
        %v2655 = vsel %vm1225, %v2511, 0
        %v2658 = vsel %vm1225, %v2515, 0
        %2660 = vmatprep.subr.bf16.mxu0 0
        %2661 = vmatpush1.bf16.xpose.msra.mxu0 %v2658
        %2662 = vmatprep.subr.bf16.mxu0 0
        %2663 = vmatpush1.bf16.xpose.msra.mxu0 0
        %2664 = vmatprep.subr.bf16.mxu0 0
        %2665 = vmatpush1.bf16.xpose.msra.mxu0 0
        %2666 = vmatprep.subr.bf16.mxu0 0
        %2667 = vmatpush1.bf16.xpose.msra.mxu0 0
        %2668 = vmatprep.subr.bf16.mxu0 0
        %2669 = vmatpush1.bf16.xpose.msra.mxu0 0
        %2670 = vmatprep.subr.bf16.mxu0 0
        %2671 = vmatpush1.bf16.xpose.msra.mxu0 0
        %2672 = vmatprep.subr.bf16.mxu0 0
        %2673 = vmatpush1.bf16.xpose.msra.mxu0 0
        %2674 = vmatprep.subr.bf16.mxu0 0
        %2675 = vmatpush1.bf16.xpose.msra.mxu0 0
        %2676 = vmatprep.subr.bf16.mxu0 0
        %2677 = vmatpush1.bf16.xpose.msra.mxu0 0
        %2678 = vmatprep.subr.bf16.mxu0 0
        %2679 = vmatpush1.bf16.xpose.msra.mxu0 0
        %2680 = vmatprep.subr.bf16.mxu0 0
        %2681 = vmatpush1.bf16.xpose.msra.mxu0 0
        %2682 = vmatprep.subr.bf16.mxu0 0
        %2683 = vmatpush1.bf16.xpose.msra.mxu0 0
        %2684 = vmatprep.subr.bf16.mxu0 0
        %2685 = vmatpush1.bf16.xpose.msra.mxu0 0
        %2686 = vmatprep.subr.bf16.mxu0 0
        %2687 = vmatpush1.bf16.xpose.msra.mxu0 0
        %2688 = vmatprep.subr.bf16.mxu0 0
        %2689 = vmatpush1.bf16.xpose.msra.mxu0 0
        %2690 = vmatprep.subr.bf16.mxu0 0
        %2691 = vmatpush1.bf16.xpose.msra.mxu0 0
        %2692 = vmatprep.mubr.bf16.mxu0 0
        %2693 = vmatmul.mubr.bf16.gmra.mrb[0].mxu0 %v2655
        %v2694 = vpop.f32.mrb[0].mxu0
        %v2695 = vadd.f32 0.0, %v2694
        %v2696 = vpop.f32.mrb[0].mxu0
        %v2697 = vpop.f32.mrb[0].mxu0
        %v2698 = vpop.f32.mrb[0].mxu0
        %2699 = vdwg.mxu0
        %v2700 = vmul.f32 %v2557, 0.35355338
        %v2701 = vmul.f32 %v2603, 0.35355338
        %v2702 = vmul.f32 %v2649, 0.35355338
        %v2703 = vmul.f32 %v2695, 0.35355338
        %v2704 = vadd.f32 %v2700, %v2507
        %v2705 = vadd.f32 %v2701, %v2507
        %v2706 = vadd.f32 %v2702, %v2507
        %v2707 = vadd.f32 %v2703, %v2507
        %v2708 = vsel %vm1225, %v2704, -inf
        %2709 = vmax.xlane.f32.xlu0 %v2708
        %v2710 = vpop.xlane.xlu0 %2709
        %v2711 = vsel %vm1225, %v2705, -inf
        %2712 = vmax.xlane.f32.xlu0 %v2711
        %v2713 = vpop.xlane.xlu0 %2712
        %v2714 = vsel %vm1225, %v2706, -inf
        %2715 = vmax.xlane.f32.xlu0 %v2714
        %v2716 = vpop.xlane.xlu0 %2715
        %v2717 = vsel %vm1225, %v2707, -inf
        %2718 = vmax.xlane.f32.xlu0 %v2717
        %v2719 = vpop.xlane.xlu0 %2718
        %v2720 = vsub.f32 %v2704, %v2710
        %v2721 = vsub.f32 %v2705, %v2713
        %v2722 = vsub.f32 %v2706, %v2716
        %v2723 = vsub.f32 %v2707, %v2719
        %v2724 = vmul.f32 %v2720, 1.442695
        %v2725 = vpow.pop %v2724
        %v2726 = vmul.f32 %v2721, 1.442695
        %v2727 = vpow.pop %v2726
        %v2728 = vmul.f32 %v2722, 1.442695
        %v2729 = vpow.pop %v2728
        %v2730 = vmul.f32 %v2723, 1.442695
        %v2731 = vpow.pop %v2730
        %v2732 = vsel %vm1225, %v2725, 0.0
        %2733 = vadd.xlane.f32.xlu0 %v2732
        %v2734 = vpop.xlane.xlu0 %2733
        %v2735 = vsel %vm1225, %v2727, 0.0
        %2736 = vadd.xlane.f32.xlu0 %v2735
        %v2737 = vpop.xlane.xlu0 %2736
        %v2738 = vsel %vm1225, %v2729, 0.0
        %2739 = vadd.xlane.f32.xlu0 %v2738
        %v2740 = vpop.xlane.xlu0 %2739
        %v2741 = vsel %vm1225, %v2731, 0.0
        %2742 = vadd.xlane.f32.xlu0 %v2741
        %v2743 = vpop.xlane.xlu0 %2742
        %v2744 = vrcp.pop %v2734
        %v2745 = vrcp.pop %v2737
        %v2746 = vrcp.pop %v2740
        %v2747 = vrcp.pop %v2743
        %v2748 = vmul.f32 %v2725, %v2744
        %v2749 = vmul.f32 %v2727, %v2745
        %v2750 = vmul.f32 %v2729, %v2746
        %v2751 = vmul.f32 %v2731, %v2747
        %v2752 = vpack.c.bf16 %v2748, %v2748
        %v2753 = vpack.c.bf16 %v2749, %v2749
        %v2754 = vpack.c.bf16 %v2750, %v2750
        %v2755 = vpack.c.bf16 %v2751, %v2751
        %v2756 = vpack.c.bf16 %v2346, %v2346
        %v2757 = vpack.c.bf16 %v2398, %v2398
        %v2758 = vpack.c.bf16 %v2450, %v2450
        %v2759 = vpack.c.bf16 %v2502, %v2502
        %v2761 = vsel %vm1225, %v2752, 0
        %v2764 = vsel %vm1473, %v2756, 0
        %2766 = vmatprep.subr.bf16.mxu0 0
        %2767 = vmatpush1.bf16.msra.mxu0 %v2764
        %2768 = vmatprep.subr.bf16.mxu0 0
        %2769 = vmatpush1.bf16.msra.mxu0 0
        %2770 = vmatprep.subr.bf16.mxu0 0
        %2771 = vmatpush1.bf16.msra.mxu0 0
        %2772 = vmatprep.subr.bf16.mxu0 0
        %2773 = vmatpush1.bf16.msra.mxu0 0
        %2774 = vmatprep.subr.bf16.mxu0 0
        %2775 = vmatpush1.bf16.msra.mxu0 0
        %2776 = vmatprep.subr.bf16.mxu0 0
        %2777 = vmatpush1.bf16.msra.mxu0 0
        %2778 = vmatprep.subr.bf16.mxu0 0
        %2779 = vmatpush1.bf16.msra.mxu0 0
        %2780 = vmatprep.subr.bf16.mxu0 0
        %2781 = vmatpush1.bf16.msra.mxu0 0
        %2782 = vmatprep.subr.bf16.mxu0 0
        %2783 = vmatpush1.bf16.msra.mxu0 0
        %2784 = vmatprep.subr.bf16.mxu0 0
        %2785 = vmatpush1.bf16.msra.mxu0 0
        %2786 = vmatprep.subr.bf16.mxu0 0
        %2787 = vmatpush1.bf16.msra.mxu0 0
        %2788 = vmatprep.subr.bf16.mxu0 0
        %2789 = vmatpush1.bf16.msra.mxu0 0
        %2790 = vmatprep.subr.bf16.mxu0 0
        %2791 = vmatpush1.bf16.msra.mxu0 0
        %2792 = vmatprep.subr.bf16.mxu0 0
        %2793 = vmatpush1.bf16.msra.mxu0 0
        %2794 = vmatprep.subr.bf16.mxu0 0
        %2795 = vmatpush1.bf16.msra.mxu0 0
        %2796 = vmatprep.subr.bf16.mxu0 0
        %2797 = vmatpush1.bf16.msra.mxu0 0
        %2798 = vmatprep.mubr.bf16.mxu0 0
        %2799 = vmatmul.mubr.bf16.gmra.mrb[0].mxu0 %v2761
        %v2800 = vpop.f32.mrb[0].mxu0
        %v2801 = vadd.f32 0.0, %v2800
        %v2802 = vpop.f32.mrb[0].mxu0
        %v2803 = vpop.f32.mrb[0].mxu0
        %v2804 = vpop.f32.mrb[0].mxu0
        %2805 = vdwg.mxu0
        %v2807 = vsel %vm1225, %v2753, 0
        %v2810 = vsel %vm1473, %v2757, 0
        %2812 = vmatprep.subr.bf16.mxu0 0
        %2813 = vmatpush1.bf16.msra.mxu0 %v2810
        %2814 = vmatprep.subr.bf16.mxu0 0
        %2815 = vmatpush1.bf16.msra.mxu0 0
        %2816 = vmatprep.subr.bf16.mxu0 0
        %2817 = vmatpush1.bf16.msra.mxu0 0
        %2818 = vmatprep.subr.bf16.mxu0 0
        %2819 = vmatpush1.bf16.msra.mxu0 0
        %2820 = vmatprep.subr.bf16.mxu0 0
        %2821 = vmatpush1.bf16.msra.mxu0 0
        %2822 = vmatprep.subr.bf16.mxu0 0
        %2823 = vmatpush1.bf16.msra.mxu0 0
        %2824 = vmatprep.subr.bf16.mxu0 0
        %2825 = vmatpush1.bf16.msra.mxu0 0
        %2826 = vmatprep.subr.bf16.mxu0 0
        %2827 = vmatpush1.bf16.msra.mxu0 0
        %2828 = vmatprep.subr.bf16.mxu0 0
        %2829 = vmatpush1.bf16.msra.mxu0 0
        %2830 = vmatprep.subr.bf16.mxu0 0
        %2831 = vmatpush1.bf16.msra.mxu0 0
        %2832 = vmatprep.subr.bf16.mxu0 0
        %2833 = vmatpush1.bf16.msra.mxu0 0
        %2834 = vmatprep.subr.bf16.mxu0 0
        %2835 = vmatpush1.bf16.msra.mxu0 0
        %2836 = vmatprep.subr.bf16.mxu0 0
        %2837 = vmatpush1.bf16.msra.mxu0 0
        %2838 = vmatprep.subr.bf16.mxu0 0
        %2839 = vmatpush1.bf16.msra.mxu0 0
        %2840 = vmatprep.subr.bf16.mxu0 0
        %2841 = vmatpush1.bf16.msra.mxu0 0
        %2842 = vmatprep.subr.bf16.mxu0 0
        %2843 = vmatpush1.bf16.msra.mxu0 0
        %2844 = vmatprep.mubr.bf16.mxu0 0
        %2845 = vmatmul.mubr.bf16.gmra.mrb[0].mxu0 %v2807
        %v2846 = vpop.f32.mrb[0].mxu0
        %v2847 = vadd.f32 0.0, %v2846
        %v2848 = vpop.f32.mrb[0].mxu0
        %v2849 = vpop.f32.mrb[0].mxu0
        %v2850 = vpop.f32.mrb[0].mxu0
        %2851 = vdwg.mxu0
        %v2853 = vsel %vm1225, %v2754, 0
        %v2856 = vsel %vm1473, %v2758, 0
        %2858 = vmatprep.subr.bf16.mxu0 0
        %2859 = vmatpush1.bf16.msra.mxu0 %v2856
        %2860 = vmatprep.subr.bf16.mxu0 0
        %2861 = vmatpush1.bf16.msra.mxu0 0
        %2862 = vmatprep.subr.bf16.mxu0 0
        %2863 = vmatpush1.bf16.msra.mxu0 0
        %2864 = vmatprep.subr.bf16.mxu0 0
        %2865 = vmatpush1.bf16.msra.mxu0 0
        %2866 = vmatprep.subr.bf16.mxu0 0
        %2867 = vmatpush1.bf16.msra.mxu0 0
        %2868 = vmatprep.subr.bf16.mxu0 0
        %2869 = vmatpush1.bf16.msra.mxu0 0
        %2870 = vmatprep.subr.bf16.mxu0 0
        %2871 = vmatpush1.bf16.msra.mxu0 0
        %2872 = vmatprep.subr.bf16.mxu0 0
        %2873 = vmatpush1.bf16.msra.mxu0 0
        %2874 = vmatprep.subr.bf16.mxu0 0
        %2875 = vmatpush1.bf16.msra.mxu0 0
        %2876 = vmatprep.subr.bf16.mxu0 0
        %2877 = vmatpush1.bf16.msra.mxu0 0
        %2878 = vmatprep.subr.bf16.mxu0 0
        %2879 = vmatpush1.bf16.msra.mxu0 0
        %2880 = vmatprep.subr.bf16.mxu0 0
        %2881 = vmatpush1.bf16.msra.mxu0 0
        %2882 = vmatprep.subr.bf16.mxu0 0
        %2883 = vmatpush1.bf16.msra.mxu0 0
        %2884 = vmatprep.subr.bf16.mxu0 0
        %2885 = vmatpush1.bf16.msra.mxu0 0
        %2886 = vmatprep.subr.bf16.mxu0 0
        %2887 = vmatpush1.bf16.msra.mxu0 0
        %2888 = vmatprep.subr.bf16.mxu0 0
        %2889 = vmatpush1.bf16.msra.mxu0 0
        %2890 = vmatprep.mubr.bf16.mxu0 0
        %2891 = vmatmul.mubr.bf16.gmra.mrb[0].mxu0 %v2853
        %v2892 = vpop.f32.mrb[0].mxu0
        %v2893 = vadd.f32 0.0, %v2892
        %v2894 = vpop.f32.mrb[0].mxu0
        %v2895 = vpop.f32.mrb[0].mxu0
        %v2896 = vpop.f32.mrb[0].mxu0
        %2897 = vdwg.mxu0
        %v2899 = vsel %vm1225, %v2755, 0
        %v2902 = vsel %vm1473, %v2759, 0
        %2904 = vmatprep.subr.bf16.mxu0 0
        %2905 = vmatpush1.bf16.msra.mxu0 %v2902
        %2906 = vmatprep.subr.bf16.mxu0 0
        %2907 = vmatpush1.bf16.msra.mxu0 0
        %2908 = vmatprep.subr.bf16.mxu0 0
        %2909 = vmatpush1.bf16.msra.mxu0 0
        %2910 = vmatprep.subr.bf16.mxu0 0
        %2911 = vmatpush1.bf16.msra.mxu0 0
        %2912 = vmatprep.subr.bf16.mxu0 0
        %2913 = vmatpush1.bf16.msra.mxu0 0
        %2914 = vmatprep.subr.bf16.mxu0 0
        %2915 = vmatpush1.bf16.msra.mxu0 0
        %2916 = vmatprep.subr.bf16.mxu0 0
        %2917 = vmatpush1.bf16.msra.mxu0 0
        %2918 = vmatprep.subr.bf16.mxu0 0
        %2919 = vmatpush1.bf16.msra.mxu0 0
        %2920 = vmatprep.subr.bf16.mxu0 0
        %2921 = vmatpush1.bf16.msra.mxu0 0
        %2922 = vmatprep.subr.bf16.mxu0 0
        %2923 = vmatpush1.bf16.msra.mxu0 0
        %2924 = vmatprep.subr.bf16.mxu0 0
        %2925 = vmatpush1.bf16.msra.mxu0 0
        %2926 = vmatprep.subr.bf16.mxu0 0
        %2927 = vmatpush1.bf16.msra.mxu0 0
        %2928 = vmatprep.subr.bf16.mxu0 0
        %2929 = vmatpush1.bf16.msra.mxu0 0
        %2930 = vmatprep.subr.bf16.mxu0 0
        %2931 = vmatpush1.bf16.msra.mxu0 0
        %2932 = vmatprep.subr.bf16.mxu0 0
        %2933 = vmatpush1.bf16.msra.mxu0 0
        %2934 = vmatprep.subr.bf16.mxu0 0
        %2935 = vmatpush1.bf16.msra.mxu0 0
        %2936 = vmatprep.mubr.bf16.mxu0 0
        %2937 = vmatmul.mubr.bf16.gmra.mrb[0].mxu0 %v2899
        %v2938 = vpop.f32.mrb[0].mxu0
        %v2939 = vadd.f32 0.0, %v2938
        %v2940 = vpop.f32.mrb[0].mxu0
        %v2941 = vpop.f32.mrb[0].mxu0
        %v2942 = vpop.f32.mrb[0].mxu0
        %2943 = vdwg.mxu0
        %v2944 = vpack.c.bf16 %v2801, %v2801
        %v2945 = vpack.c.bf16 %v2847, %v2847
        %v2946 = vpack.c.bf16 %v2893, %v2893
        %v2947 = vpack.c.bf16 %v2939, %v2939
        %v2949 = vsel %vm1225, %v2944, 0
        %v2952 = vsel %vm1473, %v583, 0
        %2954 = vmatprep.subr.bf16.mxu0 0
        %2955 = vmatpush1.bf16.msra.mxu0 %v2952
        %2956 = vmatprep.subr.bf16.mxu0 0
        %2957 = vmatpush1.bf16.msra.mxu0 0
        %2958 = vmatprep.subr.bf16.mxu0 0
        %2959 = vmatpush1.bf16.msra.mxu0 0
        %2960 = vmatprep.subr.bf16.mxu0 0
        %2961 = vmatpush1.bf16.msra.mxu0 0
        %2962 = vmatprep.subr.bf16.mxu0 0
        %2963 = vmatpush1.bf16.msra.mxu0 0
        %2964 = vmatprep.subr.bf16.mxu0 0
        %2965 = vmatpush1.bf16.msra.mxu0 0
        %2966 = vmatprep.subr.bf16.mxu0 0
        %2967 = vmatpush1.bf16.msra.mxu0 0
        %2968 = vmatprep.subr.bf16.mxu0 0
        %2969 = vmatpush1.bf16.msra.mxu0 0
        %2970 = vmatprep.subr.bf16.mxu0 0
        %2971 = vmatpush1.bf16.msra.mxu0 0
        %2972 = vmatprep.subr.bf16.mxu0 0
        %2973 = vmatpush1.bf16.msra.mxu0 0
        %2974 = vmatprep.subr.bf16.mxu0 0
        %2975 = vmatpush1.bf16.msra.mxu0 0
        %2976 = vmatprep.subr.bf16.mxu0 0
        %2977 = vmatpush1.bf16.msra.mxu0 0
        %2978 = vmatprep.subr.bf16.mxu0 0
        %2979 = vmatpush1.bf16.msra.mxu0 0
        %2980 = vmatprep.subr.bf16.mxu0 0
        %2981 = vmatpush1.bf16.msra.mxu0 0
        %2982 = vmatprep.subr.bf16.mxu0 0
        %2983 = vmatpush1.bf16.msra.mxu0 0
        %2984 = vmatprep.subr.bf16.mxu0 0
        %2985 = vmatpush1.bf16.msra.mxu0 0
        %2986 = vmatprep.mubr.bf16.mxu0 0
        %2987 = vmatmul.mubr.bf16.gmra.mrb[0].mxu0 %v2949
        %v2988 = vpop.f32.mrb[0].mxu0
        %v2989 = vadd.f32 0.0, %v2988
        %v2990 = vpop.f32.mrb[0].mxu0
        %v2991 = vpop.f32.mrb[0].mxu0
        %v2992 = vpop.f32.mrb[0].mxu0
        %2993 = vdwg.mxu0
        %v2995 = vsel %vm1225, %v2945, 0
        %v2998 = vsel %vm1473, %v584, 0
        %3000 = vmatprep.subr.bf16.mxu0 0
        %3001 = vmatpush1.bf16.msra.mxu0 %v2998
        %3002 = vmatprep.subr.bf16.mxu0 0
        %3003 = vmatpush1.bf16.msra.mxu0 0
        %3004 = vmatprep.subr.bf16.mxu0 0
        %3005 = vmatpush1.bf16.msra.mxu0 0
        %3006 = vmatprep.subr.bf16.mxu0 0
        %3007 = vmatpush1.bf16.msra.mxu0 0
        %3008 = vmatprep.subr.bf16.mxu0 0
        %3009 = vmatpush1.bf16.msra.mxu0 0
        %3010 = vmatprep.subr.bf16.mxu0 0
        %3011 = vmatpush1.bf16.msra.mxu0 0
        %3012 = vmatprep.subr.bf16.mxu0 0
        %3013 = vmatpush1.bf16.msra.mxu0 0
        %3014 = vmatprep.subr.bf16.mxu0 0
        %3015 = vmatpush1.bf16.msra.mxu0 0
        %3016 = vmatprep.subr.bf16.mxu0 0
        %3017 = vmatpush1.bf16.msra.mxu0 0
        %3018 = vmatprep.subr.bf16.mxu0 0
        %3019 = vmatpush1.bf16.msra.mxu0 0
        %3020 = vmatprep.subr.bf16.mxu0 0
        %3021 = vmatpush1.bf16.msra.mxu0 0
        %3022 = vmatprep.subr.bf16.mxu0 0
        %3023 = vmatpush1.bf16.msra.mxu0 0
        %3024 = vmatprep.subr.bf16.mxu0 0
        %3025 = vmatpush1.bf16.msra.mxu0 0
        %3026 = vmatprep.subr.bf16.mxu0 0
        %3027 = vmatpush1.bf16.msra.mxu0 0
        %3028 = vmatprep.subr.bf16.mxu0 0
        %3029 = vmatpush1.bf16.msra.mxu0 0
        %3030 = vmatprep.subr.bf16.mxu0 0
        %3031 = vmatpush1.bf16.msra.mxu0 0
        %3032 = vmatprep.mubr.bf16.mxu0 0
        %3033 = vmatmul.mubr.bf16.gmra.mrb[0].mxu0 %v2995
        %v3034 = vpop.f32.mrb[0].mxu0
        %v3035 = vadd.f32 0.0, %v3034
        %v3036 = vpop.f32.mrb[0].mxu0
        %v3037 = vpop.f32.mrb[0].mxu0
        %v3038 = vpop.f32.mrb[0].mxu0
        %3039 = vdwg.mxu0
        %v3041 = vsel %vm1225, %v2946, 0
        %v3044 = vsel %vm1473, %v585, 0
        %3046 = vmatprep.subr.bf16.mxu0 0
        %3047 = vmatpush1.bf16.msra.mxu0 %v3044
        %3048 = vmatprep.subr.bf16.mxu0 0
        %3049 = vmatpush1.bf16.msra.mxu0 0
        %3050 = vmatprep.subr.bf16.mxu0 0
        %3051 = vmatpush1.bf16.msra.mxu0 0
        %3052 = vmatprep.subr.bf16.mxu0 0
        %3053 = vmatpush1.bf16.msra.mxu0 0
        %3054 = vmatprep.subr.bf16.mxu0 0
        %3055 = vmatpush1.bf16.msra.mxu0 0
        %3056 = vmatprep.subr.bf16.mxu0 0
        %3057 = vmatpush1.bf16.msra.mxu0 0
        %3058 = vmatprep.subr.bf16.mxu0 0
        %3059 = vmatpush1.bf16.msra.mxu0 0
        %3060 = vmatprep.subr.bf16.mxu0 0
        %3061 = vmatpush1.bf16.msra.mxu0 0
        %3062 = vmatprep.subr.bf16.mxu0 0
        %3063 = vmatpush1.bf16.msra.mxu0 0
        %3064 = vmatprep.subr.bf16.mxu0 0
        %3065 = vmatpush1.bf16.msra.mxu0 0
        %3066 = vmatprep.subr.bf16.mxu0 0
        %3067 = vmatpush1.bf16.msra.mxu0 0
        %3068 = vmatprep.subr.bf16.mxu0 0
        %3069 = vmatpush1.bf16.msra.mxu0 0
        %3070 = vmatprep.subr.bf16.mxu0 0
        %3071 = vmatpush1.bf16.msra.mxu0 0
        %3072 = vmatprep.subr.bf16.mxu0 0
        %3073 = vmatpush1.bf16.msra.mxu0 0
        %3074 = vmatprep.subr.bf16.mxu0 0
        %3075 = vmatpush1.bf16.msra.mxu0 0
        %3076 = vmatprep.subr.bf16.mxu0 0
        %3077 = vmatpush1.bf16.msra.mxu0 0
        %3078 = vmatprep.mubr.bf16.mxu0 0
        %3079 = vmatmul.mubr.bf16.gmra.mrb[0].mxu0 %v3041
        %v3080 = vpop.f32.mrb[0].mxu0
        %v3081 = vadd.f32 0.0, %v3080
        %v3082 = vpop.f32.mrb[0].mxu0
        %v3083 = vpop.f32.mrb[0].mxu0
        %v3084 = vpop.f32.mrb[0].mxu0
        %3085 = vdwg.mxu0
        %v3087 = vsel %vm1225, %v2947, 0
        %v3090 = vsel %vm1473, %v586, 0
        %3092 = vmatprep.subr.bf16.mxu0 0
        %3093 = vmatpush1.bf16.msra.mxu0 %v3090
        %3094 = vmatprep.subr.bf16.mxu0 0
        %3095 = vmatpush1.bf16.msra.mxu0 0
        %3096 = vmatprep.subr.bf16.mxu0 0
        %3097 = vmatpush1.bf16.msra.mxu0 0
        %3098 = vmatprep.subr.bf16.mxu0 0
        %3099 = vmatpush1.bf16.msra.mxu0 0
        %3100 = vmatprep.subr.bf16.mxu0 0
        %3101 = vmatpush1.bf16.msra.mxu0 0
        %3102 = vmatprep.subr.bf16.mxu0 0
        %3103 = vmatpush1.bf16.msra.mxu0 0
        %3104 = vmatprep.subr.bf16.mxu0 0
        %3105 = vmatpush1.bf16.msra.mxu0 0
        %3106 = vmatprep.subr.bf16.mxu0 0
        %3107 = vmatpush1.bf16.msra.mxu0 0
        %3108 = vmatprep.subr.bf16.mxu0 0
        %3109 = vmatpush1.bf16.msra.mxu0 0
        %3110 = vmatprep.subr.bf16.mxu0 0
        %3111 = vmatpush1.bf16.msra.mxu0 0
        %3112 = vmatprep.subr.bf16.mxu0 0
        %3113 = vmatpush1.bf16.msra.mxu0 0
        %3114 = vmatprep.subr.bf16.mxu0 0
        %3115 = vmatpush1.bf16.msra.mxu0 0
        %3116 = vmatprep.subr.bf16.mxu0 0
        %3117 = vmatpush1.bf16.msra.mxu0 0
        %3118 = vmatprep.subr.bf16.mxu0 0
        %3119 = vmatpush1.bf16.msra.mxu0 0
        %3120 = vmatprep.subr.bf16.mxu0 0
        %3121 = vmatpush1.bf16.msra.mxu0 0
        %3122 = vmatprep.subr.bf16.mxu0 0
        %3123 = vmatpush1.bf16.msra.mxu0 0
        %3124 = vmatprep.mubr.bf16.mxu0 0
        %3125 = vmatmul.mubr.bf16.gmra.mrb[0].mxu0 %v3087
        %v3126 = vpop.f32.mrb[0].mxu0
        %v3127 = vadd.f32 0.0, %v3126
        %v3128 = vpop.f32.mrb[0].mxu0
        %v3129 = vpop.f32.mrb[0].mxu0
        %v3130 = vpop.f32.mrb[0].mxu0
        %3131 = vdwg.mxu0
        %v3132 = vsel %vm600, %v2989, 0.0
        %v3133 = vsel %vm600, %v3035, 0.0
        %v3134 = vadd.f32 %v3132, %v3133
        %v3135 = vsel %vm600, %v3081, 0.0
        %v3136 = vadd.f32 %v3134, %v3135
        %v3137 = vsel %vm600, %v3127, 0.0
        %v3138 = vadd.f32 %v3136, %v3137
        %v3139 = vadd.f32 %v1874, %v3138
        %v3140 = vsel %vm600, %v3139, 0.0
        %3141 = vadd.xlane.f32.xlu0 %v3140
        %v3142 = vpop.xlane.xlu0 %3141
        %v3143 = vmul.f32 %v3142, %v1854
        %v3144 = vsub.f32 %v3139, %v3143
        %v3145 = vmul.f32 %v3144, %v3144
        %v3146 = vsel %vm600, %v3145, 0.0
        %3147 = vadd.xlane.f32.xlu0 %v3146
        %v3148 = vpop.xlane.xlu0 %3147
        %v3149 = vmul.f32 %v3148, %v1854
        %v3150 = vadd.f32 %v3149, 1e-05
        %v3151 = vrsqrt.pop %v3150
        %v3152 = vmul.f32 %v3144, %v3151
        %v3153 = vlaneseq
        %v3154 = vshrl.u32 %v3153, 7
        %v3155 = vsub.s32 2, %v3154
        %v3156 = vrot.slane %v481, %v3155
        %v3157 = vmul.f32 %v3152, %v3156
        %v3158 = vlaneseq
        %v3159 = vshrl.u32 %v3158, 7
        %v3160 = vsub.s32 3, %v3159
        %v3161 = vrot.slane %v481, %v3160
        %v3162 = vadd.f32 %v3157, %v3161
        %v3163 = vld [vmem:[%s465] sm:$0xf]
        %v3164 = vld [vmem:[%s465 + $0x4] sm:$0xf]
        %v3165 = vld [vmem:[%s465 + $0x8] sm:$0xf]
        %v3166 = vld [vmem:[%s465 + $0xc] sm:$0xf]
        %v3167 = vld [vmem:[%s465 + $0x10] sm:$0xf]
        %v3168 = vld [vmem:[%s465 + $0x14] sm:$0xf]
        %v3169 = vld [vmem:[%s465 + $0x18] sm:$0xf]
        %v3170 = vld [vmem:[%s465 + $0x1c] sm:$0xf]
        %v3171 = vpack.c.bf16 %v3162, %v3162
        %v3172 = vlaneseq
        %v3173 = vshrl.u32 %v3172, 7
        %v3174 = vsub.s32 6, %v3173
        %v3175 = vrot.slane %v481, %v3174
        %v3180 = vunpack.c.l.b16 %v3163
        %v3181 = vunpack.c.l.b16 %v3164
        %v3182 = vunpack.c.l.b16 %v3165
        %v3183 = vunpack.c.l.b16 %v3166
        %v3184 = vpack.c.b16 %v3181, %v3180
        %v3185 = vpack.c.b16 %v3183, %v3182
        %v3189 = vsel %vm600, %v3171, 0
        %3191 = vmatprep.subr.bf16.mxu0 0
        %3192 = vmatpush1.bf16.msra.mxu0 %v3184
        %3193 = vmatprep.subr.bf16.mxu0 0
        %3194 = vmatpush1.bf16.msra.mxu0 %v3185
        %3195 = vmatprep.subr.bf16.mxu0 0
        %3196 = vmatpush1.bf16.msra.mxu0 0
        %3197 = vmatprep.subr.bf16.mxu0 0
        %3198 = vmatpush1.bf16.msra.mxu0 0
        %3199 = vmatprep.subr.bf16.mxu0 0
        %3200 = vmatpush1.bf16.msra.mxu0 0
        %3201 = vmatprep.subr.bf16.mxu0 0
        %3202 = vmatpush1.bf16.msra.mxu0 0
        %3203 = vmatprep.subr.bf16.mxu0 0
        %3204 = vmatpush1.bf16.msra.mxu0 0
        %3205 = vmatprep.subr.bf16.mxu0 0
        %3206 = vmatpush1.bf16.msra.mxu0 0
        %3207 = vmatprep.subr.bf16.mxu0 0
        %3208 = vmatpush1.bf16.msra.mxu0 0
        %3209 = vmatprep.subr.bf16.mxu0 0
        %3210 = vmatpush1.bf16.msra.mxu0 0
        %3211 = vmatprep.subr.bf16.mxu0 0
        %3212 = vmatpush1.bf16.msra.mxu0 0
        %3213 = vmatprep.subr.bf16.mxu0 0
        %3214 = vmatpush1.bf16.msra.mxu0 0
        %3215 = vmatprep.subr.bf16.mxu0 0
        %3216 = vmatpush1.bf16.msra.mxu0 0
        %3217 = vmatprep.subr.bf16.mxu0 0
        %3218 = vmatpush1.bf16.msra.mxu0 0
        %3219 = vmatprep.subr.bf16.mxu0 0
        %3220 = vmatpush1.bf16.msra.mxu0 0
        %3221 = vmatprep.subr.bf16.mxu0 0
        %3222 = vmatpush1.bf16.msra.mxu0 0
        %3223 = vmatprep.mubr.bf16.mxu0 0
        %3224 = vmatmul.mubr.bf16.gmra.mrb[0].mxu0 %v3189
        %v3225 = vpop.f32.mrb[0].mxu0
        %v3226 = vadd.f32 %v3175, %v3225
        %v3227 = vpop.f32.mrb[0].mxu0
        %v3228 = vpop.f32.mrb[0].mxu0
        %v3229 = vpop.f32.mrb[0].mxu0
        %3230 = vdwg.mxu0
        %v3231 = vmax.f32 %v3226, 0.0
        %v3232 = vpack.c.bf16 %v3231, %v3231
        %v3233 = vlaneseq
        %v3234 = vshrl.u32 %v3233, 7
        %v3235 = vsub.s32 7, %v3234
        %v3236 = vrot.slane %v481, %v3235
        %v3241 = vunpack.c.l.b16 %v3167
        %v3242 = vunpack.c.l.b16 %v3168
        %v3243 = vunpack.c.l.b16 %v3169
        %v3244 = vunpack.c.l.b16 %v3170
        %v3245 = vpack.c.b16 %v3242, %v3241
        %v3246 = vpack.c.b16 %v3244, %v3243
        %vm3247 = vcmask 523264
        %v3249 = vsel %vm3247, %v3232, 0
        %v3252 = vsel %vm3247, %v3245, 0
        %v3255 = vsel %vm3247, %v3246, 0
        %3257 = vmatprep.subr.bf16.mxu0 0
        %3258 = vmatpush1.bf16.xpose.msra.mxu0 %v3252
        %3259 = vmatprep.subr.bf16.mxu0 0
        %3260 = vmatpush1.bf16.xpose.msra.mxu0 %v3255
        %3261 = vmatprep.subr.bf16.mxu0 0
        %3262 = vmatpush1.bf16.xpose.msra.mxu0 0
        %3263 = vmatprep.subr.bf16.mxu0 0
        %3264 = vmatpush1.bf16.xpose.msra.mxu0 0
        %3265 = vmatprep.subr.bf16.mxu0 0
        %3266 = vmatpush1.bf16.xpose.msra.mxu0 0
        %3267 = vmatprep.subr.bf16.mxu0 0
        %3268 = vmatpush1.bf16.xpose.msra.mxu0 0
        %3269 = vmatprep.subr.bf16.mxu0 0
        %3270 = vmatpush1.bf16.xpose.msra.mxu0 0
        %3271 = vmatprep.subr.bf16.mxu0 0
        %3272 = vmatpush1.bf16.xpose.msra.mxu0 0
        %3273 = vmatprep.subr.bf16.mxu0 0
        %3274 = vmatpush1.bf16.xpose.msra.mxu0 0
        %3275 = vmatprep.subr.bf16.mxu0 0
        %3276 = vmatpush1.bf16.xpose.msra.mxu0 0
        %3277 = vmatprep.subr.bf16.mxu0 0
        %3278 = vmatpush1.bf16.xpose.msra.mxu0 0
        %3279 = vmatprep.subr.bf16.mxu0 0
        %3280 = vmatpush1.bf16.xpose.msra.mxu0 0
        %3281 = vmatprep.subr.bf16.mxu0 0
        %3282 = vmatpush1.bf16.xpose.msra.mxu0 0
        %3283 = vmatprep.subr.bf16.mxu0 0
        %3284 = vmatpush1.bf16.xpose.msra.mxu0 0
        %3285 = vmatprep.subr.bf16.mxu0 0
        %3286 = vmatpush1.bf16.xpose.msra.mxu0 0
        %3287 = vmatprep.subr.bf16.mxu0 0
        %3288 = vmatpush1.bf16.xpose.msra.mxu0 0
        %3289 = vmatprep.mubr.bf16.mxu0 0
        %3290 = vmatmul.mubr.bf16.gmra.mrb[0].mxu0 %v3249
        %v3291 = vpop.f32.mrb[0].mxu0
        %v3292 = vadd.f32 %v3236, %v3291
        %v3293 = vpop.f32.mrb[0].mxu0
        %v3294 = vpop.f32.mrb[0].mxu0
        %v3295 = vpop.f32.mrb[0].mxu0
        %3296 = vdwg.mxu0
        %v3297 = vadd.f32 %v3162, %v3292
        %v3298 = vsel %vm600, %v3297, 0.0
        %3299 = vadd.xlane.f32.xlu0 %v3298
        %v3300 = vpop.xlane.xlu0 %3299
        %v3301 = vmul.f32 %v3300, %v1854
        %v3302 = vsub.f32 %v3297, %v3301
        %v3303 = vmul.f32 %v3302, %v3302
        %v3304 = vsel %vm600, %v3303, 0.0
        %3305 = vadd.xlane.f32.xlu0 %v3304
        %v3306 = vpop.xlane.xlu0 %3305
        %v3307 = vmul.f32 %v3306, %v1854
        %v3308 = vadd.f32 %v3307, 1e-05
        %v3309 = vrsqrt.pop %v3308
        %v3310 = vmul.f32 %v3302, %v3309
        %v3311 = vlaneseq
        %v3312 = vshrl.u32 %v3311, 7
        %v3313 = vsub.s32 4, %v3312
        %v3314 = vrot.slane %v481, %v3313
        %v3315 = vmul.f32 %v3310, %v3314
        %v3316 = vlaneseq
        %v3317 = vshrl.u32 %v3316, 7
        %v3318 = vsub.s32 5, %v3317
        %v3319 = vrot.slane %v481, %v3318
        %v3320 = vadd.f32 %v3315, %v3319
        %3321 = vst.msk [vmem:[#allocation2] sm:$0xff] %vm600, %v3320
        %p3322 = scmp.eq.s32.totalorder %s28, 1
        // Predicated region
        $region61: #{transformer_forward.3} parent=55 // pred_check
          %p3323 = pneg %p3322
        $region62: #{transformer_forward.3} parent=55 // pred_check_branch
          %3325 = sbr.rel (%p3323) target = $region64
        $region63: #{transformer_forward.3} parent=55 // pred_region
          %v3326 = vpack.c.bf16 %v3320, %v3320
          %v3327 = vld [vmem:[%s8] sm:$0xf]
          %v3328 = vld [vmem:[%s8 + $0x4] sm:$0xf]
          %v3329 = vld [vmem:[%s8 + $0x8] sm:$0xf]
          %v3330 = vld [vmem:[%s8 + $0xc] sm:$0xf]
          %v3331 = vlaneseq
          %v3332 = vshrl.u32 %v3331, 7
          %v3333 = vsub.s32 0, %v3332
          %v3334 = vrot.slane %v482, %v3333
          %v3339 = vunpack.c.l.b16 %v3327
          %v3340 = vunpack.c.l.b16 %v3328
          %v3341 = vunpack.c.l.b16 %v3329
          %v3342 = vunpack.c.l.b16 %v3330
          %v3343 = vpack.c.b16 %v3340, %v3339
          %v3344 = vpack.c.b16 %v3342, %v3341
          %v3348 = vsel %vm600, %v3326, 0
          %3350 = vmatprep.subr.bf16.mxu0 0
          %3351 = vmatpush1.bf16.msra.mxu0 %v3343
          %3352 = vmatprep.subr.bf16.mxu0 0
          %3353 = vmatpush1.bf16.msra.mxu0 %v3344
          %3354 = vmatprep.subr.bf16.mxu0 0
          %3355 = vmatpush1.bf16.msra.mxu0 0
          %3356 = vmatprep.subr.bf16.mxu0 0
          %3357 = vmatpush1.bf16.msra.mxu0 0
          %3358 = vmatprep.subr.bf16.mxu0 0
          %3359 = vmatpush1.bf16.msra.mxu0 0
          %3360 = vmatprep.subr.bf16.mxu0 0
          %3361 = vmatpush1.bf16.msra.mxu0 0
          %3362 = vmatprep.subr.bf16.mxu0 0
          %3363 = vmatpush1.bf16.msra.mxu0 0
          %3364 = vmatprep.subr.bf16.mxu0 0
          %3365 = vmatpush1.bf16.msra.mxu0 0
          %3366 = vmatprep.subr.bf16.mxu0 0
          %3367 = vmatpush1.bf16.msra.mxu0 0
          %3368 = vmatprep.subr.bf16.mxu0 0
          %3369 = vmatpush1.bf16.msra.mxu0 0
          %3370 = vmatprep.subr.bf16.mxu0 0
          %3371 = vmatpush1.bf16.msra.mxu0 0
          %3372 = vmatprep.subr.bf16.mxu0 0
          %3373 = vmatpush1.bf16.msra.mxu0 0
          %3374 = vmatprep.subr.bf16.mxu0 0
          %3375 = vmatpush1.bf16.msra.mxu0 0
          %3376 = vmatprep.subr.bf16.mxu0 0
          %3377 = vmatpush1.bf16.msra.mxu0 0
          %3378 = vmatprep.subr.bf16.mxu0 0
          %3379 = vmatpush1.bf16.msra.mxu0 0
          %3380 = vmatprep.subr.bf16.mxu0 0
          %3381 = vmatpush1.bf16.msra.mxu0 0
          %3382 = vmatprep.mubr.bf16.mxu0 0
          %3383 = vmatmul.mubr.bf16.gmra.mrb[0].mxu0 %v3348
          %v3384 = vpop.f32.mrb[0].mxu0
          %v3385 = vadd.f32 %v3334, %v3384
          %v3386 = vpop.f32.mrb[0].mxu0
          %v3387 = vpop.f32.mrb[0].mxu0
          %v3388 = vpop.f32.mrb[0].mxu0
          %3389 = vdwg.mxu0
          %3390 = vst [vmem:[%s434] sm:$0xff] %v3385
        $region64: #{transformer_forward.3} parent=55 // pred_fallthru
          _
        %s3391 = sand.u32 %s272, 1
        %s3392 = scalar_lea.sflag [#allocation4], %s3391
        %s3393 = sand.u32 %s272, 1
        %s3394 = smul.addr %s3393, 8
        %s3395 = scalar_lea.vmem [#allocation3], %s3394
        // Predicated region
        $region65: #{transformer_forward.3} parent=55 // pred_check
          %p3396 = pneg %p282
        $region66: #{transformer_forward.3} parent=55 // pred_check_branch
          %3398 = sbr.rel (%p3396) target = $region68
        $region67: #{transformer_forward.3} parent=55 // pred_region
          %s3400 = ssub.s32 128, 128
          %3401 = vsyncadd %s3392, %s3400
          %s3402 = smul.addr %s27, 128
          %s3403 = scalar_lea.hbm %s9, %s3402
          %s3405 = sshll.u32 %s3395, 4
          %s3406 = int_to_ptr.vmem [resolvable:$true] %s3405
          %3408 = dma.vmem_to_hbm [thread:$0]  %s3406, 128, %s3403, %s3392
        $region68: #{transformer_forward.3} parent=55 // pred_fallthru
          _
      $region56: #{transformer_forward.3} parent=5 // pred_fallthru
        _
      %p3409 = scmp.le.s32.totalorder 2, %s18
      // Predicated region
      $region69: #{transformer_forward.3} parent=5 // pred_check
        %p3410 = pneg %p3409
      $region70: #{transformer_forward.3} parent=5 // pred_check_branch
        %3412 = sbr.rel (%p3410) target = $region72
      $region71: #{transformer_forward.3} parent=5 // pred_region
        %s3413 = ssub.s32 %s18, 2
        // Predicated region
        $region73: #{transformer_forward.3} parent=71 // pred_check
          %p3414 = pneg %p288
        $region74: #{transformer_forward.3} parent=71 // pred_check_branch
          %3416 = sbr.rel (%p3414) target = $region76
        $region75: #{transformer_forward.3} parent=71 // pred_region
          %s3417 = sand.u32 %s273, 1
          %s3418 = scalar_lea.sflag [#allocation4], %s3417
          %s3419 = sand.u32 %s273, 1
          %s3420 = smul.addr %s3419, 8
          %s3421 = scalar_lea.vmem [#allocation3], %s3420
          %3422 = dma.done %s3418, 128
        $region76: #{transformer_forward.3} parent=71 // pred_fallthru
          _
      $region72: #{transformer_forward.3} parent=5 // pred_fallthru
        _
    $region6: #{transformer_forward.3} parent=1 // loop_footer
      %s22 = sadd.s32 1, %s18
    $region7: #{transformer_forward.3} parent=1 // loop_footer_branch
      %17 = sbr.rel target = $region3
    $region8: #{transformer_forward.3} parent=1 // loop_exit
      _
    %3423 = vsyncpa [#allocation4], 1
    %s3424 = scalar_lea.sflag [#allocation4], 1
    %3425 = vsyncpa %s3424, 1

</llo_original>
